<compile_context>
chip_gen: v5e
topology: v5e:2x2
jax: 0.10.0
libtpu: 0.0.40
codegen_flags: <defaults>
</compile_context>

<pallas_src>
import functools
import math

import jax
import jax.numpy as jnp
from jax.experimental import pallas as pl
from jax.experimental.pallas import tpu as pltpu


def _sigmoid(x):
    # tanh-based logistic: single EUP transcendental, no reciprocal on the
    # serial critical path.
    return 0.5 * (jnp.tanh(0.5 * x) + 1.0)


# ---------------------------------------------------------------------------
# Fused kernel: L-layer bidirectional GRU recurrence + 3-layer MLP head
# ---------------------------------------------------------------------------
def _make_fused_kernel(L, T, H):
    n_gru = L * 2 * 3  # per layer/direction: (W_ih_cat, W_hh_cat, b_stacked)

    def kernel(*refs):
        x_ref, h0_ref = refs[0], refs[1]
        gru_refs = refs[2:2 + n_gru]
        w1_ref, b1_ref, w2_ref, b2_ref, w3_ref, b3_ref = refs[2 + n_gru:2 + n_gru + 6]
        o_ref = refs[2 + n_gru + 6]
        actf_ref = refs[2 + n_gru + 7]   # (T, H) fwd activations of current layer
        actb_ref = refs[2 + n_gru + 8]   # (T, H) bwd activations (time-ordered)

        h_f = h_b = None
        for l in range(L):
            wih_f, whh_f, b_f = gru_refs[6 * l + 0], gru_refs[6 * l + 1], gru_refs[6 * l + 2]
            wih_b, whh_b, b_b = gru_refs[6 * l + 3], gru_refs[6 * l + 4], gru_refs[6 * l + 5]

            if l == 0:
                inp = x_ref[...]                                          # (T, D_in)
            else:
                inp = jnp.concatenate([actf_ref[...], actb_ref[...]], axis=-1)  # (T, 2H)

            # Hoisted input projection: one batched (T, D_in) @ (D_in, 3H)
            # matmul per direction, input biases folded in once.
            gi_f = jnp.dot(inp, wih_f[...], preferred_element_type=jnp.float32) + b_f[0:1, :]
            gi_b = jnp.dot(inp, wih_b[...], preferred_element_type=jnp.float32) + b_b[0:1, :]
            bhh_f = b_f[1:2, :]
            bhh_b = b_b[1:2, :]

            h_f = h0_ref[2 * l:2 * l + 1, :]                               # (1, H)
            h_b = h0_ref[2 * l + 1:2 * l + 2, :]                           # (1, H)
            is_last = (l == L - 1)

            # Fully unrolled recurrence; fwd and bwd interleaved each step.
            for t in range(T):
                s = T - 1 - t  # bwd direction consumes x in reverse order
                gh_f = jnp.dot(h_f, whh_f[...], preferred_element_type=jnp.float32) + bhh_f
                gh_b = jnp.dot(h_b, whh_b[...], preferred_element_type=jnp.float32) + bhh_b

                rz_f = _sigmoid(gi_f[t:t + 1, :2 * H] + gh_f[:, :2 * H])
                rz_b = _sigmoid(gi_b[s:s + 1, :2 * H] + gh_b[:, :2 * H])
                r_f, z_f = rz_f[:, :H], rz_f[:, H:]
                r_b, z_b = rz_b[:, :H], rz_b[:, H:]
                n_f = jnp.tanh(gi_f[t:t + 1, 2 * H:] + r_f * gh_f[:, 2 * H:])
                n_b = jnp.tanh(gi_b[s:s + 1, 2 * H:] + r_b * gh_b[:, 2 * H:])
                h_f = (1.0 - z_f) * n_f + z_f * h_f
                h_b = (1.0 - z_b) * n_b + z_b * h_b

                if not is_last:
                    # Layer output at time t is [h_fwd_t | h_bwd_t]; the bwd
                    # state produced at step t belongs to time index s.
                    actf_ref[t:t + 1, :] = h_f
                    actb_ref[s:s + 1, :] = h_b

        # MLP head epilogue on the last-layer final states (== torch's
        # hidden_states[-2:].view(1, 2H)); no HBM round-trip.
        fs = jnp.concatenate([h_f, h_b], axis=-1)                          # (1, 2H)
        h1 = jnp.dot(fs, w1_ref[...], preferred_element_type=jnp.float32) + b1_ref[...]
        h2 = jnp.dot(h1, w2_ref[...], preferred_element_type=jnp.float32) + b2_ref[...]
        o_ref[...] = jnp.dot(h2, w3_ref[...], preferred_element_type=jnp.float32) + b3_ref[...]

    return kernel


# ---------------------------------------------------------------------------
# Model wrapper
# ---------------------------------------------------------------------------
def three_sa_forward(params, inp, hidden=None):
    """inp: (1, T, input_dim) -- batch must be 1 (torch .view(1, 2H))."""
    B, T, _ = inp.shape
    assert B == 1, "ThreeSAModel.forward only supports batch=1 (view(1, 2H))"
    H = params["hidden_dim"]
    L = params["num_layers"]
    O = params["mlp"][4].shape[1]

    if hidden is None:
        h0 = jnp.zeros((2 * L, H), jnp.float32)
    else:
        h0 = jnp.asarray(hidden, jnp.float32).reshape(2 * L, H)

    flat_gru = []
    for l in range(L):
        for d in ("fwd", "bwd"):
            flat_gru += list(params["gru"][l][d])

    args = [inp[0], h0] + flat_gru + list(params["mlp"])
    kernel = _make_fused_kernel(L, T, H)
    vmem = functools.partial(pl.BlockSpec, memory_space=pltpu.MemorySpace.VMEM)

    return pl.pallas_call(
        kernel,
        out_shape=jax.ShapeDtypeStruct((1, O), jnp.float32),
        in_specs=[vmem() for _ in args],
        out_specs=vmem(),
        scratch_shapes=[pltpu.VMEM((T, H), jnp.float32),
                        pltpu.VMEM((T, H), jnp.float32)],
    )(*args)


# ---------------------------------------------------------------------------
# Deterministic parameter init (PyTorch-style U(-1/sqrt(fan), 1/sqrt(fan)))
# GRU weights stored pre-transposed and gate-concatenated: W_ih -> (D_in, 3H),
# W_hh -> (H, 3H) with gate order [r | z | n]; biases stacked as (2, 3H)
# rows [b_ih_cat ; b_hh_cat].
# ---------------------------------------------------------------------------
def init_params(key, input_dim, hidden_dim, output_dim, num_layers):
    H = hidden_dim
    g = 1.0 / math.sqrt(H)
    gru = []
    for l in range(num_layers):
        d_in = input_dim if l == 0 else 2 * H
        layer = {}
        for dname in ("fwd", "bwd"):
            key, k1, k2, k3 = jax.random.split(key, 4)
            layer[dname] = (
                jax.random.uniform(k1, (d_in, 3 * H), jnp.float32, -g, g),
                jax.random.uniform(k2, (H, 3 * H), jnp.float32, -g, g),
                jax.random.uniform(k3, (2, 3 * H), jnp.float32, -g, g),
            )
        gru.append(layer)

    def linear(k, din, dout):
        k1, k2 = jax.random.split(k)
        b = 1.0 / math.sqrt(din)
        return (jax.random.uniform(k1, (din, dout), jnp.float32, -b, b),
                jax.random.uniform(k2, (1, dout), jnp.float32, -b, b))

    key, ka, kb, kc = jax.random.split(key, 4)
    w1, b1 = linear(ka, 2 * H, H)
    w2, b2 = linear(kb, H, H)
    w3, b3 = linear(kc, H, output_dim)
    return {"hidden_dim": H, "num_layers": num_layers,
            "gru": gru, "mlp": (w1, b1, w2, b2, w3, b3)}


# ---------------------------------------------------------------------------
# Pure-JAX reference (same math, no Pallas) for a correctness check
# ---------------------------------------------------------------------------
def _gru_dir_ref(x, h0, wih, whh, b):
    H = h0.shape[-1]
    bih, bhh = b[0:1], b[1:2]
    h = h0
    outs = []
    for t in range(x.shape[0]):
        gi = x[t:t + 1] @ wih + bih
        gh = h @ whh + bhh
        r = jax.nn.sigmoid(gi[:, :H] + gh[:, :H])
        z = jax.nn.sigmoid(gi[:, H:2 * H] + gh[:, H:2 * H])
        n = jnp.tanh(gi[:, 2 * H:] + r * gh[:, 2 * H:])
        h = (1.0 - z) * n + z * h
        outs.append(h)
    return jnp.concatenate(outs, axis=0), h


def reference_forward(params, inp, hidden=None):
    H = params["hidden_dim"]
    L = params["num_layers"]
    if hidden is None:
        h0 = jnp.zeros((2 * L, H), jnp.float32)
    else:
        h0 = jnp.asarray(hidden, jnp.float32).reshape(2 * L, H)
    x = inp[0]
    hf = hb = None
    for l in range(L):
        sf, hf = _gru_dir_ref(x, h0[2 * l:2 * l + 1], *params["gru"][l]["fwd"])
        sbr, hb = _gru_dir_ref(x[::-1], h0[2 * l + 1:2 * l + 2], *params["gru"][l]["bwd"])
        x = jnp.concatenate([sf, sbr[::-1]], axis=-1)
    fs = jnp.concatenate([hf, hb], axis=-1)
    w1, b1, w2, b2, w3, b3 = params["mlp"]
    return ((fs @ w1 + b1) @ w2 + b2) @ w3 + b3


# ---------------------------------------------------------------------------
if __name__ == "__main__":
    input_dim, hidden_dim, output_dim, num_layers = 8, 32, 4, 2
    seq_len = 8

    key = jax.random.PRNGKey(0)
    k_params, k_x, k_h = jax.random.split(key, 3)
    params = init_params(k_params, input_dim, hidden_dim, output_dim, num_layers)
    inp = jax.random.normal(k_x, (1, seq_len, input_dim), jnp.float32)
    hidden = jax.random.normal(k_h, (2 * num_layers, 1, hidden_dim), jnp.float32)

    out0 = jax.block_until_ready(three_sa_forward(params, inp))           # hidden=None path
    out1 = jax.block_until_ready(three_sa_forward(params, inp, hidden))   # explicit h0 path

    ref0 = reference_forward(params, inp)
    ref1 = reference_forward(params, inp, hidden)
    assert out0.shape == (1, output_dim)
    assert jnp.allclose(out0, ref0, rtol=1e-4, atol=1e-4), (out0, ref0)
    assert jnp.allclose(out1, ref1, rtol=1e-4, atol=1e-4), (out1, ref1)

    print("KERNEL_OK")
</pallas_src>

<mosaic_0001>
module attributes {stable_mosaic.version = 11 : i64} {
  func.func @kernel(%arg0: memref<8x8xf32, #tpu.memory_space<vmem>>, %arg1: memref<4x32xf32, #tpu.memory_space<vmem>>, %arg2: memref<8x96xf32, #tpu.memory_space<vmem>>, %arg3: memref<32x96xf32, #tpu.memory_space<vmem>>, %arg4: memref<2x96xf32, #tpu.memory_space<vmem>>, %arg5: memref<8x96xf32, #tpu.memory_space<vmem>>, %arg6: memref<32x96xf32, #tpu.memory_space<vmem>>, %arg7: memref<2x96xf32, #tpu.memory_space<vmem>>, %arg8: memref<64x96xf32, #tpu.memory_space<vmem>>, %arg9: memref<32x96xf32, #tpu.memory_space<vmem>>, %arg10: memref<2x96xf32, #tpu.memory_space<vmem>>, %arg11: memref<64x96xf32, #tpu.memory_space<vmem>>, %arg12: memref<32x96xf32, #tpu.memory_space<vmem>>, %arg13: memref<2x96xf32, #tpu.memory_space<vmem>>, %arg14: memref<64x32xf32, #tpu.memory_space<vmem>>, %arg15: memref<1x32xf32, #tpu.memory_space<vmem>>, %arg16: memref<32x32xf32, #tpu.memory_space<vmem>>, %arg17: memref<1x32xf32, #tpu.memory_space<vmem>>, %arg18: memref<32x4xf32, #tpu.memory_space<vmem>>, %arg19: memref<1x4xf32, #tpu.memory_space<vmem>>, %arg20: memref<1x4xf32, #tpu.memory_space<vmem>>, %arg21: memref<8x32xf32, #tpu.memory_space<vmem>>, %arg22: memref<8x32xf32, #tpu.memory_space<vmem>>) attributes {dimension_semantics = [], scalar_prefetch = 0 : i64, scratch_operands = 2 : i64, tpu.core_type = #tpu.core_type<tc>} {
    %c0 = arith.constant 0 : index
    %c0_0 = arith.constant 0 : index
    %0 = vector.load %arg0[%c0, %c0_0] : memref<8x8xf32, #tpu.memory_space<vmem>>, vector<8x8xf32>
    %c0_1 = arith.constant 0 : index
    %c0_2 = arith.constant 0 : index
    %1 = vector.load %arg2[%c0_1, %c0_2] : memref<8x96xf32, #tpu.memory_space<vmem>>, vector<8x96xf32>
    %cst = arith.constant dense<0.000000e+00> : vector<8x96xf32>
    %2 = tpu.matmul %0, %1, %cst {dimension_numbers = #tpu.dot_dimension_numbers<[1], [0], [0], [1], [0, 0, 1, 1], [], []>} : vector<8x8xf32>, vector<8x96xf32>, vector<8x96xf32> -> vector<8x96xf32>
    %c0_3 = arith.constant 0 : index
    %c0_4 = arith.constant 0 : index
    %3 = vector.load %arg4[%c0_3, %c0_4] : memref<2x96xf32, #tpu.memory_space<vmem>>, vector<1x96xf32>
    %4 = vector.broadcast %3 : vector<1x96xf32> to vector<8x96xf32>
    %5 = arith.addf %2, %4 : vector<8x96xf32>
    %c0_5 = arith.constant 0 : index
    %c0_6 = arith.constant 0 : index
    %6 = vector.load %arg5[%c0_5, %c0_6] : memref<8x96xf32, #tpu.memory_space<vmem>>, vector<8x96xf32>
    %cst_7 = arith.constant dense<0.000000e+00> : vector<8x96xf32>
    %7 = tpu.matmul %0, %6, %cst_7 {dimension_numbers = #tpu.dot_dimension_numbers<[1], [0], [0], [1], [0, 0, 1, 1], [], []>} : vector<8x8xf32>, vector<8x96xf32>, vector<8x96xf32> -> vector<8x96xf32>
    %c0_8 = arith.constant 0 : index
    %c0_9 = arith.constant 0 : index
    %8 = vector.load %arg7[%c0_8, %c0_9] : memref<2x96xf32, #tpu.memory_space<vmem>>, vector<1x96xf32>
    %9 = vector.broadcast %8 : vector<1x96xf32> to vector<8x96xf32>
    %10 = arith.addf %7, %9 : vector<8x96xf32>
    %c1 = arith.constant 1 : index
    %c0_10 = arith.constant 0 : index
    %11 = vector.load %arg4[%c1, %c0_10] : memref<2x96xf32, #tpu.memory_space<vmem>>, vector<1x96xf32>
    %c1_11 = arith.constant 1 : index
    %c0_12 = arith.constant 0 : index
    %12 = vector.load %arg7[%c1_11, %c0_12] : memref<2x96xf32, #tpu.memory_space<vmem>>, vector<1x96xf32>
    %c0_13 = arith.constant 0 : index
    %c0_14 = arith.constant 0 : index
    %13 = vector.load %arg1[%c0_13, %c0_14] : memref<4x32xf32, #tpu.memory_space<vmem>>, vector<1x32xf32>
    %c1_15 = arith.constant 1 : index
    %c0_16 = arith.constant 0 : index
    %14 = vector.load %arg1[%c1_15, %c0_16] : memref<4x32xf32, #tpu.memory_space<vmem>>, vector<1x32xf32>
    %c0_17 = arith.constant 0 : index
    %c0_18 = arith.constant 0 : index
    %15 = vector.load %arg3[%c0_17, %c0_18] : memref<32x96xf32, #tpu.memory_space<vmem>>, vector<32x96xf32>
    %cst_19 = arith.constant dense<0.000000e+00> : vector<1x96xf32>
    %16 = tpu.matmul %13, %15, %cst_19 {dimension_numbers = #tpu.dot_dimension_numbers<[1], [0], [0], [1], [0, 0, 1, 1], [], []>} : vector<1x32xf32>, vector<32x96xf32>, vector<1x96xf32> -> vector<1x96xf32>
    %17 = arith.addf %16, %11 : vector<1x96xf32>
    %c0_20 = arith.constant 0 : index
    %c0_21 = arith.constant 0 : index
    %18 = vector.load %arg6[%c0_20, %c0_21] : memref<32x96xf32, #tpu.memory_space<vmem>>, vector<32x96xf32>
    %cst_22 = arith.constant dense<0.000000e+00> : vector<1x96xf32>
    %19 = tpu.matmul %14, %18, %cst_22 {dimension_numbers = #tpu.dot_dimension_numbers<[1], [0], [0], [1], [0, 0, 1, 1], [], []>} : vector<1x32xf32>, vector<32x96xf32>, vector<1x96xf32> -> vector<1x96xf32>
    %20 = arith.addf %19, %12 : vector<1x96xf32>
    %21 = vector.extract_strided_slice %5 {offsets = [0, 0], sizes = [1, 64], strides = [1, 1]} : vector<8x96xf32> to vector<1x64xf32>
    %22 = vector.extract_strided_slice %17 {offsets = [0, 0], sizes = [1, 64], strides = [1, 1]} : vector<1x96xf32> to vector<1x64xf32>
    %23 = arith.addf %21, %22 : vector<1x64xf32>
    %cst_23 = arith.constant 5.000000e-01 : f32
    %24 = vector.broadcast %cst_23 : f32 to vector<1x64xf32>
    %25 = arith.mulf %24, %23 : vector<1x64xf32>
    %26 = math.tanh %25 : vector<1x64xf32>
    %cst_24 = arith.constant 1.000000e+00 : f32
    %27 = vector.broadcast %cst_24 : f32 to vector<1x64xf32>
    %28 = arith.addf %26, %27 : vector<1x64xf32>
    %cst_25 = arith.constant 5.000000e-01 : f32
    %29 = vector.broadcast %cst_25 : f32 to vector<1x64xf32>
    %30 = arith.mulf %29, %28 : vector<1x64xf32>
    %31 = vector.extract_strided_slice %10 {offsets = [7, 0], sizes = [1, 64], strides = [1, 1]} : vector<8x96xf32> to vector<1x64xf32>
    %32 = vector.extract_strided_slice %20 {offsets = [0, 0], sizes = [1, 64], strides = [1, 1]} : vector<1x96xf32> to vector<1x64xf32>
    %33 = arith.addf %31, %32 : vector<1x64xf32>
    %cst_26 = arith.constant 5.000000e-01 : f32
    %34 = vector.broadcast %cst_26 : f32 to vector<1x64xf32>
    %35 = arith.mulf %34, %33 : vector<1x64xf32>
    %36 = math.tanh %35 : vector<1x64xf32>
    %cst_27 = arith.constant 1.000000e+00 : f32
    %37 = vector.broadcast %cst_27 : f32 to vector<1x64xf32>
    %38 = arith.addf %36, %37 : vector<1x64xf32>
    %cst_28 = arith.constant 5.000000e-01 : f32
    %39 = vector.broadcast %cst_28 : f32 to vector<1x64xf32>
    %40 = arith.mulf %39, %38 : vector<1x64xf32>
    %41 = vector.extract_strided_slice %30 {offsets = [0, 0], sizes = [1, 32], strides = [1, 1]} : vector<1x64xf32> to vector<1x32xf32>
    %42 = vector.extract_strided_slice %30 {offsets = [0, 32], sizes = [1, 32], strides = [1, 1]} : vector<1x64xf32> to vector<1x32xf32>
    %43 = vector.extract_strided_slice %40 {offsets = [0, 0], sizes = [1, 32], strides = [1, 1]} : vector<1x64xf32> to vector<1x32xf32>
    %44 = vector.extract_strided_slice %40 {offsets = [0, 32], sizes = [1, 32], strides = [1, 1]} : vector<1x64xf32> to vector<1x32xf32>
    %45 = vector.extract_strided_slice %5 {offsets = [0, 64], sizes = [1, 32], strides = [1, 1]} : vector<8x96xf32> to vector<1x32xf32>
    %46 = vector.extract_strided_slice %17 {offsets = [0, 64], sizes = [1, 32], strides = [1, 1]} : vector<1x96xf32> to vector<1x32xf32>
    %47 = arith.mulf %41, %46 : vector<1x32xf32>
    %48 = arith.addf %45, %47 : vector<1x32xf32>
    %49 = math.tanh %48 : vector<1x32xf32>
    %50 = vector.extract_strided_slice %10 {offsets = [7, 64], sizes = [1, 32], strides = [1, 1]} : vector<8x96xf32> to vector<1x32xf32>
    %51 = vector.extract_strided_slice %20 {offsets = [0, 64], sizes = [1, 32], strides = [1, 1]} : vector<1x96xf32> to vector<1x32xf32>
    %52 = arith.mulf %43, %51 : vector<1x32xf32>
    %53 = arith.addf %50, %52 : vector<1x32xf32>
    %54 = math.tanh %53 : vector<1x32xf32>
    %cst_29 = arith.constant 1.000000e+00 : f32
    %55 = vector.broadcast %cst_29 : f32 to vector<1x32xf32>
    %56 = arith.subf %55, %42 : vector<1x32xf32>
    %57 = arith.mulf %56, %49 : vector<1x32xf32>
    %58 = arith.mulf %42, %13 : vector<1x32xf32>
    %59 = arith.addf %57, %58 : vector<1x32xf32>
    %cst_30 = arith.constant 1.000000e+00 : f32
    %60 = vector.broadcast %cst_30 : f32 to vector<1x32xf32>
    %61 = arith.subf %60, %44 : vector<1x32xf32>
    %62 = arith.mulf %61, %54 : vector<1x32xf32>
    %63 = arith.mulf %44, %14 : vector<1x32xf32>
    %64 = arith.addf %62, %63 : vector<1x32xf32>
    %c0_31 = arith.constant 0 : index
    %c0_32 = arith.constant 0 : index
    %65 = vector.load %arg21[%c0_31, %c0_32] : memref<8x32xf32, #tpu.memory_space<vmem>>, vector<1x32xf32>
    tpu.vector_store %arg21[%c0_31, %c0_32], %59 {strides = array<i32>} : memref<8x32xf32, #tpu.memory_space<vmem>>, vector<1x32xf32>,
    %c7 = arith.constant 7 : index
    %c0_33 = arith.constant 0 : index
    %66 = vector.load %arg22[%c7, %c0_33] : memref<8x32xf32, #tpu.memory_space<vmem>>, vector<1x32xf32>
    tpu.vector_store %arg22[%c7, %c0_33], %64 {strides = array<i32>} : memref<8x32xf32, #tpu.memory_space<vmem>>, vector<1x32xf32>,
    %c0_34 = arith.constant 0 : index
    %c0_35 = arith.constant 0 : index
    %67 = vector.load %arg3[%c0_34, %c0_35] : memref<32x96xf32, #tpu.memory_space<vmem>>, vector<32x96xf32>
    %cst_36 = arith.constant dense<0.000000e+00> : vector<1x96xf32>
    %68 = tpu.matmul %59, %67, %cst_36 {dimension_numbers = #tpu.dot_dimension_numbers<[1], [0], [0], [1], [0, 0, 1, 1], [], []>} : vector<1x32xf32>, vector<32x96xf32>, vector<1x96xf32> -> vector<1x96xf32>
    %69 = arith.addf %68, %11 : vector<1x96xf32>
    %c0_37 = arith.constant 0 : index
    %c0_38 = arith.constant 0 : index
    %70 = vector.load %arg6[%c0_37, %c0_38] : memref<32x96xf32, #tpu.memory_space<vmem>>, vector<32x96xf32>
    %cst_39 = arith.constant dense<0.000000e+00> : vector<1x96xf32>
    %71 = tpu.matmul %64, %70, %cst_39 {dimension_numbers = #tpu.dot_dimension_numbers<[1], [0], [0], [1], [0, 0, 1, 1], [], []>} : vector<1x32xf32>, vector<32x96xf32>, vector<1x96xf32> -> vector<1x96xf32>
    %72 = arith.addf %71, %12 : vector<1x96xf32>
    %73 = vector.extract_strided_slice %5 {offsets = [1, 0], sizes = [1, 64], strides = [1, 1]} : vector<8x96xf32> to vector<1x64xf32>
    %74 = vector.extract_strided_slice %69 {offsets = [0, 0], sizes = [1, 64], strides = [1, 1]} : vector<1x96xf32> to vector<1x64xf32>
    %75 = arith.addf %73, %74 : vector<1x64xf32>
    %cst_40 = arith.constant 5.000000e-01 : f32
    %76 = vector.broadcast %cst_40 : f32 to vector<1x64xf32>
    %77 = arith.mulf %76, %75 : vector<1x64xf32>
    %78 = math.tanh %77 : vector<1x64xf32>
    %cst_41 = arith.constant 1.000000e+00 : f32
    %79 = vector.broadcast %cst_41 : f32 to vector<1x64xf32>
    %80 = arith.addf %78, %79 : vector<1x64xf32>
    %cst_42 = arith.constant 5.000000e-01 : f32
    %81 = vector.broadcast %cst_42 : f32 to vector<1x64xf32>
    %82 = arith.mulf %81, %80 : vector<1x64xf32>
    %83 = vector.extract_strided_slice %10 {offsets = [6, 0], sizes = [1, 64], strides = [1, 1]} : vector<8x96xf32> to vector<1x64xf32>
    %84 = vector.extract_strided_slice %72 {offsets = [0, 0], sizes = [1, 64], strides = [1, 1]} : vector<1x96xf32> to vector<1x64xf32>
    %85 = arith.addf %83, %84 : vector<1x64xf32>
    %cst_43 = arith.constant 5.000000e-01 : f32
    %86 = vector.broadcast %cst_43 : f32 to vector<1x64xf32>
    %87 = arith.mulf %86, %85 : vector<1x64xf32>
    %88 = math.tanh %87 : vector<1x64xf32>
    %cst_44 = arith.constant 1.000000e+00 : f32
    %89 = vector.broadcast %cst_44 : f32 to vector<1x64xf32>
    %90 = arith.addf %88, %89 : vector<1x64xf32>
    %cst_45 = arith.constant 5.000000e-01 : f32
    %91 = vector.broadcast %cst_45 : f32 to vector<1x64xf32>
    %92 = arith.mulf %91, %90 : vector<1x64xf32>
    %93 = vector.extract_strided_slice %82 {offsets = [0, 0], sizes = [1, 32], strides = [1, 1]} : vector<1x64xf32> to vector<1x32xf32>
    %94 = vector.extract_strided_slice %82 {offsets = [0, 32], sizes = [1, 32], strides = [1, 1]} : vector<1x64xf32> to vector<1x32xf32>
    %95 = vector.extract_strided_slice %92 {offsets = [0, 0], sizes = [1, 32], strides = [1, 1]} : vector<1x64xf32> to vector<1x32xf32>
    %96 = vector.extract_strided_slice %92 {offsets = [0, 32], sizes = [1, 32], strides = [1, 1]} : vector<1x64xf32> to vector<1x32xf32>
    %97 = vector.extract_strided_slice %5 {offsets = [1, 64], sizes = [1, 32], strides = [1, 1]} : vector<8x96xf32> to vector<1x32xf32>
    %98 = vector.extract_strided_slice %69 {offsets = [0, 64], sizes = [1, 32], strides = [1, 1]} : vector<1x96xf32> to vector<1x32xf32>
    %99 = arith.mulf %93, %98 : vector<1x32xf32>
    %100 = arith.addf %97, %99 : vector<1x32xf32>
    %101 = math.tanh %100 : vector<1x32xf32>
    %102 = vector.extract_strided_slice %10 {offsets = [6, 64], sizes = [1, 32], strides = [1, 1]} : vector<8x96xf32> to vector<1x32xf32>
    %103 = vector.extract_strided_slice %72 {offsets = [0, 64], sizes = [1, 32], strides = [1, 1]} : vector<1x96xf32> to vector<1x32xf32>
    %104 = arith.mulf %95, %103 : vector<1x32xf32>
    %105 = arith.addf %102, %104 : vector<1x32xf32>
    %106 = math.tanh %105 : vector<1x32xf32>
    %cst_46 = arith.constant 1.000000e+00 : f32
    %107 = vector.broadcast %cst_46 : f32 to vector<1x32xf32>
    %108 = arith.subf %107, %94 : vector<1x32xf32>
    %109 = arith.mulf %108, %101 : vector<1x32xf32>
    %110 = arith.mulf %94, %59 : vector<1x32xf32>
    %111 = arith.addf %109, %110 : vector<1x32xf32>
    %cst_47 = arith.constant 1.000000e+00 : f32
    %112 = vector.broadcast %cst_47 : f32 to vector<1x32xf32>
    %113 = arith.subf %112, %96 : vector<1x32xf32>
    %114 = arith.mulf %113, %106 : vector<1x32xf32>
    %115 = arith.mulf %96, %64 : vector<1x32xf32>
    %116 = arith.addf %114, %115 : vector<1x32xf32>
    %c1_48 = arith.constant 1 : index
    %c0_49 = arith.constant 0 : index
    %117 = vector.load %arg21[%c1_48, %c0_49] : memref<8x32xf32, #tpu.memory_space<vmem>>, vector<1x32xf32>
    tpu.vector_store %arg21[%c1_48, %c0_49], %111 {strides = array<i32>} : memref<8x32xf32, #tpu.memory_space<vmem>>, vector<1x32xf32>,
    %c6 = arith.constant 6 : index
    %c0_50 = arith.constant 0 : index
    %118 = vector.load %arg22[%c6, %c0_50] : memref<8x32xf32, #tpu.memory_space<vmem>>, vector<1x32xf32>
    tpu.vector_store %arg22[%c6, %c0_50], %116 {strides = array<i32>} : memref<8x32xf32, #tpu.memory_space<vmem>>, vector<1x32xf32>,
    %c0_51 = arith.constant 0 : index
    %c0_52 = arith.constant 0 : index
    %119 = vector.load %arg3[%c0_51, %c0_52] : memref<32x96xf32, #tpu.memory_space<vmem>>, vector<32x96xf32>
    %cst_53 = arith.constant dense<0.000000e+00> : vector<1x96xf32>
    %120 = tpu.matmul %111, %119, %cst_53 {dimension_numbers = #tpu.dot_dimension_numbers<[1], [0], [0], [1], [0, 0, 1, 1], [], []>} : vector<1x32xf32>, vector<32x96xf32>, vector<1x96xf32> -> vector<1x96xf32>
    %121 = arith.addf %120, %11 : vector<1x96xf32>
    %c0_54 = arith.constant 0 : index
    %c0_55 = arith.constant 0 : index
    %122 = vector.load %arg6[%c0_54, %c0_55] : memref<32x96xf32, #tpu.memory_space<vmem>>, vector<32x96xf32>
    %cst_56 = arith.constant dense<0.000000e+00> : vector<1x96xf32>
    %123 = tpu.matmul %116, %122, %cst_56 {dimension_numbers = #tpu.dot_dimension_numbers<[1], [0], [0], [1], [0, 0, 1, 1], [], []>} : vector<1x32xf32>, vector<32x96xf32>, vector<1x96xf32> -> vector<1x96xf32>
    %124 = arith.addf %123, %12 : vector<1x96xf32>
    %125 = vector.extract_strided_slice %5 {offsets = [2, 0], sizes = [1, 64], strides = [1, 1]} : vector<8x96xf32> to vector<1x64xf32>
    %126 = vector.extract_strided_slice %121 {offsets = [0, 0], sizes = [1, 64], strides = [1, 1]} : vector<1x96xf32> to vector<1x64xf32>
    %127 = arith.addf %125, %126 : vector<1x64xf32>
    %cst_57 = arith.constant 5.000000e-01 : f32
    %128 = vector.broadcast %cst_57 : f32 to vector<1x64xf32>
    %129 = arith.mulf %128, %127 : vector<1x64xf32>
    %130 = math.tanh %129 : vector<1x64xf32>
    %cst_58 = arith.constant 1.000000e+00 : f32
    %131 = vector.broadcast %cst_58 : f32 to vector<1x64xf32>
    %132 = arith.addf %130, %131 : vector<1x64xf32>
    %cst_59 = arith.constant 5.000000e-01 : f32
    %133 = vector.broadcast %cst_59 : f32 to vector<1x64xf32>
    %134 = arith.mulf %133, %132 : vector<1x64xf32>
    %135 = vector.extract_strided_slice %10 {offsets = [5, 0], sizes = [1, 64], strides = [1, 1]} : vector<8x96xf32> to vector<1x64xf32>
    %136 = vector.extract_strided_slice %124 {offsets = [0, 0], sizes = [1, 64], strides = [1, 1]} : vector<1x96xf32> to vector<1x64xf32>
    %137 = arith.addf %135, %136 : vector<1x64xf32>
    %cst_60 = arith.constant 5.000000e-01 : f32
    %138 = vector.broadcast %cst_60 : f32 to vector<1x64xf32>
    %139 = arith.mulf %138, %137 : vector<1x64xf32>
    %140 = math.tanh %139 : vector<1x64xf32>
    %cst_61 = arith.constant 1.000000e+00 : f32
    %141 = vector.broadcast %cst_61 : f32 to vector<1x64xf32>
    %142 = arith.addf %140, %141 : vector<1x64xf32>
    %cst_62 = arith.constant 5.000000e-01 : f32
    %143 = vector.broadcast %cst_62 : f32 to vector<1x64xf32>
    %144 = arith.mulf %143, %142 : vector<1x64xf32>
    %145 = vector.extract_strided_slice %134 {offsets = [0, 0], sizes = [1, 32], strides = [1, 1]} : vector<1x64xf32> to vector<1x32xf32>
    %146 = vector.extract_strided_slice %134 {offsets = [0, 32], sizes = [1, 32], strides = [1, 1]} : vector<1x64xf32> to vector<1x32xf32>
    %147 = vector.extract_strided_slice %144 {offsets = [0, 0], sizes = [1, 32], strides = [1, 1]} : vector<1x64xf32> to vector<1x32xf32>
    %148 = vector.extract_strided_slice %144 {offsets = [0, 32], sizes = [1, 32], strides = [1, 1]} : vector<1x64xf32> to vector<1x32xf32>
    %149 = vector.extract_strided_slice %5 {offsets = [2, 64], sizes = [1, 32], strides = [1, 1]} : vector<8x96xf32> to vector<1x32xf32>
    %150 = vector.extract_strided_slice %121 {offsets = [0, 64], sizes = [1, 32], strides = [1, 1]} : vector<1x96xf32> to vector<1x32xf32>
    %151 = arith.mulf %145, %150 : vector<1x32xf32>
    %152 = arith.addf %149, %151 : vector<1x32xf32>
    %153 = math.tanh %152 : vector<1x32xf32>
    %154 = vector.extract_strided_slice %10 {offsets = [5, 64], sizes = [1, 32], strides = [1, 1]} : vector<8x96xf32> to vector<1x32xf32>
    %155 = vector.extract_strided_slice %124 {offsets = [0, 64], sizes = [1, 32], strides = [1, 1]} : vector<1x96xf32> to vector<1x32xf32>
    %156 = arith.mulf %147, %155 : vector<1x32xf32>
    %157 = arith.addf %154, %156 : vector<1x32xf32>
    %158 = math.tanh %157 : vector<1x32xf32>
    %cst_63 = arith.constant 1.000000e+00 : f32
    %159 = vector.broadcast %cst_63 : f32 to vector<1x32xf32>
    %160 = arith.subf %159, %146 : vector<1x32xf32>
    %161 = arith.mulf %160, %153 : vector<1x32xf32>
    %162 = arith.mulf %146, %111 : vector<1x32xf32>
    %163 = arith.addf %161, %162 : vector<1x32xf32>
    %cst_64 = arith.constant 1.000000e+00 : f32
    %164 = vector.broadcast %cst_64 : f32 to vector<1x32xf32>
    %165 = arith.subf %164, %148 : vector<1x32xf32>
    %166 = arith.mulf %165, %158 : vector<1x32xf32>
    %167 = arith.mulf %148, %116 : vector<1x32xf32>
    %168 = arith.addf %166, %167 : vector<1x32xf32>
    %c2 = arith.constant 2 : index
    %c0_65 = arith.constant 0 : index
    %169 = vector.load %arg21[%c2, %c0_65] : memref<8x32xf32, #tpu.memory_space<vmem>>, vector<1x32xf32>
    tpu.vector_store %arg21[%c2, %c0_65], %163 {strides = array<i32>} : memref<8x32xf32, #tpu.memory_space<vmem>>, vector<1x32xf32>,
    %c5 = arith.constant 5 : index
    %c0_66 = arith.constant 0 : index
    %170 = vector.load %arg22[%c5, %c0_66] : memref<8x32xf32, #tpu.memory_space<vmem>>, vector<1x32xf32>
    tpu.vector_store %arg22[%c5, %c0_66], %168 {strides = array<i32>} : memref<8x32xf32, #tpu.memory_space<vmem>>, vector<1x32xf32>,
    %c0_67 = arith.constant 0 : index
    %c0_68 = arith.constant 0 : index
    %171 = vector.load %arg3[%c0_67, %c0_68] : memref<32x96xf32, #tpu.memory_space<vmem>>, vector<32x96xf32>
    %cst_69 = arith.constant dense<0.000000e+00> : vector<1x96xf32>
    %172 = tpu.matmul %163, %171, %cst_69 {dimension_numbers = #tpu.dot_dimension_numbers<[1], [0], [0], [1], [0, 0, 1, 1], [], []>} : vector<1x32xf32>, vector<32x96xf32>, vector<1x96xf32> -> vector<1x96xf32>
    %173 = arith.addf %172, %11 : vector<1x96xf32>
    %c0_70 = arith.constant 0 : index
    %c0_71 = arith.constant 0 : index
    %174 = vector.load %arg6[%c0_70, %c0_71] : memref<32x96xf32, #tpu.memory_space<vmem>>, vector<32x96xf32>
    %cst_72 = arith.constant dense<0.000000e+00> : vector<1x96xf32>
    %175 = tpu.matmul %168, %174, %cst_72 {dimension_numbers = #tpu.dot_dimension_numbers<[1], [0], [0], [1], [0, 0, 1, 1], [], []>} : vector<1x32xf32>, vector<32x96xf32>, vector<1x96xf32> -> vector<1x96xf32>
    %176 = arith.addf %175, %12 : vector<1x96xf32>
    %177 = vector.extract_strided_slice %5 {offsets = [3, 0], sizes = [1, 64], strides = [1, 1]} : vector<8x96xf32> to vector<1x64xf32>
    %178 = vector.extract_strided_slice %173 {offsets = [0, 0], sizes = [1, 64], strides = [1, 1]} : vector<1x96xf32> to vector<1x64xf32>
    %179 = arith.addf %177, %178 : vector<1x64xf32>
    %cst_73 = arith.constant 5.000000e-01 : f32
    %180 = vector.broadcast %cst_73 : f32 to vector<1x64xf32>
    %181 = arith.mulf %180, %179 : vector<1x64xf32>
    %182 = math.tanh %181 : vector<1x64xf32>
    %cst_74 = arith.constant 1.000000e+00 : f32
    %183 = vector.broadcast %cst_74 : f32 to vector<1x64xf32>
    %184 = arith.addf %182, %183 : vector<1x64xf32>
    %cst_75 = arith.constant 5.000000e-01 : f32
    %185 = vector.broadcast %cst_75 : f32 to vector<1x64xf32>
    %186 = arith.mulf %185, %184 : vector<1x64xf32>
    %187 = vector.extract_strided_slice %10 {offsets = [4, 0], sizes = [1, 64], strides = [1, 1]} : vector<8x96xf32> to vector<1x64xf32>
    %188 = vector.extract_strided_slice %176 {offsets = [0, 0], sizes = [1, 64], strides = [1, 1]} : vector<1x96xf32> to vector<1x64xf32>
    %189 = arith.addf %187, %188 : vector<1x64xf32>
    %cst_76 = arith.constant 5.000000e-01 : f32
    %190 = vector.broadcast %cst_76 : f32 to vector<1x64xf32>
    %191 = arith.mulf %190, %189 : vector<1x64xf32>
    %192 = math.tanh %191 : vector<1x64xf32>
    %cst_77 = arith.constant 1.000000e+00 : f32
    %193 = vector.broadcast %cst_77 : f32 to vector<1x64xf32>
    %194 = arith.addf %192, %193 : vector<1x64xf32>
    %cst_78 = arith.constant 5.000000e-01 : f32
    %195 = vector.broadcast %cst_78 : f32 to vector<1x64xf32>
    %196 = arith.mulf %195, %194 : vector<1x64xf32>
    %197 = vector.extract_strided_slice %186 {offsets = [0, 0], sizes = [1, 32], strides = [1, 1]} : vector<1x64xf32> to vector<1x32xf32>
    %198 = vector.extract_strided_slice %186 {offsets = [0, 32], sizes = [1, 32], strides = [1, 1]} : vector<1x64xf32> to vector<1x32xf32>
    %199 = vector.extract_strided_slice %196 {offsets = [0, 0], sizes = [1, 32], strides = [1, 1]} : vector<1x64xf32> to vector<1x32xf32>
    %200 = vector.extract_strided_slice %196 {offsets = [0, 32], sizes = [1, 32], strides = [1, 1]} : vector<1x64xf32> to vector<1x32xf32>
    %201 = vector.extract_strided_slice %5 {offsets = [3, 64], sizes = [1, 32], strides = [1, 1]} : vector<8x96xf32> to vector<1x32xf32>
    %202 = vector.extract_strided_slice %173 {offsets = [0, 64], sizes = [1, 32], strides = [1, 1]} : vector<1x96xf32> to vector<1x32xf32>
    %203 = arith.mulf %197, %202 : vector<1x32xf32>
    %204 = arith.addf %201, %203 : vector<1x32xf32>
    %205 = math.tanh %204 : vector<1x32xf32>
    %206 = vector.extract_strided_slice %10 {offsets = [4, 64], sizes = [1, 32], strides = [1, 1]} : vector<8x96xf32> to vector<1x32xf32>
    %207 = vector.extract_strided_slice %176 {offsets = [0, 64], sizes = [1, 32], strides = [1, 1]} : vector<1x96xf32> to vector<1x32xf32>
    %208 = arith.mulf %199, %207 : vector<1x32xf32>
    %209 = arith.addf %206, %208 : vector<1x32xf32>
    %210 = math.tanh %209 : vector<1x32xf32>
    %cst_79 = arith.constant 1.000000e+00 : f32
    %211 = vector.broadcast %cst_79 : f32 to vector<1x32xf32>
    %212 = arith.subf %211, %198 : vector<1x32xf32>
    %213 = arith.mulf %212, %205 : vector<1x32xf32>
    %214 = arith.mulf %198, %163 : vector<1x32xf32>
    %215 = arith.addf %213, %214 : vector<1x32xf32>
    %cst_80 = arith.constant 1.000000e+00 : f32
    %216 = vector.broadcast %cst_80 : f32 to vector<1x32xf32>
    %217 = arith.subf %216, %200 : vector<1x32xf32>
    %218 = arith.mulf %217, %210 : vector<1x32xf32>
    %219 = arith.mulf %200, %168 : vector<1x32xf32>
    %220 = arith.addf %218, %219 : vector<1x32xf32>
    %c3 = arith.constant 3 : index
    %c0_81 = arith.constant 0 : index
    %221 = vector.load %arg21[%c3, %c0_81] : memref<8x32xf32, #tpu.memory_space<vmem>>, vector<1x32xf32>
    tpu.vector_store %arg21[%c3, %c0_81], %215 {strides = array<i32>} : memref<8x32xf32, #tpu.memory_space<vmem>>, vector<1x32xf32>,
    %c4 = arith.constant 4 : index
    %c0_82 = arith.constant 0 : index
    %222 = vector.load %arg22[%c4, %c0_82] : memref<8x32xf32, #tpu.memory_space<vmem>>, vector<1x32xf32>
    tpu.vector_store %arg22[%c4, %c0_82], %220 {strides = array<i32>} : memref<8x32xf32, #tpu.memory_space<vmem>>, vector<1x32xf32>,
    %c0_83 = arith.constant 0 : index
    %c0_84 = arith.constant 0 : index
    %223 = vector.load %arg3[%c0_83, %c0_84] : memref<32x96xf32, #tpu.memory_space<vmem>>, vector<32x96xf32>
    %cst_85 = arith.constant dense<0.000000e+00> : vector<1x96xf32>
    %224 = tpu.matmul %215, %223, %cst_85 {dimension_numbers = #tpu.dot_dimension_numbers<[1], [0], [0], [1], [0, 0, 1, 1], [], []>} : vector<1x32xf32>, vector<32x96xf32>, vector<1x96xf32> -> vector<1x96xf32>
    %225 = arith.addf %224, %11 : vector<1x96xf32>
    %c0_86 = arith.constant 0 : index
    %c0_87 = arith.constant 0 : index
    %226 = vector.load %arg6[%c0_86, %c0_87] : memref<32x96xf32, #tpu.memory_space<vmem>>, vector<32x96xf32>
    %cst_88 = arith.constant dense<0.000000e+00> : vector<1x96xf32>
    %227 = tpu.matmul %220, %226, %cst_88 {dimension_numbers = #tpu.dot_dimension_numbers<[1], [0], [0], [1], [0, 0, 1, 1], [], []>} : vector<1x32xf32>, vector<32x96xf32>, vector<1x96xf32> -> vector<1x96xf32>
    %228 = arith.addf %227, %12 : vector<1x96xf32>
    %229 = vector.extract_strided_slice %5 {offsets = [4, 0], sizes = [1, 64], strides = [1, 1]} : vector<8x96xf32> to vector<1x64xf32>
    %230 = vector.extract_strided_slice %225 {offsets = [0, 0], sizes = [1, 64], strides = [1, 1]} : vector<1x96xf32> to vector<1x64xf32>
    %231 = arith.addf %229, %230 : vector<1x64xf32>
    %cst_89 = arith.constant 5.000000e-01 : f32
    %232 = vector.broadcast %cst_89 : f32 to vector<1x64xf32>
    %233 = arith.mulf %232, %231 : vector<1x64xf32>
    %234 = math.tanh %233 : vector<1x64xf32>
    %cst_90 = arith.constant 1.000000e+00 : f32
    %235 = vector.broadcast %cst_90 : f32 to vector<1x64xf32>
    %236 = arith.addf %234, %235 : vector<1x64xf32>
    %cst_91 = arith.constant 5.000000e-01 : f32
    %237 = vector.broadcast %cst_91 : f32 to vector<1x64xf32>
    %238 = arith.mulf %237, %236 : vector<1x64xf32>
    %239 = vector.extract_strided_slice %10 {offsets = [3, 0], sizes = [1, 64], strides = [1, 1]} : vector<8x96xf32> to vector<1x64xf32>
    %240 = vector.extract_strided_slice %228 {offsets = [0, 0], sizes = [1, 64], strides = [1, 1]} : vector<1x96xf32> to vector<1x64xf32>
    %241 = arith.addf %239, %240 : vector<1x64xf32>
    %cst_92 = arith.constant 5.000000e-01 : f32
    %242 = vector.broadcast %cst_92 : f32 to vector<1x64xf32>
    %243 = arith.mulf %242, %241 : vector<1x64xf32>
    %244 = math.tanh %243 : vector<1x64xf32>
    %cst_93 = arith.constant 1.000000e+00 : f32
    %245 = vector.broadcast %cst_93 : f32 to vector<1x64xf32>
    %246 = arith.addf %244, %245 : vector<1x64xf32>
    %cst_94 = arith.constant 5.000000e-01 : f32
    %247 = vector.broadcast %cst_94 : f32 to vector<1x64xf32>
    %248 = arith.mulf %247, %246 : vector<1x64xf32>
    %249 = vector.extract_strided_slice %238 {offsets = [0, 0], sizes = [1, 32], strides = [1, 1]} : vector<1x64xf32> to vector<1x32xf32>
    %250 = vector.extract_strided_slice %238 {offsets = [0, 32], sizes = [1, 32], strides = [1, 1]} : vector<1x64xf32> to vector<1x32xf32>
    %251 = vector.extract_strided_slice %248 {offsets = [0, 0], sizes = [1, 32], strides = [1, 1]} : vector<1x64xf32> to vector<1x32xf32>
    %252 = vector.extract_strided_slice %248 {offsets = [0, 32], sizes = [1, 32], strides = [1, 1]} : vector<1x64xf32> to vector<1x32xf32>
    %253 = vector.extract_strided_slice %5 {offsets = [4, 64], sizes = [1, 32], strides = [1, 1]} : vector<8x96xf32> to vector<1x32xf32>
    %254 = vector.extract_strided_slice %225 {offsets = [0, 64], sizes = [1, 32], strides = [1, 1]} : vector<1x96xf32> to vector<1x32xf32>
    %255 = arith.mulf %249, %254 : vector<1x32xf32>
    %256 = arith.addf %253, %255 : vector<1x32xf32>
    %257 = math.tanh %256 : vector<1x32xf32>
    %258 = vector.extract_strided_slice %10 {offsets = [3, 64], sizes = [1, 32], strides = [1, 1]} : vector<8x96xf32> to vector<1x32xf32>
    %259 = vector.extract_strided_slice %228 {offsets = [0, 64], sizes = [1, 32], strides = [1, 1]} : vector<1x96xf32> to vector<1x32xf32>
    %260 = arith.mulf %251, %259 : vector<1x32xf32>
    %261 = arith.addf %258, %260 : vector<1x32xf32>
    %262 = math.tanh %261 : vector<1x32xf32>
    %cst_95 = arith.constant 1.000000e+00 : f32
    %263 = vector.broadcast %cst_95 : f32 to vector<1x32xf32>
    %264 = arith.subf %263, %250 : vector<1x32xf32>
    %265 = arith.mulf %264, %257 : vector<1x32xf32>
    %266 = arith.mulf %250, %215 : vector<1x32xf32>
    %267 = arith.addf %265, %266 : vector<1x32xf32>
    %cst_96 = arith.constant 1.000000e+00 : f32
    %268 = vector.broadcast %cst_96 : f32 to vector<1x32xf32>
    %269 = arith.subf %268, %252 : vector<1x32xf32>
    %270 = arith.mulf %269, %262 : vector<1x32xf32>
    %271 = arith.mulf %252, %220 : vector<1x32xf32>
    %272 = arith.addf %270, %271 : vector<1x32xf32>
    %c4_97 = arith.constant 4 : index
    %c0_98 = arith.constant 0 : index
    %273 = vector.load %arg21[%c4_97, %c0_98] : memref<8x32xf32, #tpu.memory_space<vmem>>, vector<1x32xf32>
    tpu.vector_store %arg21[%c4_97, %c0_98], %267 {strides = array<i32>} : memref<8x32xf32, #tpu.memory_space<vmem>>, vector<1x32xf32>,
    %c3_99 = arith.constant 3 : index
    %c0_100 = arith.constant 0 : index
    %274 = vector.load %arg22[%c3_99, %c0_100] : memref<8x32xf32, #tpu.memory_space<vmem>>, vector<1x32xf32>
    tpu.vector_store %arg22[%c3_99, %c0_100], %272 {strides = array<i32>} : memref<8x32xf32, #tpu.memory_space<vmem>>, vector<1x32xf32>,
    %c0_101 = arith.constant 0 : index
    %c0_102 = arith.constant 0 : index
    %275 = vector.load %arg3[%c0_101, %c0_102] : memref<32x96xf32, #tpu.memory_space<vmem>>, vector<32x96xf32>
    %cst_103 = arith.constant dense<0.000000e+00> : vector<1x96xf32>
    %276 = tpu.matmul %267, %275, %cst_103 {dimension_numbers = #tpu.dot_dimension_numbers<[1], [0], [0], [1], [0, 0, 1, 1], [], []>} : vector<1x32xf32>, vector<32x96xf32>, vector<1x96xf32> -> vector<1x96xf32>
    %277 = arith.addf %276, %11 : vector<1x96xf32>
    %c0_104 = arith.constant 0 : index
    %c0_105 = arith.constant 0 : index
    %278 = vector.load %arg6[%c0_104, %c0_105] : memref<32x96xf32, #tpu.memory_space<vmem>>, vector<32x96xf32>
    %cst_106 = arith.constant dense<0.000000e+00> : vector<1x96xf32>
    %279 = tpu.matmul %272, %278, %cst_106 {dimension_numbers = #tpu.dot_dimension_numbers<[1], [0], [0], [1], [0, 0, 1, 1], [], []>} : vector<1x32xf32>, vector<32x96xf32>, vector<1x96xf32> -> vector<1x96xf32>
    %280 = arith.addf %279, %12 : vector<1x96xf32>
    %281 = vector.extract_strided_slice %5 {offsets = [5, 0], sizes = [1, 64], strides = [1, 1]} : vector<8x96xf32> to vector<1x64xf32>
    %282 = vector.extract_strided_slice %277 {offsets = [0, 0], sizes = [1, 64], strides = [1, 1]} : vector<1x96xf32> to vector<1x64xf32>
    %283 = arith.addf %281, %282 : vector<1x64xf32>
    %cst_107 = arith.constant 5.000000e-01 : f32
    %284 = vector.broadcast %cst_107 : f32 to vector<1x64xf32>
    %285 = arith.mulf %284, %283 : vector<1x64xf32>
    %286 = math.tanh %285 : vector<1x64xf32>
    %cst_108 = arith.constant 1.000000e+00 : f32
    %287 = vector.broadcast %cst_108 : f32 to vector<1x64xf32>
    %288 = arith.addf %286, %287 : vector<1x64xf32>
    %cst_109 = arith.constant 5.000000e-01 : f32
    %289 = vector.broadcast %cst_109 : f32 to vector<1x64xf32>
    %290 = arith.mulf %289, %288 : vector<1x64xf32>
    %291 = vector.extract_strided_slice %10 {offsets = [2, 0], sizes = [1, 64], strides = [1, 1]} : vector<8x96xf32> to vector<1x64xf32>
    %292 = vector.extract_strided_slice %280 {offsets = [0, 0], sizes = [1, 64], strides = [1, 1]} : vector<1x96xf32> to vector<1x64xf32>
    %293 = arith.addf %291, %292 : vector<1x64xf32>
    %cst_110 = arith.constant 5.000000e-01 : f32
    %294 = vector.broadcast %cst_110 : f32 to vector<1x64xf32>
    %295 = arith.mulf %294, %293 : vector<1x64xf32>
    %296 = math.tanh %295 : vector<1x64xf32>
    %cst_111 = arith.constant 1.000000e+00 : f32
    %297 = vector.broadcast %cst_111 : f32 to vector<1x64xf32>
    %298 = arith.addf %296, %297 : vector<1x64xf32>
    %cst_112 = arith.constant 5.000000e-01 : f32
    %299 = vector.broadcast %cst_112 : f32 to vector<1x64xf32>
    %300 = arith.mulf %299, %298 : vector<1x64xf32>
    %301 = vector.extract_strided_slice %290 {offsets = [0, 0], sizes = [1, 32], strides = [1, 1]} : vector<1x64xf32> to vector<1x32xf32>
    %302 = vector.extract_strided_slice %290 {offsets = [0, 32], sizes = [1, 32], strides = [1, 1]} : vector<1x64xf32> to vector<1x32xf32>
    %303 = vector.extract_strided_slice %300 {offsets = [0, 0], sizes = [1, 32], strides = [1, 1]} : vector<1x64xf32> to vector<1x32xf32>
    %304 = vector.extract_strided_slice %300 {offsets = [0, 32], sizes = [1, 32], strides = [1, 1]} : vector<1x64xf32> to vector<1x32xf32>
    %305 = vector.extract_strided_slice %5 {offsets = [5, 64], sizes = [1, 32], strides = [1, 1]} : vector<8x96xf32> to vector<1x32xf32>
    %306 = vector.extract_strided_slice %277 {offsets = [0, 64], sizes = [1, 32], strides = [1, 1]} : vector<1x96xf32> to vector<1x32xf32>
    %307 = arith.mulf %301, %306 : vector<1x32xf32>
    %308 = arith.addf %305, %307 : vector<1x32xf32>
    %309 = math.tanh %308 : vector<1x32xf32>
    %310 = vector.extract_strided_slice %10 {offsets = [2, 64], sizes = [1, 32], strides = [1, 1]} : vector<8x96xf32> to vector<1x32xf32>
    %311 = vector.extract_strided_slice %280 {offsets = [0, 64], sizes = [1, 32], strides = [1, 1]} : vector<1x96xf32> to vector<1x32xf32>
    %312 = arith.mulf %303, %311 : vector<1x32xf32>
    %313 = arith.addf %310, %312 : vector<1x32xf32>
    %314 = math.tanh %313 : vector<1x32xf32>
    %cst_113 = arith.constant 1.000000e+00 : f32
    %315 = vector.broadcast %cst_113 : f32 to vector<1x32xf32>
    %316 = arith.subf %315, %302 : vector<1x32xf32>
    %317 = arith.mulf %316, %309 : vector<1x32xf32>
    %318 = arith.mulf %302, %267 : vector<1x32xf32>
    %319 = arith.addf %317, %318 : vector<1x32xf32>
    %cst_114 = arith.constant 1.000000e+00 : f32
    %320 = vector.broadcast %cst_114 : f32 to vector<1x32xf32>
    %321 = arith.subf %320, %304 : vector<1x32xf32>
    %322 = arith.mulf %321, %314 : vector<1x32xf32>
    %323 = arith.mulf %304, %272 : vector<1x32xf32>
    %324 = arith.addf %322, %323 : vector<1x32xf32>
    %c5_115 = arith.constant 5 : index
    %c0_116 = arith.constant 0 : index
    %325 = vector.load %arg21[%c5_115, %c0_116] : memref<8x32xf32, #tpu.memory_space<vmem>>, vector<1x32xf32>
    tpu.vector_store %arg21[%c5_115, %c0_116], %319 {strides = array<i32>} : memref<8x32xf32, #tpu.memory_space<vmem>>, vector<1x32xf32>,
    %c2_117 = arith.constant 2 : index
    %c0_118 = arith.constant 0 : index
    %326 = vector.load %arg22[%c2_117, %c0_118] : memref<8x32xf32, #tpu.memory_space<vmem>>, vector<1x32xf32>
    tpu.vector_store %arg22[%c2_117, %c0_118], %324 {strides = array<i32>} : memref<8x32xf32, #tpu.memory_space<vmem>>, vector<1x32xf32>,
    %c0_119 = arith.constant 0 : index
    %c0_120 = arith.constant 0 : index
    %327 = vector.load %arg3[%c0_119, %c0_120] : memref<32x96xf32, #tpu.memory_space<vmem>>, vector<32x96xf32>
    %cst_121 = arith.constant dense<0.000000e+00> : vector<1x96xf32>
    %328 = tpu.matmul %319, %327, %cst_121 {dimension_numbers = #tpu.dot_dimension_numbers<[1], [0], [0], [1], [0, 0, 1, 1], [], []>} : vector<1x32xf32>, vector<32x96xf32>, vector<1x96xf32> -> vector<1x96xf32>
    %329 = arith.addf %328, %11 : vector<1x96xf32>
    %c0_122 = arith.constant 0 : index
    %c0_123 = arith.constant 0 : index
    %330 = vector.load %arg6[%c0_122, %c0_123] : memref<32x96xf32, #tpu.memory_space<vmem>>, vector<32x96xf32>
    %cst_124 = arith.constant dense<0.000000e+00> : vector<1x96xf32>
    %331 = tpu.matmul %324, %330, %cst_124 {dimension_numbers = #tpu.dot_dimension_numbers<[1], [0], [0], [1], [0, 0, 1, 1], [], []>} : vector<1x32xf32>, vector<32x96xf32>, vector<1x96xf32> -> vector<1x96xf32>
    %332 = arith.addf %331, %12 : vector<1x96xf32>
    %333 = vector.extract_strided_slice %5 {offsets = [6, 0], sizes = [1, 64], strides = [1, 1]} : vector<8x96xf32> to vector<1x64xf32>
    %334 = vector.extract_strided_slice %329 {offsets = [0, 0], sizes = [1, 64], strides = [1, 1]} : vector<1x96xf32> to vector<1x64xf32>
    %335 = arith.addf %333, %334 : vector<1x64xf32>
    %cst_125 = arith.constant 5.000000e-01 : f32
    %336 = vector.broadcast %cst_125 : f32 to vector<1x64xf32>
    %337 = arith.mulf %336, %335 : vector<1x64xf32>
    %338 = math.tanh %337 : vector<1x64xf32>
    %cst_126 = arith.constant 1.000000e+00 : f32
    %339 = vector.broadcast %cst_126 : f32 to vector<1x64xf32>
    %340 = arith.addf %338, %339 : vector<1x64xf32>
    %cst_127 = arith.constant 5.000000e-01 : f32
    %341 = vector.broadcast %cst_127 : f32 to vector<1x64xf32>
    %342 = arith.mulf %341, %340 : vector<1x64xf32>
    %343 = vector.extract_strided_slice %10 {offsets = [1, 0], sizes = [1, 64], strides = [1, 1]} : vector<8x96xf32> to vector<1x64xf32>
    %344 = vector.extract_strided_slice %332 {offsets = [0, 0], sizes = [1, 64], strides = [1, 1]} : vector<1x96xf32> to vector<1x64xf32>
    %345 = arith.addf %343, %344 : vector<1x64xf32>
    %cst_128 = arith.constant 5.000000e-01 : f32
    %346 = vector.broadcast %cst_128 : f32 to vector<1x64xf32>
    %347 = arith.mulf %346, %345 : vector<1x64xf32>
    %348 = math.tanh %347 : vector<1x64xf32>
    %cst_129 = arith.constant 1.000000e+00 : f32
    %349 = vector.broadcast %cst_129 : f32 to vector<1x64xf32>
    %350 = arith.addf %348, %349 : vector<1x64xf32>
    %cst_130 = arith.constant 5.000000e-01 : f32
    %351 = vector.broadcast %cst_130 : f32 to vector<1x64xf32>
    %352 = arith.mulf %351, %350 : vector<1x64xf32>
    %353 = vector.extract_strided_slice %342 {offsets = [0, 0], sizes = [1, 32], strides = [1, 1]} : vector<1x64xf32> to vector<1x32xf32>
    %354 = vector.extract_strided_slice %342 {offsets = [0, 32], sizes = [1, 32], strides = [1, 1]} : vector<1x64xf32> to vector<1x32xf32>
    %355 = vector.extract_strided_slice %352 {offsets = [0, 0], sizes = [1, 32], strides = [1, 1]} : vector<1x64xf32> to vector<1x32xf32>
    %356 = vector.extract_strided_slice %352 {offsets = [0, 32], sizes = [1, 32], strides = [1, 1]} : vector<1x64xf32> to vector<1x32xf32>
    %357 = vector.extract_strided_slice %5 {offsets = [6, 64], sizes = [1, 32], strides = [1, 1]} : vector<8x96xf32> to vector<1x32xf32>
    %358 = vector.extract_strided_slice %329 {offsets = [0, 64], sizes = [1, 32], strides = [1, 1]} : vector<1x96xf32> to vector<1x32xf32>
    %359 = arith.mulf %353, %358 : vector<1x32xf32>
    %360 = arith.addf %357, %359 : vector<1x32xf32>
    %361 = math.tanh %360 : vector<1x32xf32>
    %362 = vector.extract_strided_slice %10 {offsets = [1, 64], sizes = [1, 32], strides = [1, 1]} : vector<8x96xf32> to vector<1x32xf32>
    %363 = vector.extract_strided_slice %332 {offsets = [0, 64], sizes = [1, 32], strides = [1, 1]} : vector<1x96xf32> to vector<1x32xf32>
    %364 = arith.mulf %355, %363 : vector<1x32xf32>
    %365 = arith.addf %362, %364 : vector<1x32xf32>
    %366 = math.tanh %365 : vector<1x32xf32>
    %cst_131 = arith.constant 1.000000e+00 : f32
    %367 = vector.broadcast %cst_131 : f32 to vector<1x32xf32>
    %368 = arith.subf %367, %354 : vector<1x32xf32>
    %369 = arith.mulf %368, %361 : vector<1x32xf32>
    %370 = arith.mulf %354, %319 : vector<1x32xf32>
    %371 = arith.addf %369, %370 : vector<1x32xf32>
    %cst_132 = arith.constant 1.000000e+00 : f32
    %372 = vector.broadcast %cst_132 : f32 to vector<1x32xf32>
    %373 = arith.subf %372, %356 : vector<1x32xf32>
    %374 = arith.mulf %373, %366 : vector<1x32xf32>
    %375 = arith.mulf %356, %324 : vector<1x32xf32>
    %376 = arith.addf %374, %375 : vector<1x32xf32>
    %c6_133 = arith.constant 6 : index
    %c0_134 = arith.constant 0 : index
    %377 = vector.load %arg21[%c6_133, %c0_134] : memref<8x32xf32, #tpu.memory_space<vmem>>, vector<1x32xf32>
    tpu.vector_store %arg21[%c6_133, %c0_134], %371 {strides = array<i32>} : memref<8x32xf32, #tpu.memory_space<vmem>>, vector<1x32xf32>,
    %c1_135 = arith.constant 1 : index
    %c0_136 = arith.constant 0 : index
    %378 = vector.load %arg22[%c1_135, %c0_136] : memref<8x32xf32, #tpu.memory_space<vmem>>, vector<1x32xf32>
    tpu.vector_store %arg22[%c1_135, %c0_136], %376 {strides = array<i32>} : memref<8x32xf32, #tpu.memory_space<vmem>>, vector<1x32xf32>,
    %c0_137 = arith.constant 0 : index
    %c0_138 = arith.constant 0 : index
    %379 = vector.load %arg3[%c0_137, %c0_138] : memref<32x96xf32, #tpu.memory_space<vmem>>, vector<32x96xf32>
    %cst_139 = arith.constant dense<0.000000e+00> : vector<1x96xf32>
    %380 = tpu.matmul %371, %379, %cst_139 {dimension_numbers = #tpu.dot_dimension_numbers<[1], [0], [0], [1], [0, 0, 1, 1], [], []>} : vector<1x32xf32>, vector<32x96xf32>, vector<1x96xf32> -> vector<1x96xf32>
    %381 = arith.addf %380, %11 : vector<1x96xf32>
    %c0_140 = arith.constant 0 : index
    %c0_141 = arith.constant 0 : index
    %382 = vector.load %arg6[%c0_140, %c0_141] : memref<32x96xf32, #tpu.memory_space<vmem>>, vector<32x96xf32>
    %cst_142 = arith.constant dense<0.000000e+00> : vector<1x96xf32>
    %383 = tpu.matmul %376, %382, %cst_142 {dimension_numbers = #tpu.dot_dimension_numbers<[1], [0], [0], [1], [0, 0, 1, 1], [], []>} : vector<1x32xf32>, vector<32x96xf32>, vector<1x96xf32> -> vector<1x96xf32>
    %384 = arith.addf %383, %12 : vector<1x96xf32>
    %385 = vector.extract_strided_slice %5 {offsets = [7, 0], sizes = [1, 64], strides = [1, 1]} : vector<8x96xf32> to vector<1x64xf32>
    %386 = vector.extract_strided_slice %381 {offsets = [0, 0], sizes = [1, 64], strides = [1, 1]} : vector<1x96xf32> to vector<1x64xf32>
    %387 = arith.addf %385, %386 : vector<1x64xf32>
    %cst_143 = arith.constant 5.000000e-01 : f32
    %388 = vector.broadcast %cst_143 : f32 to vector<1x64xf32>
    %389 = arith.mulf %388, %387 : vector<1x64xf32>
    %390 = math.tanh %389 : vector<1x64xf32>
    %cst_144 = arith.constant 1.000000e+00 : f32
    %391 = vector.broadcast %cst_144 : f32 to vector<1x64xf32>
    %392 = arith.addf %390, %391 : vector<1x64xf32>
    %cst_145 = arith.constant 5.000000e-01 : f32
    %393 = vector.broadcast %cst_145 : f32 to vector<1x64xf32>
    %394 = arith.mulf %393, %392 : vector<1x64xf32>
    %395 = vector.extract_strided_slice %10 {offsets = [0, 0], sizes = [1, 64], strides = [1, 1]} : vector<8x96xf32> to vector<1x64xf32>
    %396 = vector.extract_strided_slice %384 {offsets = [0, 0], sizes = [1, 64], strides = [1, 1]} : vector<1x96xf32> to vector<1x64xf32>
    %397 = arith.addf %395, %396 : vector<1x64xf32>
    %cst_146 = arith.constant 5.000000e-01 : f32
    %398 = vector.broadcast %cst_146 : f32 to vector<1x64xf32>
    %399 = arith.mulf %398, %397 : vector<1x64xf32>
    %400 = math.tanh %399 : vector<1x64xf32>
    %cst_147 = arith.constant 1.000000e+00 : f32
    %401 = vector.broadcast %cst_147 : f32 to vector<1x64xf32>
    %402 = arith.addf %400, %401 : vector<1x64xf32>
    %cst_148 = arith.constant 5.000000e-01 : f32
    %403 = vector.broadcast %cst_148 : f32 to vector<1x64xf32>
    %404 = arith.mulf %403, %402 : vector<1x64xf32>
    %405 = vector.extract_strided_slice %394 {offsets = [0, 0], sizes = [1, 32], strides = [1, 1]} : vector<1x64xf32> to vector<1x32xf32>
    %406 = vector.extract_strided_slice %394 {offsets = [0, 32], sizes = [1, 32], strides = [1, 1]} : vector<1x64xf32> to vector<1x32xf32>
    %407 = vector.extract_strided_slice %404 {offsets = [0, 0], sizes = [1, 32], strides = [1, 1]} : vector<1x64xf32> to vector<1x32xf32>
    %408 = vector.extract_strided_slice %404 {offsets = [0, 32], sizes = [1, 32], strides = [1, 1]} : vector<1x64xf32> to vector<1x32xf32>
    %409 = vector.extract_strided_slice %5 {offsets = [7, 64], sizes = [1, 32], strides = [1, 1]} : vector<8x96xf32> to vector<1x32xf32>
    %410 = vector.extract_strided_slice %381 {offsets = [0, 64], sizes = [1, 32], strides = [1, 1]} : vector<1x96xf32> to vector<1x32xf32>
    %411 = arith.mulf %405, %410 : vector<1x32xf32>
    %412 = arith.addf %409, %411 : vector<1x32xf32>
    %413 = math.tanh %412 : vector<1x32xf32>
    %414 = vector.extract_strided_slice %10 {offsets = [0, 64], sizes = [1, 32], strides = [1, 1]} : vector<8x96xf32> to vector<1x32xf32>
    %415 = vector.extract_strided_slice %384 {offsets = [0, 64], sizes = [1, 32], strides = [1, 1]} : vector<1x96xf32> to vector<1x32xf32>
    %416 = arith.mulf %407, %415 : vector<1x32xf32>
    %417 = arith.addf %414, %416 : vector<1x32xf32>
    %418 = math.tanh %417 : vector<1x32xf32>
    %cst_149 = arith.constant 1.000000e+00 : f32
    %419 = vector.broadcast %cst_149 : f32 to vector<1x32xf32>
    %420 = arith.subf %419, %406 : vector<1x32xf32>
    %421 = arith.mulf %420, %413 : vector<1x32xf32>
    %422 = arith.mulf %406, %371 : vector<1x32xf32>
    %423 = arith.addf %421, %422 : vector<1x32xf32>
    %cst_150 = arith.constant 1.000000e+00 : f32
    %424 = vector.broadcast %cst_150 : f32 to vector<1x32xf32>
    %425 = arith.subf %424, %408 : vector<1x32xf32>
    %426 = arith.mulf %425, %418 : vector<1x32xf32>
    %427 = arith.mulf %408, %376 : vector<1x32xf32>
    %428 = arith.addf %426, %427 : vector<1x32xf32>
    %c7_151 = arith.constant 7 : index
    %c0_152 = arith.constant 0 : index
    %429 = vector.load %arg21[%c7_151, %c0_152] : memref<8x32xf32, #tpu.memory_space<vmem>>, vector<1x32xf32>
    tpu.vector_store %arg21[%c7_151, %c0_152], %423 {strides = array<i32>} : memref<8x32xf32, #tpu.memory_space<vmem>>, vector<1x32xf32>,
    %c0_153 = arith.constant 0 : index
    %c0_154 = arith.constant 0 : index
    %430 = vector.load %arg22[%c0_153, %c0_154] : memref<8x32xf32, #tpu.memory_space<vmem>>, vector<1x32xf32>
    tpu.vector_store %arg22[%c0_153, %c0_154], %428 {strides = array<i32>} : memref<8x32xf32, #tpu.memory_space<vmem>>, vector<1x32xf32>,
    %c0_155 = arith.constant 0 : index
    %c0_156 = arith.constant 0 : index
    %431 = vector.load %arg21[%c0_155, %c0_156] : memref<8x32xf32, #tpu.memory_space<vmem>>, vector<8x32xf32>
    %c0_157 = arith.constant 0 : index
    %c0_158 = arith.constant 0 : index
    %432 = vector.load %arg22[%c0_157, %c0_158] : memref<8x32xf32, #tpu.memory_space<vmem>>, vector<8x32xf32>
    %433 = tpu.concatenate %431, %432 in 1 : vector<8x32xf32>, vector<8x32xf32> -> vector<8x64xf32>
    %c0_159 = arith.constant 0 : index
    %c0_160 = arith.constant 0 : index
    %434 = vector.load %arg8[%c0_159, %c0_160] : memref<64x96xf32, #tpu.memory_space<vmem>>, vector<64x96xf32>
    %cst_161 = arith.constant dense<0.000000e+00> : vector<8x96xf32>
    %435 = tpu.matmul %433, %434, %cst_161 {dimension_numbers = #tpu.dot_dimension_numbers<[1], [0], [0], [1], [0, 0, 1, 1], [], []>} : vector<8x64xf32>, vector<64x96xf32>, vector<8x96xf32> -> vector<8x96xf32>
    %c0_162 = arith.constant 0 : index
    %c0_163 = arith.constant 0 : index
    %436 = vector.load %arg10[%c0_162, %c0_163] : memref<2x96xf32, #tpu.memory_space<vmem>>, vector<1x96xf32>
    %437 = vector.broadcast %436 : vector<1x96xf32> to vector<8x96xf32>
    %438 = arith.addf %435, %437 : vector<8x96xf32>
    %c0_164 = arith.constant 0 : index
    %c0_165 = arith.constant 0 : index
    %439 = vector.load %arg11[%c0_164, %c0_165] : memref<64x96xf32, #tpu.memory_space<vmem>>, vector<64x96xf32>
    %cst_166 = arith.constant dense<0.000000e+00> : vector<8x96xf32>
    %440 = tpu.matmul %433, %439, %cst_166 {dimension_numbers = #tpu.dot_dimension_numbers<[1], [0], [0], [1], [0, 0, 1, 1], [], []>} : vector<8x64xf32>, vector<64x96xf32>, vector<8x96xf32> -> vector<8x96xf32>
    %c0_167 = arith.constant 0 : index
    %c0_168 = arith.constant 0 : index
    %441 = vector.load %arg13[%c0_167, %c0_168] : memref<2x96xf32, #tpu.memory_space<vmem>>, vector<1x96xf32>
    %442 = vector.broadcast %441 : vector<1x96xf32> to vector<8x96xf32>
    %443 = arith.addf %440, %442 : vector<8x96xf32>
    %c1_169 = arith.constant 1 : index
    %c0_170 = arith.constant 0 : index
    %444 = vector.load %arg10[%c1_169, %c0_170] : memref<2x96xf32, #tpu.memory_space<vmem>>, vector<1x96xf32>
    %c1_171 = arith.constant 1 : index
    %c0_172 = arith.constant 0 : index
    %445 = vector.load %arg13[%c1_171, %c0_172] : memref<2x96xf32, #tpu.memory_space<vmem>>, vector<1x96xf32>
    %c2_173 = arith.constant 2 : index
    %c0_174 = arith.constant 0 : index
    %446 = vector.load %arg1[%c2_173, %c0_174] : memref<4x32xf32, #tpu.memory_space<vmem>>, vector<1x32xf32>
    %c3_175 = arith.constant 3 : index
    %c0_176 = arith.constant 0 : index
    %447 = vector.load %arg1[%c3_175, %c0_176] : memref<4x32xf32, #tpu.memory_space<vmem>>, vector<1x32xf32>
    %c0_177 = arith.constant 0 : index
    %c0_178 = arith.constant 0 : index
    %448 = vector.load %arg9[%c0_177, %c0_178] : memref<32x96xf32, #tpu.memory_space<vmem>>, vector<32x96xf32>
    %cst_179 = arith.constant dense<0.000000e+00> : vector<1x96xf32>
    %449 = tpu.matmul %446, %448, %cst_179 {dimension_numbers = #tpu.dot_dimension_numbers<[1], [0], [0], [1], [0, 0, 1, 1], [], []>} : vector<1x32xf32>, vector<32x96xf32>, vector<1x96xf32> -> vector<1x96xf32>
    %450 = arith.addf %449, %444 : vector<1x96xf32>
    %c0_180 = arith.constant 0 : index
    %c0_181 = arith.constant 0 : index
    %451 = vector.load %arg12[%c0_180, %c0_181] : memref<32x96xf32, #tpu.memory_space<vmem>>, vector<32x96xf32>
    %cst_182 = arith.constant dense<0.000000e+00> : vector<1x96xf32>
    %452 = tpu.matmul %447, %451, %cst_182 {dimension_numbers = #tpu.dot_dimension_numbers<[1], [0], [0], [1], [0, 0, 1, 1], [], []>} : vector<1x32xf32>, vector<32x96xf32>, vector<1x96xf32> -> vector<1x96xf32>
    %453 = arith.addf %452, %445 : vector<1x96xf32>
    %454 = vector.extract_strided_slice %438 {offsets = [0, 0], sizes = [1, 64], strides = [1, 1]} : vector<8x96xf32> to vector<1x64xf32>
    %455 = vector.extract_strided_slice %450 {offsets = [0, 0], sizes = [1, 64], strides = [1, 1]} : vector<1x96xf32> to vector<1x64xf32>
    %456 = arith.addf %454, %455 : vector<1x64xf32>
    %cst_183 = arith.constant 5.000000e-01 : f32
    %457 = vector.broadcast %cst_183 : f32 to vector<1x64xf32>
    %458 = arith.mulf %457, %456 : vector<1x64xf32>
    %459 = math.tanh %458 : vector<1x64xf32>
    %cst_184 = arith.constant 1.000000e+00 : f32
    %460 = vector.broadcast %cst_184 : f32 to vector<1x64xf32>
    %461 = arith.addf %459, %460 : vector<1x64xf32>
    %cst_185 = arith.constant 5.000000e-01 : f32
    %462 = vector.broadcast %cst_185 : f32 to vector<1x64xf32>
    %463 = arith.mulf %462, %461 : vector<1x64xf32>
    %464 = vector.extract_strided_slice %443 {offsets = [7, 0], sizes = [1, 64], strides = [1, 1]} : vector<8x96xf32> to vector<1x64xf32>
    %465 = vector.extract_strided_slice %453 {offsets = [0, 0], sizes = [1, 64], strides = [1, 1]} : vector<1x96xf32> to vector<1x64xf32>
    %466 = arith.addf %464, %465 : vector<1x64xf32>
    %cst_186 = arith.constant 5.000000e-01 : f32
    %467 = vector.broadcast %cst_186 : f32 to vector<1x64xf32>
    %468 = arith.mulf %467, %466 : vector<1x64xf32>
    %469 = math.tanh %468 : vector<1x64xf32>
    %cst_187 = arith.constant 1.000000e+00 : f32
    %470 = vector.broadcast %cst_187 : f32 to vector<1x64xf32>
    %471 = arith.addf %469, %470 : vector<1x64xf32>
    %cst_188 = arith.constant 5.000000e-01 : f32
    %472 = vector.broadcast %cst_188 : f32 to vector<1x64xf32>
    %473 = arith.mulf %472, %471 : vector<1x64xf32>
    %474 = vector.extract_strided_slice %463 {offsets = [0, 0], sizes = [1, 32], strides = [1, 1]} : vector<1x64xf32> to vector<1x32xf32>
    %475 = vector.extract_strided_slice %463 {offsets = [0, 32], sizes = [1, 32], strides = [1, 1]} : vector<1x64xf32> to vector<1x32xf32>
    %476 = vector.extract_strided_slice %473 {offsets = [0, 0], sizes = [1, 32], strides = [1, 1]} : vector<1x64xf32> to vector<1x32xf32>
    %477 = vector.extract_strided_slice %473 {offsets = [0, 32], sizes = [1, 32], strides = [1, 1]} : vector<1x64xf32> to vector<1x32xf32>
    %478 = vector.extract_strided_slice %438 {offsets = [0, 64], sizes = [1, 32], strides = [1, 1]} : vector<8x96xf32> to vector<1x32xf32>
    %479 = vector.extract_strided_slice %450 {offsets = [0, 64], sizes = [1, 32], strides = [1, 1]} : vector<1x96xf32> to vector<1x32xf32>
    %480 = arith.mulf %474, %479 : vector<1x32xf32>
    %481 = arith.addf %478, %480 : vector<1x32xf32>
    %482 = math.tanh %481 : vector<1x32xf32>
    %483 = vector.extract_strided_slice %443 {offsets = [7, 64], sizes = [1, 32], strides = [1, 1]} : vector<8x96xf32> to vector<1x32xf32>
    %484 = vector.extract_strided_slice %453 {offsets = [0, 64], sizes = [1, 32], strides = [1, 1]} : vector<1x96xf32> to vector<1x32xf32>
    %485 = arith.mulf %476, %484 : vector<1x32xf32>
    %486 = arith.addf %483, %485 : vector<1x32xf32>
    %487 = math.tanh %486 : vector<1x32xf32>
    %cst_189 = arith.constant 1.000000e+00 : f32
    %488 = vector.broadcast %cst_189 : f32 to vector<1x32xf32>
    %489 = arith.subf %488, %475 : vector<1x32xf32>
    %490 = arith.mulf %489, %482 : vector<1x32xf32>
    %491 = arith.mulf %475, %446 : vector<1x32xf32>
    %492 = arith.addf %490, %491 : vector<1x32xf32>
    %cst_190 = arith.constant 1.000000e+00 : f32
    %493 = vector.broadcast %cst_190 : f32 to vector<1x32xf32>
    %494 = arith.subf %493, %477 : vector<1x32xf32>
    %495 = arith.mulf %494, %487 : vector<1x32xf32>
    %496 = arith.mulf %477, %447 : vector<1x32xf32>
    %497 = arith.addf %495, %496 : vector<1x32xf32>
    %c0_191 = arith.constant 0 : index
    %c0_192 = arith.constant 0 : index
    %498 = vector.load %arg9[%c0_191, %c0_192] : memref<32x96xf32, #tpu.memory_space<vmem>>, vector<32x96xf32>
    %cst_193 = arith.constant dense<0.000000e+00> : vector<1x96xf32>
    %499 = tpu.matmul %492, %498, %cst_193 {dimension_numbers = #tpu.dot_dimension_numbers<[1], [0], [0], [1], [0, 0, 1, 1], [], []>} : vector<1x32xf32>, vector<32x96xf32>, vector<1x96xf32> -> vector<1x96xf32>
    %500 = arith.addf %499, %444 : vector<1x96xf32>
    %c0_194 = arith.constant 0 : index
    %c0_195 = arith.constant 0 : index
    %501 = vector.load %arg12[%c0_194, %c0_195] : memref<32x96xf32, #tpu.memory_space<vmem>>, vector<32x96xf32>
    %cst_196 = arith.constant dense<0.000000e+00> : vector<1x96xf32>
    %502 = tpu.matmul %497, %501, %cst_196 {dimension_numbers = #tpu.dot_dimension_numbers<[1], [0], [0], [1], [0, 0, 1, 1], [], []>} : vector<1x32xf32>, vector<32x96xf32>, vector<1x96xf32> -> vector<1x96xf32>
    %503 = arith.addf %502, %445 : vector<1x96xf32>
    %504 = vector.extract_strided_slice %438 {offsets = [1, 0], sizes = [1, 64], strides = [1, 1]} : vector<8x96xf32> to vector<1x64xf32>
    %505 = vector.extract_strided_slice %500 {offsets = [0, 0], sizes = [1, 64], strides = [1, 1]} : vector<1x96xf32> to vector<1x64xf32>
    %506 = arith.addf %504, %505 : vector<1x64xf32>
    %cst_197 = arith.constant 5.000000e-01 : f32
    %507 = vector.broadcast %cst_197 : f32 to vector<1x64xf32>
    %508 = arith.mulf %507, %506 : vector<1x64xf32>
    %509 = math.tanh %508 : vector<1x64xf32>
    %cst_198 = arith.constant 1.000000e+00 : f32
    %510 = vector.broadcast %cst_198 : f32 to vector<1x64xf32>
    %511 = arith.addf %509, %510 : vector<1x64xf32>
    %cst_199 = arith.constant 5.000000e-01 : f32
    %512 = vector.broadcast %cst_199 : f32 to vector<1x64xf32>
    %513 = arith.mulf %512, %511 : vector<1x64xf32>
    %514 = vector.extract_strided_slice %443 {offsets = [6, 0], sizes = [1, 64], strides = [1, 1]} : vector<8x96xf32> to vector<1x64xf32>
    %515 = vector.extract_strided_slice %503 {offsets = [0, 0], sizes = [1, 64], strides = [1, 1]} : vector<1x96xf32> to vector<1x64xf32>
    %516 = arith.addf %514, %515 : vector<1x64xf32>
    %cst_200 = arith.constant 5.000000e-01 : f32
    %517 = vector.broadcast %cst_200 : f32 to vector<1x64xf32>
    %518 = arith.mulf %517, %516 : vector<1x64xf32>
    %519 = math.tanh %518 : vector<1x64xf32>
    %cst_201 = arith.constant 1.000000e+00 : f32
    %520 = vector.broadcast %cst_201 : f32 to vector<1x64xf32>
    %521 = arith.addf %519, %520 : vector<1x64xf32>
    %cst_202 = arith.constant 5.000000e-01 : f32
    %522 = vector.broadcast %cst_202 : f32 to vector<1x64xf32>
    %523 = arith.mulf %522, %521 : vector<1x64xf32>
    %524 = vector.extract_strided_slice %513 {offsets = [0, 0], sizes = [1, 32], strides = [1, 1]} : vector<1x64xf32> to vector<1x32xf32>
    %525 = vector.extract_strided_slice %513 {offsets = [0, 32], sizes = [1, 32], strides = [1, 1]} : vector<1x64xf32> to vector<1x32xf32>
    %526 = vector.extract_strided_slice %523 {offsets = [0, 0], sizes = [1, 32], strides = [1, 1]} : vector<1x64xf32> to vector<1x32xf32>
    %527 = vector.extract_strided_slice %523 {offsets = [0, 32], sizes = [1, 32], strides = [1, 1]} : vector<1x64xf32> to vector<1x32xf32>
    %528 = vector.extract_strided_slice %438 {offsets = [1, 64], sizes = [1, 32], strides = [1, 1]} : vector<8x96xf32> to vector<1x32xf32>
    %529 = vector.extract_strided_slice %500 {offsets = [0, 64], sizes = [1, 32], strides = [1, 1]} : vector<1x96xf32> to vector<1x32xf32>
    %530 = arith.mulf %524, %529 : vector<1x32xf32>
    %531 = arith.addf %528, %530 : vector<1x32xf32>
    %532 = math.tanh %531 : vector<1x32xf32>
    %533 = vector.extract_strided_slice %443 {offsets = [6, 64], sizes = [1, 32], strides = [1, 1]} : vector<8x96xf32> to vector<1x32xf32>
    %534 = vector.extract_strided_slice %503 {offsets = [0, 64], sizes = [1, 32], strides = [1, 1]} : vector<1x96xf32> to vector<1x32xf32>
    %535 = arith.mulf %526, %534 : vector<1x32xf32>
    %536 = arith.addf %533, %535 : vector<1x32xf32>
    %537 = math.tanh %536 : vector<1x32xf32>
    %cst_203 = arith.constant 1.000000e+00 : f32
    %538 = vector.broadcast %cst_203 : f32 to vector<1x32xf32>
    %539 = arith.subf %538, %525 : vector<1x32xf32>
    %540 = arith.mulf %539, %532 : vector<1x32xf32>
    %541 = arith.mulf %525, %492 : vector<1x32xf32>
    %542 = arith.addf %540, %541 : vector<1x32xf32>
    %cst_204 = arith.constant 1.000000e+00 : f32
    %543 = vector.broadcast %cst_204 : f32 to vector<1x32xf32>
    %544 = arith.subf %543, %527 : vector<1x32xf32>
    %545 = arith.mulf %544, %537 : vector<1x32xf32>
    %546 = arith.mulf %527, %497 : vector<1x32xf32>
    %547 = arith.addf %545, %546 : vector<1x32xf32>
    %c0_205 = arith.constant 0 : index
    %c0_206 = arith.constant 0 : index
    %548 = vector.load %arg9[%c0_205, %c0_206] : memref<32x96xf32, #tpu.memory_space<vmem>>, vector<32x96xf32>
    %cst_207 = arith.constant dense<0.000000e+00> : vector<1x96xf32>
    %549 = tpu.matmul %542, %548, %cst_207 {dimension_numbers = #tpu.dot_dimension_numbers<[1], [0], [0], [1], [0, 0, 1, 1], [], []>} : vector<1x32xf32>, vector<32x96xf32>, vector<1x96xf32> -> vector<1x96xf32>
    %550 = arith.addf %549, %444 : vector<1x96xf32>
    %c0_208 = arith.constant 0 : index
    %c0_209 = arith.constant 0 : index
    %551 = vector.load %arg12[%c0_208, %c0_209] : memref<32x96xf32, #tpu.memory_space<vmem>>, vector<32x96xf32>
    %cst_210 = arith.constant dense<0.000000e+00> : vector<1x96xf32>
    %552 = tpu.matmul %547, %551, %cst_210 {dimension_numbers = #tpu.dot_dimension_numbers<[1], [0], [0], [1], [0, 0, 1, 1], [], []>} : vector<1x32xf32>, vector<32x96xf32>, vector<1x96xf32> -> vector<1x96xf32>
    %553 = arith.addf %552, %445 : vector<1x96xf32>
    %554 = vector.extract_strided_slice %438 {offsets = [2, 0], sizes = [1, 64], strides = [1, 1]} : vector<8x96xf32> to vector<1x64xf32>
    %555 = vector.extract_strided_slice %550 {offsets = [0, 0], sizes = [1, 64], strides = [1, 1]} : vector<1x96xf32> to vector<1x64xf32>
    %556 = arith.addf %554, %555 : vector<1x64xf32>
    %cst_211 = arith.constant 5.000000e-01 : f32
    %557 = vector.broadcast %cst_211 : f32 to vector<1x64xf32>
    %558 = arith.mulf %557, %556 : vector<1x64xf32>
    %559 = math.tanh %558 : vector<1x64xf32>
    %cst_212 = arith.constant 1.000000e+00 : f32
    %560 = vector.broadcast %cst_212 : f32 to vector<1x64xf32>
    %561 = arith.addf %559, %560 : vector<1x64xf32>
    %cst_213 = arith.constant 5.000000e-01 : f32
    %562 = vector.broadcast %cst_213 : f32 to vector<1x64xf32>
    %563 = arith.mulf %562, %561 : vector<1x64xf32>
    %564 = vector.extract_strided_slice %443 {offsets = [5, 0], sizes = [1, 64], strides = [1, 1]} : vector<8x96xf32> to vector<1x64xf32>
    %565 = vector.extract_strided_slice %553 {offsets = [0, 0], sizes = [1, 64], strides = [1, 1]} : vector<1x96xf32> to vector<1x64xf32>
    %566 = arith.addf %564, %565 : vector<1x64xf32>
    %cst_214 = arith.constant 5.000000e-01 : f32
    %567 = vector.broadcast %cst_214 : f32 to vector<1x64xf32>
    %568 = arith.mulf %567, %566 : vector<1x64xf32>
    %569 = math.tanh %568 : vector<1x64xf32>
    %cst_215 = arith.constant 1.000000e+00 : f32
    %570 = vector.broadcast %cst_215 : f32 to vector<1x64xf32>
    %571 = arith.addf %569, %570 : vector<1x64xf32>
    %cst_216 = arith.constant 5.000000e-01 : f32
    %572 = vector.broadcast %cst_216 : f32 to vector<1x64xf32>
    %573 = arith.mulf %572, %571 : vector<1x64xf32>
    %574 = vector.extract_strided_slice %563 {offsets = [0, 0], sizes = [1, 32], strides = [1, 1]} : vector<1x64xf32> to vector<1x32xf32>
    %575 = vector.extract_strided_slice %563 {offsets = [0, 32], sizes = [1, 32], strides = [1, 1]} : vector<1x64xf32> to vector<1x32xf32>
    %576 = vector.extract_strided_slice %573 {offsets = [0, 0], sizes = [1, 32], strides = [1, 1]} : vector<1x64xf32> to vector<1x32xf32>
    %577 = vector.extract_strided_slice %573 {offsets = [0, 32], sizes = [1, 32], strides = [1, 1]} : vector<1x64xf32> to vector<1x32xf32>
    %578 = vector.extract_strided_slice %438 {offsets = [2, 64], sizes = [1, 32], strides = [1, 1]} : vector<8x96xf32> to vector<1x32xf32>
    %579 = vector.extract_strided_slice %550 {offsets = [0, 64], sizes = [1, 32], strides = [1, 1]} : vector<1x96xf32> to vector<1x32xf32>
    %580 = arith.mulf %574, %579 : vector<1x32xf32>
    %581 = arith.addf %578, %580 : vector<1x32xf32>
    %582 = math.tanh %581 : vector<1x32xf32>
    %583 = vector.extract_strided_slice %443 {offsets = [5, 64], sizes = [1, 32], strides = [1, 1]} : vector<8x96xf32> to vector<1x32xf32>
    %584 = vector.extract_strided_slice %553 {offsets = [0, 64], sizes = [1, 32], strides = [1, 1]} : vector<1x96xf32> to vector<1x32xf32>
    %585 = arith.mulf %576, %584 : vector<1x32xf32>
    %586 = arith.addf %583, %585 : vector<1x32xf32>
    %587 = math.tanh %586 : vector<1x32xf32>
    %cst_217 = arith.constant 1.000000e+00 : f32
    %588 = vector.broadcast %cst_217 : f32 to vector<1x32xf32>
    %589 = arith.subf %588, %575 : vector<1x32xf32>
    %590 = arith.mulf %589, %582 : vector<1x32xf32>
    %591 = arith.mulf %575, %542 : vector<1x32xf32>
    %592 = arith.addf %590, %591 : vector<1x32xf32>
    %cst_218 = arith.constant 1.000000e+00 : f32
    %593 = vector.broadcast %cst_218 : f32 to vector<1x32xf32>
    %594 = arith.subf %593, %577 : vector<1x32xf32>
    %595 = arith.mulf %594, %587 : vector<1x32xf32>
    %596 = arith.mulf %577, %547 : vector<1x32xf32>
    %597 = arith.addf %595, %596 : vector<1x32xf32>
    %c0_219 = arith.constant 0 : index
    %c0_220 = arith.constant 0 : index
    %598 = vector.load %arg9[%c0_219, %c0_220] : memref<32x96xf32, #tpu.memory_space<vmem>>, vector<32x96xf32>
    %cst_221 = arith.constant dense<0.000000e+00> : vector<1x96xf32>
    %599 = tpu.matmul %592, %598, %cst_221 {dimension_numbers = #tpu.dot_dimension_numbers<[1], [0], [0], [1], [0, 0, 1, 1], [], []>} : vector<1x32xf32>, vector<32x96xf32>, vector<1x96xf32> -> vector<1x96xf32>
    %600 = arith.addf %599, %444 : vector<1x96xf32>
    %c0_222 = arith.constant 0 : index
    %c0_223 = arith.constant 0 : index
    %601 = vector.load %arg12[%c0_222, %c0_223] : memref<32x96xf32, #tpu.memory_space<vmem>>, vector<32x96xf32>
    %cst_224 = arith.constant dense<0.000000e+00> : vector<1x96xf32>
    %602 = tpu.matmul %597, %601, %cst_224 {dimension_numbers = #tpu.dot_dimension_numbers<[1], [0], [0], [1], [0, 0, 1, 1], [], []>} : vector<1x32xf32>, vector<32x96xf32>, vector<1x96xf32> -> vector<1x96xf32>
    %603 = arith.addf %602, %445 : vector<1x96xf32>
    %604 = vector.extract_strided_slice %438 {offsets = [3, 0], sizes = [1, 64], strides = [1, 1]} : vector<8x96xf32> to vector<1x64xf32>
    %605 = vector.extract_strided_slice %600 {offsets = [0, 0], sizes = [1, 64], strides = [1, 1]} : vector<1x96xf32> to vector<1x64xf32>
    %606 = arith.addf %604, %605 : vector<1x64xf32>
    %cst_225 = arith.constant 5.000000e-01 : f32
    %607 = vector.broadcast %cst_225 : f32 to vector<1x64xf32>
    %608 = arith.mulf %607, %606 : vector<1x64xf32>
    %609 = math.tanh %608 : vector<1x64xf32>
    %cst_226 = arith.constant 1.000000e+00 : f32
    %610 = vector.broadcast %cst_226 : f32 to vector<1x64xf32>
    %611 = arith.addf %609, %610 : vector<1x64xf32>
    %cst_227 = arith.constant 5.000000e-01 : f32
    %612 = vector.broadcast %cst_227 : f32 to vector<1x64xf32>
    %613 = arith.mulf %612, %611 : vector<1x64xf32>
    %614 = vector.extract_strided_slice %443 {offsets = [4, 0], sizes = [1, 64], strides = [1, 1]} : vector<8x96xf32> to vector<1x64xf32>
    %615 = vector.extract_strided_slice %603 {offsets = [0, 0], sizes = [1, 64], strides = [1, 1]} : vector<1x96xf32> to vector<1x64xf32>
    %616 = arith.addf %614, %615 : vector<1x64xf32>
    %cst_228 = arith.constant 5.000000e-01 : f32
    %617 = vector.broadcast %cst_228 : f32 to vector<1x64xf32>
    %618 = arith.mulf %617, %616 : vector<1x64xf32>
    %619 = math.tanh %618 : vector<1x64xf32>
    %cst_229 = arith.constant 1.000000e+00 : f32
    %620 = vector.broadcast %cst_229 : f32 to vector<1x64xf32>
    %621 = arith.addf %619, %620 : vector<1x64xf32>
    %cst_230 = arith.constant 5.000000e-01 : f32
    %622 = vector.broadcast %cst_230 : f32 to vector<1x64xf32>
    %623 = arith.mulf %622, %621 : vector<1x64xf32>
    %624 = vector.extract_strided_slice %613 {offsets = [0, 0], sizes = [1, 32], strides = [1, 1]} : vector<1x64xf32> to vector<1x32xf32>
    %625 = vector.extract_strided_slice %613 {offsets = [0, 32], sizes = [1, 32], strides = [1, 1]} : vector<1x64xf32> to vector<1x32xf32>
    %626 = vector.extract_strided_slice %623 {offsets = [0, 0], sizes = [1, 32], strides = [1, 1]} : vector<1x64xf32> to vector<1x32xf32>
    %627 = vector.extract_strided_slice %623 {offsets = [0, 32], sizes = [1, 32], strides = [1, 1]} : vector<1x64xf32> to vector<1x32xf32>
    %628 = vector.extract_strided_slice %438 {offsets = [3, 64], sizes = [1, 32], strides = [1, 1]} : vector<8x96xf32> to vector<1x32xf32>
    %629 = vector.extract_strided_slice %600 {offsets = [0, 64], sizes = [1, 32], strides = [1, 1]} : vector<1x96xf32> to vector<1x32xf32>
    %630 = arith.mulf %624, %629 : vector<1x32xf32>
    %631 = arith.addf %628, %630 : vector<1x32xf32>
    %632 = math.tanh %631 : vector<1x32xf32>
    %633 = vector.extract_strided_slice %443 {offsets = [4, 64], sizes = [1, 32], strides = [1, 1]} : vector<8x96xf32> to vector<1x32xf32>
    %634 = vector.extract_strided_slice %603 {offsets = [0, 64], sizes = [1, 32], strides = [1, 1]} : vector<1x96xf32> to vector<1x32xf32>
    %635 = arith.mulf %626, %634 : vector<1x32xf32>
    %636 = arith.addf %633, %635 : vector<1x32xf32>
    %637 = math.tanh %636 : vector<1x32xf32>
    %cst_231 = arith.constant 1.000000e+00 : f32
    %638 = vector.broadcast %cst_231 : f32 to vector<1x32xf32>
    %639 = arith.subf %638, %625 : vector<1x32xf32>
    %640 = arith.mulf %639, %632 : vector<1x32xf32>
    %641 = arith.mulf %625, %592 : vector<1x32xf32>
    %642 = arith.addf %640, %641 : vector<1x32xf32>
    %cst_232 = arith.constant 1.000000e+00 : f32
    %643 = vector.broadcast %cst_232 : f32 to vector<1x32xf32>
    %644 = arith.subf %643, %627 : vector<1x32xf32>
    %645 = arith.mulf %644, %637 : vector<1x32xf32>
    %646 = arith.mulf %627, %597 : vector<1x32xf32>
    %647 = arith.addf %645, %646 : vector<1x32xf32>
    %c0_233 = arith.constant 0 : index
    %c0_234 = arith.constant 0 : index
    %648 = vector.load %arg9[%c0_233, %c0_234] : memref<32x96xf32, #tpu.memory_space<vmem>>, vector<32x96xf32>
    %cst_235 = arith.constant dense<0.000000e+00> : vector<1x96xf32>
    %649 = tpu.matmul %642, %648, %cst_235 {dimension_numbers = #tpu.dot_dimension_numbers<[1], [0], [0], [1], [0, 0, 1, 1], [], []>} : vector<1x32xf32>, vector<32x96xf32>, vector<1x96xf32> -> vector<1x96xf32>
    %650 = arith.addf %649, %444 : vector<1x96xf32>
    %c0_236 = arith.constant 0 : index
    %c0_237 = arith.constant 0 : index
    %651 = vector.load %arg12[%c0_236, %c0_237] : memref<32x96xf32, #tpu.memory_space<vmem>>, vector<32x96xf32>
    %cst_238 = arith.constant dense<0.000000e+00> : vector<1x96xf32>
    %652 = tpu.matmul %647, %651, %cst_238 {dimension_numbers = #tpu.dot_dimension_numbers<[1], [0], [0], [1], [0, 0, 1, 1], [], []>} : vector<1x32xf32>, vector<32x96xf32>, vector<1x96xf32> -> vector<1x96xf32>
    %653 = arith.addf %652, %445 : vector<1x96xf32>
    %654 = vector.extract_strided_slice %438 {offsets = [4, 0], sizes = [1, 64], strides = [1, 1]} : vector<8x96xf32> to vector<1x64xf32>
    %655 = vector.extract_strided_slice %650 {offsets = [0, 0], sizes = [1, 64], strides = [1, 1]} : vector<1x96xf32> to vector<1x64xf32>
    %656 = arith.addf %654, %655 : vector<1x64xf32>
    %cst_239 = arith.constant 5.000000e-01 : f32
    %657 = vector.broadcast %cst_239 : f32 to vector<1x64xf32>
    %658 = arith.mulf %657, %656 : vector<1x64xf32>
    %659 = math.tanh %658 : vector<1x64xf32>
    %cst_240 = arith.constant 1.000000e+00 : f32
    %660 = vector.broadcast %cst_240 : f32 to vector<1x64xf32>
    %661 = arith.addf %659, %660 : vector<1x64xf32>
    %cst_241 = arith.constant 5.000000e-01 : f32
    %662 = vector.broadcast %cst_241 : f32 to vector<1x64xf32>
    %663 = arith.mulf %662, %661 : vector<1x64xf32>
    %664 = vector.extract_strided_slice %443 {offsets = [3, 0], sizes = [1, 64], strides = [1, 1]} : vector<8x96xf32> to vector<1x64xf32>
    %665 = vector.extract_strided_slice %653 {offsets = [0, 0], sizes = [1, 64], strides = [1, 1]} : vector<1x96xf32> to vector<1x64xf32>
    %666 = arith.addf %664, %665 : vector<1x64xf32>
    %cst_242 = arith.constant 5.000000e-01 : f32
    %667 = vector.broadcast %cst_242 : f32 to vector<1x64xf32>
    %668 = arith.mulf %667, %666 : vector<1x64xf32>
    %669 = math.tanh %668 : vector<1x64xf32>
    %cst_243 = arith.constant 1.000000e+00 : f32
    %670 = vector.broadcast %cst_243 : f32 to vector<1x64xf32>
    %671 = arith.addf %669, %670 : vector<1x64xf32>
    %cst_244 = arith.constant 5.000000e-01 : f32
    %672 = vector.broadcast %cst_244 : f32 to vector<1x64xf32>
    %673 = arith.mulf %672, %671 : vector<1x64xf32>
    %674 = vector.extract_strided_slice %663 {offsets = [0, 0], sizes = [1, 32], strides = [1, 1]} : vector<1x64xf32> to vector<1x32xf32>
    %675 = vector.extract_strided_slice %663 {offsets = [0, 32], sizes = [1, 32], strides = [1, 1]} : vector<1x64xf32> to vector<1x32xf32>
    %676 = vector.extract_strided_slice %673 {offsets = [0, 0], sizes = [1, 32], strides = [1, 1]} : vector<1x64xf32> to vector<1x32xf32>
    %677 = vector.extract_strided_slice %673 {offsets = [0, 32], sizes = [1, 32], strides = [1, 1]} : vector<1x64xf32> to vector<1x32xf32>
    %678 = vector.extract_strided_slice %438 {offsets = [4, 64], sizes = [1, 32], strides = [1, 1]} : vector<8x96xf32> to vector<1x32xf32>
    %679 = vector.extract_strided_slice %650 {offsets = [0, 64], sizes = [1, 32], strides = [1, 1]} : vector<1x96xf32> to vector<1x32xf32>
    %680 = arith.mulf %674, %679 : vector<1x32xf32>
    %681 = arith.addf %678, %680 : vector<1x32xf32>
    %682 = math.tanh %681 : vector<1x32xf32>
    %683 = vector.extract_strided_slice %443 {offsets = [3, 64], sizes = [1, 32], strides = [1, 1]} : vector<8x96xf32> to vector<1x32xf32>
    %684 = vector.extract_strided_slice %653 {offsets = [0, 64], sizes = [1, 32], strides = [1, 1]} : vector<1x96xf32> to vector<1x32xf32>
    %685 = arith.mulf %676, %684 : vector<1x32xf32>
    %686 = arith.addf %683, %685 : vector<1x32xf32>
    %687 = math.tanh %686 : vector<1x32xf32>
    %cst_245 = arith.constant 1.000000e+00 : f32
    %688 = vector.broadcast %cst_245 : f32 to vector<1x32xf32>
    %689 = arith.subf %688, %675 : vector<1x32xf32>
    %690 = arith.mulf %689, %682 : vector<1x32xf32>
    %691 = arith.mulf %675, %642 : vector<1x32xf32>
    %692 = arith.addf %690, %691 : vector<1x32xf32>
    %cst_246 = arith.constant 1.000000e+00 : f32
    %693 = vector.broadcast %cst_246 : f32 to vector<1x32xf32>
    %694 = arith.subf %693, %677 : vector<1x32xf32>
    %695 = arith.mulf %694, %687 : vector<1x32xf32>
    %696 = arith.mulf %677, %647 : vector<1x32xf32>
    %697 = arith.addf %695, %696 : vector<1x32xf32>
    %c0_247 = arith.constant 0 : index
    %c0_248 = arith.constant 0 : index
    %698 = vector.load %arg9[%c0_247, %c0_248] : memref<32x96xf32, #tpu.memory_space<vmem>>, vector<32x96xf32>
    %cst_249 = arith.constant dense<0.000000e+00> : vector<1x96xf32>
    %699 = tpu.matmul %692, %698, %cst_249 {dimension_numbers = #tpu.dot_dimension_numbers<[1], [0], [0], [1], [0, 0, 1, 1], [], []>} : vector<1x32xf32>, vector<32x96xf32>, vector<1x96xf32> -> vector<1x96xf32>
    %700 = arith.addf %699, %444 : vector<1x96xf32>
    %c0_250 = arith.constant 0 : index
    %c0_251 = arith.constant 0 : index
    %701 = vector.load %arg12[%c0_250, %c0_251] : memref<32x96xf32, #tpu.memory_space<vmem>>, vector<32x96xf32>
    %cst_252 = arith.constant dense<0.000000e+00> : vector<1x96xf32>
    %702 = tpu.matmul %697, %701, %cst_252 {dimension_numbers = #tpu.dot_dimension_numbers<[1], [0], [0], [1], [0, 0, 1, 1], [], []>} : vector<1x32xf32>, vector<32x96xf32>, vector<1x96xf32> -> vector<1x96xf32>
    %703 = arith.addf %702, %445 : vector<1x96xf32>
    %704 = vector.extract_strided_slice %438 {offsets = [5, 0], sizes = [1, 64], strides = [1, 1]} : vector<8x96xf32> to vector<1x64xf32>
    %705 = vector.extract_strided_slice %700 {offsets = [0, 0], sizes = [1, 64], strides = [1, 1]} : vector<1x96xf32> to vector<1x64xf32>
    %706 = arith.addf %704, %705 : vector<1x64xf32>
    %cst_253 = arith.constant 5.000000e-01 : f32
    %707 = vector.broadcast %cst_253 : f32 to vector<1x64xf32>
    %708 = arith.mulf %707, %706 : vector<1x64xf32>
    %709 = math.tanh %708 : vector<1x64xf32>
    %cst_254 = arith.constant 1.000000e+00 : f32
    %710 = vector.broadcast %cst_254 : f32 to vector<1x64xf32>
    %711 = arith.addf %709, %710 : vector<1x64xf32>
    %cst_255 = arith.constant 5.000000e-01 : f32
    %712 = vector.broadcast %cst_255 : f32 to vector<1x64xf32>
    %713 = arith.mulf %712, %711 : vector<1x64xf32>
    %714 = vector.extract_strided_slice %443 {offsets = [2, 0], sizes = [1, 64], strides = [1, 1]} : vector<8x96xf32> to vector<1x64xf32>
    %715 = vector.extract_strided_slice %703 {offsets = [0, 0], sizes = [1, 64], strides = [1, 1]} : vector<1x96xf32> to vector<1x64xf32>
    %716 = arith.addf %714, %715 : vector<1x64xf32>
    %cst_256 = arith.constant 5.000000e-01 : f32
    %717 = vector.broadcast %cst_256 : f32 to vector<1x64xf32>
    %718 = arith.mulf %717, %716 : vector<1x64xf32>
    %719 = math.tanh %718 : vector<1x64xf32>
    %cst_257 = arith.constant 1.000000e+00 : f32
    %720 = vector.broadcast %cst_257 : f32 to vector<1x64xf32>
    %721 = arith.addf %719, %720 : vector<1x64xf32>
    %cst_258 = arith.constant 5.000000e-01 : f32
    %722 = vector.broadcast %cst_258 : f32 to vector<1x64xf32>
    %723 = arith.mulf %722, %721 : vector<1x64xf32>
    %724 = vector.extract_strided_slice %713 {offsets = [0, 0], sizes = [1, 32], strides = [1, 1]} : vector<1x64xf32> to vector<1x32xf32>
    %725 = vector.extract_strided_slice %713 {offsets = [0, 32], sizes = [1, 32], strides = [1, 1]} : vector<1x64xf32> to vector<1x32xf32>
    %726 = vector.extract_strided_slice %723 {offsets = [0, 0], sizes = [1, 32], strides = [1, 1]} : vector<1x64xf32> to vector<1x32xf32>
    %727 = vector.extract_strided_slice %723 {offsets = [0, 32], sizes = [1, 32], strides = [1, 1]} : vector<1x64xf32> to vector<1x32xf32>
    %728 = vector.extract_strided_slice %438 {offsets = [5, 64], sizes = [1, 32], strides = [1, 1]} : vector<8x96xf32> to vector<1x32xf32>
    %729 = vector.extract_strided_slice %700 {offsets = [0, 64], sizes = [1, 32], strides = [1, 1]} : vector<1x96xf32> to vector<1x32xf32>
    %730 = arith.mulf %724, %729 : vector<1x32xf32>
    %731 = arith.addf %728, %730 : vector<1x32xf32>
    %732 = math.tanh %731 : vector<1x32xf32>
    %733 = vector.extract_strided_slice %443 {offsets = [2, 64], sizes = [1, 32], strides = [1, 1]} : vector<8x96xf32> to vector<1x32xf32>
    %734 = vector.extract_strided_slice %703 {offsets = [0, 64], sizes = [1, 32], strides = [1, 1]} : vector<1x96xf32> to vector<1x32xf32>
    %735 = arith.mulf %726, %734 : vector<1x32xf32>
    %736 = arith.addf %733, %735 : vector<1x32xf32>
    %737 = math.tanh %736 : vector<1x32xf32>
    %cst_259 = arith.constant 1.000000e+00 : f32
    %738 = vector.broadcast %cst_259 : f32 to vector<1x32xf32>
    %739 = arith.subf %738, %725 : vector<1x32xf32>
    %740 = arith.mulf %739, %732 : vector<1x32xf32>
    %741 = arith.mulf %725, %692 : vector<1x32xf32>
    %742 = arith.addf %740, %741 : vector<1x32xf32>
    %cst_260 = arith.constant 1.000000e+00 : f32
    %743 = vector.broadcast %cst_260 : f32 to vector<1x32xf32>
    %744 = arith.subf %743, %727 : vector<1x32xf32>
    %745 = arith.mulf %744, %737 : vector<1x32xf32>
    %746 = arith.mulf %727, %697 : vector<1x32xf32>
    %747 = arith.addf %745, %746 : vector<1x32xf32>
    %c0_261 = arith.constant 0 : index
    %c0_262 = arith.constant 0 : index
    %748 = vector.load %arg9[%c0_261, %c0_262] : memref<32x96xf32, #tpu.memory_space<vmem>>, vector<32x96xf32>
    %cst_263 = arith.constant dense<0.000000e+00> : vector<1x96xf32>
    %749 = tpu.matmul %742, %748, %cst_263 {dimension_numbers = #tpu.dot_dimension_numbers<[1], [0], [0], [1], [0, 0, 1, 1], [], []>} : vector<1x32xf32>, vector<32x96xf32>, vector<1x96xf32> -> vector<1x96xf32>
    %750 = arith.addf %749, %444 : vector<1x96xf32>
    %c0_264 = arith.constant 0 : index
    %c0_265 = arith.constant 0 : index
    %751 = vector.load %arg12[%c0_264, %c0_265] : memref<32x96xf32, #tpu.memory_space<vmem>>, vector<32x96xf32>
    %cst_266 = arith.constant dense<0.000000e+00> : vector<1x96xf32>
    %752 = tpu.matmul %747, %751, %cst_266 {dimension_numbers = #tpu.dot_dimension_numbers<[1], [0], [0], [1], [0, 0, 1, 1], [], []>} : vector<1x32xf32>, vector<32x96xf32>, vector<1x96xf32> -> vector<1x96xf32>
    %753 = arith.addf %752, %445 : vector<1x96xf32>
    %754 = vector.extract_strided_slice %438 {offsets = [6, 0], sizes = [1, 64], strides = [1, 1]} : vector<8x96xf32> to vector<1x64xf32>
    %755 = vector.extract_strided_slice %750 {offsets = [0, 0], sizes = [1, 64], strides = [1, 1]} : vector<1x96xf32> to vector<1x64xf32>
    %756 = arith.addf %754, %755 : vector<1x64xf32>
    %cst_267 = arith.constant 5.000000e-01 : f32
    %757 = vector.broadcast %cst_267 : f32 to vector<1x64xf32>
    %758 = arith.mulf %757, %756 : vector<1x64xf32>
    %759 = math.tanh %758 : vector<1x64xf32>
    %cst_268 = arith.constant 1.000000e+00 : f32
    %760 = vector.broadcast %cst_268 : f32 to vector<1x64xf32>
    %761 = arith.addf %759, %760 : vector<1x64xf32>
    %cst_269 = arith.constant 5.000000e-01 : f32
    %762 = vector.broadcast %cst_269 : f32 to vector<1x64xf32>
    %763 = arith.mulf %762, %761 : vector<1x64xf32>
    %764 = vector.extract_strided_slice %443 {offsets = [1, 0], sizes = [1, 64], strides = [1, 1]} : vector<8x96xf32> to vector<1x64xf32>
    %765 = vector.extract_strided_slice %753 {offsets = [0, 0], sizes = [1, 64], strides = [1, 1]} : vector<1x96xf32> to vector<1x64xf32>
    %766 = arith.addf %764, %765 : vector<1x64xf32>
    %cst_270 = arith.constant 5.000000e-01 : f32
    %767 = vector.broadcast %cst_270 : f32 to vector<1x64xf32>
    %768 = arith.mulf %767, %766 : vector<1x64xf32>
    %769 = math.tanh %768 : vector<1x64xf32>
    %cst_271 = arith.constant 1.000000e+00 : f32
    %770 = vector.broadcast %cst_271 : f32 to vector<1x64xf32>
    %771 = arith.addf %769, %770 : vector<1x64xf32>
    %cst_272 = arith.constant 5.000000e-01 : f32
    %772 = vector.broadcast %cst_272 : f32 to vector<1x64xf32>
    %773 = arith.mulf %772, %771 : vector<1x64xf32>
    %774 = vector.extract_strided_slice %763 {offsets = [0, 0], sizes = [1, 32], strides = [1, 1]} : vector<1x64xf32> to vector<1x32xf32>
    %775 = vector.extract_strided_slice %763 {offsets = [0, 32], sizes = [1, 32], strides = [1, 1]} : vector<1x64xf32> to vector<1x32xf32>
    %776 = vector.extract_strided_slice %773 {offsets = [0, 0], sizes = [1, 32], strides = [1, 1]} : vector<1x64xf32> to vector<1x32xf32>
    %777 = vector.extract_strided_slice %773 {offsets = [0, 32], sizes = [1, 32], strides = [1, 1]} : vector<1x64xf32> to vector<1x32xf32>
    %778 = vector.extract_strided_slice %438 {offsets = [6, 64], sizes = [1, 32], strides = [1, 1]} : vector<8x96xf32> to vector<1x32xf32>
    %779 = vector.extract_strided_slice %750 {offsets = [0, 64], sizes = [1, 32], strides = [1, 1]} : vector<1x96xf32> to vector<1x32xf32>
    %780 = arith.mulf %774, %779 : vector<1x32xf32>
    %781 = arith.addf %778, %780 : vector<1x32xf32>
    %782 = math.tanh %781 : vector<1x32xf32>
    %783 = vector.extract_strided_slice %443 {offsets = [1, 64], sizes = [1, 32], strides = [1, 1]} : vector<8x96xf32> to vector<1x32xf32>
    %784 = vector.extract_strided_slice %753 {offsets = [0, 64], sizes = [1, 32], strides = [1, 1]} : vector<1x96xf32> to vector<1x32xf32>
    %785 = arith.mulf %776, %784 : vector<1x32xf32>
    %786 = arith.addf %783, %785 : vector<1x32xf32>
    %787 = math.tanh %786 : vector<1x32xf32>
    %cst_273 = arith.constant 1.000000e+00 : f32
    %788 = vector.broadcast %cst_273 : f32 to vector<1x32xf32>
    %789 = arith.subf %788, %775 : vector<1x32xf32>
    %790 = arith.mulf %789, %782 : vector<1x32xf32>
    %791 = arith.mulf %775, %742 : vector<1x32xf32>
    %792 = arith.addf %790, %791 : vector<1x32xf32>
    %cst_274 = arith.constant 1.000000e+00 : f32
    %793 = vector.broadcast %cst_274 : f32 to vector<1x32xf32>
    %794 = arith.subf %793, %777 : vector<1x32xf32>
    %795 = arith.mulf %794, %787 : vector<1x32xf32>
    %796 = arith.mulf %777, %747 : vector<1x32xf32>
    %797 = arith.addf %795, %796 : vector<1x32xf32>
    %c0_275 = arith.constant 0 : index
    %c0_276 = arith.constant 0 : index
    %798 = vector.load %arg9[%c0_275, %c0_276] : memref<32x96xf32, #tpu.memory_space<vmem>>, vector<32x96xf32>
    %cst_277 = arith.constant dense<0.000000e+00> : vector<1x96xf32>
    %799 = tpu.matmul %792, %798, %cst_277 {dimension_numbers = #tpu.dot_dimension_numbers<[1], [0], [0], [1], [0, 0, 1, 1], [], []>} : vector<1x32xf32>, vector<32x96xf32>, vector<1x96xf32> -> vector<1x96xf32>
    %800 = arith.addf %799, %444 : vector<1x96xf32>
    %c0_278 = arith.constant 0 : index
    %c0_279 = arith.constant 0 : index
    %801 = vector.load %arg12[%c0_278, %c0_279] : memref<32x96xf32, #tpu.memory_space<vmem>>, vector<32x96xf32>
    %cst_280 = arith.constant dense<0.000000e+00> : vector<1x96xf32>
    %802 = tpu.matmul %797, %801, %cst_280 {dimension_numbers = #tpu.dot_dimension_numbers<[1], [0], [0], [1], [0, 0, 1, 1], [], []>} : vector<1x32xf32>, vector<32x96xf32>, vector<1x96xf32> -> vector<1x96xf32>
    %803 = arith.addf %802, %445 : vector<1x96xf32>
    %804 = vector.extract_strided_slice %438 {offsets = [7, 0], sizes = [1, 64], strides = [1, 1]} : vector<8x96xf32> to vector<1x64xf32>
    %805 = vector.extract_strided_slice %800 {offsets = [0, 0], sizes = [1, 64], strides = [1, 1]} : vector<1x96xf32> to vector<1x64xf32>
    %806 = arith.addf %804, %805 : vector<1x64xf32>
    %cst_281 = arith.constant 5.000000e-01 : f32
    %807 = vector.broadcast %cst_281 : f32 to vector<1x64xf32>
    %808 = arith.mulf %807, %806 : vector<1x64xf32>
    %809 = math.tanh %808 : vector<1x64xf32>
    %cst_282 = arith.constant 1.000000e+00 : f32
    %810 = vector.broadcast %cst_282 : f32 to vector<1x64xf32>
    %811 = arith.addf %809, %810 : vector<1x64xf32>
    %cst_283 = arith.constant 5.000000e-01 : f32
    %812 = vector.broadcast %cst_283 : f32 to vector<1x64xf32>
    %813 = arith.mulf %812, %811 : vector<1x64xf32>
    %814 = vector.extract_strided_slice %443 {offsets = [0, 0], sizes = [1, 64], strides = [1, 1]} : vector<8x96xf32> to vector<1x64xf32>
    %815 = vector.extract_strided_slice %803 {offsets = [0, 0], sizes = [1, 64], strides = [1, 1]} : vector<1x96xf32> to vector<1x64xf32>
    %816 = arith.addf %814, %815 : vector<1x64xf32>
    %cst_284 = arith.constant 5.000000e-01 : f32
    %817 = vector.broadcast %cst_284 : f32 to vector<1x64xf32>
    %818 = arith.mulf %817, %816 : vector<1x64xf32>
    %819 = math.tanh %818 : vector<1x64xf32>
    %cst_285 = arith.constant 1.000000e+00 : f32
    %820 = vector.broadcast %cst_285 : f32 to vector<1x64xf32>
    %821 = arith.addf %819, %820 : vector<1x64xf32>
    %cst_286 = arith.constant 5.000000e-01 : f32
    %822 = vector.broadcast %cst_286 : f32 to vector<1x64xf32>
    %823 = arith.mulf %822, %821 : vector<1x64xf32>
    %824 = vector.extract_strided_slice %813 {offsets = [0, 0], sizes = [1, 32], strides = [1, 1]} : vector<1x64xf32> to vector<1x32xf32>
    %825 = vector.extract_strided_slice %813 {offsets = [0, 32], sizes = [1, 32], strides = [1, 1]} : vector<1x64xf32> to vector<1x32xf32>
    %826 = vector.extract_strided_slice %823 {offsets = [0, 0], sizes = [1, 32], strides = [1, 1]} : vector<1x64xf32> to vector<1x32xf32>
    %827 = vector.extract_strided_slice %823 {offsets = [0, 32], sizes = [1, 32], strides = [1, 1]} : vector<1x64xf32> to vector<1x32xf32>
    %828 = vector.extract_strided_slice %438 {offsets = [7, 64], sizes = [1, 32], strides = [1, 1]} : vector<8x96xf32> to vector<1x32xf32>
    %829 = vector.extract_strided_slice %800 {offsets = [0, 64], sizes = [1, 32], strides = [1, 1]} : vector<1x96xf32> to vector<1x32xf32>
    %830 = arith.mulf %824, %829 : vector<1x32xf32>
    %831 = arith.addf %828, %830 : vector<1x32xf32>
    %832 = math.tanh %831 : vector<1x32xf32>
    %833 = vector.extract_strided_slice %443 {offsets = [0, 64], sizes = [1, 32], strides = [1, 1]} : vector<8x96xf32> to vector<1x32xf32>
    %834 = vector.extract_strided_slice %803 {offsets = [0, 64], sizes = [1, 32], strides = [1, 1]} : vector<1x96xf32> to vector<1x32xf32>
    %835 = arith.mulf %826, %834 : vector<1x32xf32>
    %836 = arith.addf %833, %835 : vector<1x32xf32>
    %837 = math.tanh %836 : vector<1x32xf32>
    %cst_287 = arith.constant 1.000000e+00 : f32
    %838 = vector.broadcast %cst_287 : f32 to vector<1x32xf32>
    %839 = arith.subf %838, %825 : vector<1x32xf32>
    %840 = arith.mulf %839, %832 : vector<1x32xf32>
    %841 = arith.mulf %825, %792 : vector<1x32xf32>
    %842 = arith.addf %840, %841 : vector<1x32xf32>
    %cst_288 = arith.constant 1.000000e+00 : f32
    %843 = vector.broadcast %cst_288 : f32 to vector<1x32xf32>
    %844 = arith.subf %843, %827 : vector<1x32xf32>
    %845 = arith.mulf %844, %837 : vector<1x32xf32>
    %846 = arith.mulf %827, %797 : vector<1x32xf32>
    %847 = arith.addf %845, %846 : vector<1x32xf32>
    %848 = tpu.concatenate %842, %847 in 1 : vector<1x32xf32>, vector<1x32xf32> -> vector<1x64xf32>
    %c0_289 = arith.constant 0 : index
    %c0_290 = arith.constant 0 : index
    %849 = vector.load %arg14[%c0_289, %c0_290] : memref<64x32xf32, #tpu.memory_space<vmem>>, vector<64x32xf32>
    %cst_291 = arith.constant dense<0.000000e+00> : vector<1x32xf32>
    %850 = tpu.matmul %848, %849, %cst_291 {dimension_numbers = #tpu.dot_dimension_numbers<[1], [0], [0], [1], [0, 0, 1, 1], [], []>} : vector<1x64xf32>, vector<64x32xf32>, vector<1x32xf32> -> vector<1x32xf32>
    %c0_292 = arith.constant 0 : index
    %c0_293 = arith.constant 0 : index
    %851 = vector.load %arg15[%c0_292, %c0_293] : memref<1x32xf32, #tpu.memory_space<vmem>>, vector<1x32xf32>
    %852 = arith.addf %850, %851 : vector<1x32xf32>
    %c0_294 = arith.constant 0 : index
    %c0_295 = arith.constant 0 : index
    %853 = vector.load %arg16[%c0_294, %c0_295] : memref<32x32xf32, #tpu.memory_space<vmem>>, vector<32x32xf32>
    %cst_296 = arith.constant dense<0.000000e+00> : vector<1x32xf32>
    %854 = tpu.matmul %852, %853, %cst_296 {dimension_numbers = #tpu.dot_dimension_numbers<[1], [0], [0], [1], [0, 0, 1, 1], [], []>} : vector<1x32xf32>, vector<32x32xf32>, vector<1x32xf32> -> vector<1x32xf32>
    %c0_297 = arith.constant 0 : index
    %c0_298 = arith.constant 0 : index
    %855 = vector.load %arg17[%c0_297, %c0_298] : memref<1x32xf32, #tpu.memory_space<vmem>>, vector<1x32xf32>
    %856 = arith.addf %854, %855 : vector<1x32xf32>
    %c0_299 = arith.constant 0 : index
    %c0_300 = arith.constant 0 : index
    %857 = vector.load %arg18[%c0_299, %c0_300] : memref<32x4xf32, #tpu.memory_space<vmem>>, vector<32x4xf32>
    %cst_301 = arith.constant dense<0.000000e+00> : vector<1x4xf32>
    %858 = tpu.matmul %856, %857, %cst_301 {dimension_numbers = #tpu.dot_dimension_numbers<[1], [0], [0], [1], [0, 0, 1, 1], [], []>} : vector<1x32xf32>, vector<32x4xf32>, vector<1x4xf32> -> vector<1x4xf32>
    %c0_302 = arith.constant 0 : index
    %c0_303 = arith.constant 0 : index
    %859 = vector.load %arg19[%c0_302, %c0_303] : memref<1x4xf32, #tpu.memory_space<vmem>>, vector<1x4xf32>
    %860 = arith.addf %858, %859 : vector<1x4xf32>
    %c0_304 = arith.constant 0 : index
    %c0_305 = arith.constant 0 : index
    %861 = vector.load %arg20[%c0_304, %c0_305] : memref<1x4xf32, #tpu.memory_space<vmem>>, vector<1x4xf32>
    tpu.vector_store %arg20[%c0_304, %c0_305], %860 {strides = array<i32>} : memref<1x4xf32, #tpu.memory_space<vmem>>, vector<1x4xf32>,
    return
  }
}

</mosaic_0001>

<llo_original>
// kernel: tpu_custom_call.1
$region0: #{tpu_custom_call.1}
  #allocation0 [shape = 'u32[]', space=smem, size = 0x4, offset = 0x4, fixed_abs, tag = 'smem constant byte address 0x4 - core index']
  #allocation1 [shape = 'u32[72,128]{1,0:T(1,128)}', space=vmem, size = 0x9000, scoped, tag = 'internal scratch']
  #allocation2 [shape = 'f32[8,32]{1,0:T(8,128)}', space=vmem, size = 0x1000, scoped, tag = 'scratch operand']
  #allocation3 [shape = 'f32[8,32]{1,0:T(8,128)}', space=vmem, size = 0x1000, scoped, tag = 'scratch operand']
  %s0 = inlined_call_operand.vmem [shape: f32[8,8], index: 0, kind: input, shape index: {}]
  %s1 = inlined_call_operand.vmem [shape: f32[4,32], index: 1, kind: input, shape index: {}]
  %s2 = inlined_call_operand.hbm [shape: f32[8,96], index: 2, kind: input, shape index: {}]
  %s3 = inlined_call_operand.vmem [shape: f32[32,96], index: 3, kind: input, shape index: {}]
  %s4 = inlined_call_operand.vmem [shape: f32[2,96], index: 4, kind: input, shape index: {}]
  %s5 = inlined_call_operand.hbm [shape: f32[8,96], index: 5, kind: input, shape index: {}]
  %s6 = inlined_call_operand.hbm [shape: f32[32,96], index: 6, kind: input, shape index: {}]
  %s7 = inlined_call_operand.hbm [shape: f32[2,96], index: 7, kind: input, shape index: {}]
  %s8 = inlined_call_operand.vmem [shape: f32[64,96], index: 8, kind: input, shape index: {}]
  %s9 = inlined_call_operand.hbm [shape: f32[32,96], index: 9, kind: input, shape index: {}]
  %s10 = inlined_call_operand.hbm [shape: f32[2,96], index: 10, kind: input, shape index: {}]
  %s11 = inlined_call_operand.hbm [shape: f32[64,96], index: 11, kind: input, shape index: {}]
  %s12 = inlined_call_operand.hbm [shape: f32[32,96], index: 12, kind: input, shape index: {}]
  %s13 = inlined_call_operand.hbm [shape: f32[2,96], index: 13, kind: input, shape index: {}]
  %s14 = inlined_call_operand.vmem [shape: f32[64,32], index: 14, kind: input, shape index: {}]
  %s15 = inlined_call_operand.hbm [shape: f32[1,32], index: 15, kind: input, shape index: {}]
  %s16 = inlined_call_operand.hbm [shape: f32[32,32], index: 16, kind: input, shape index: {}]
  %s17 = inlined_call_operand.vmem [shape: f32[1,32], index: 17, kind: input, shape index: {}]
  %s18 = inlined_call_operand.vmem [shape: f32[32,4], index: 18, kind: input, shape index: {}]
  %s19 = inlined_call_operand.vmem [shape: f32[1,4], index: 19, kind: input, shape index: {}]
  %s20 = inlined_call_operand.hbm [shape: f32[1,4], index: 20, kind: output, shape index: {}]
  %s21 = sld [smem:[#allocation0]]
  $region134: #{tpu_custom_call.1} parent=0
    _
  %s23 = ssub.s32 1, %s21
  %s24 = scalar_select 0, %s23, %s21
  $region1: #{tpu_custom_call.1} parent=0
    #allocation4 [shape = 'u8[4096]{0}', space=vmem, size = 0x1000, scoped, tag = 'input window, operand 2, single buffered']
    #allocation5 [shape = 's32[1]{0}', space=sflag, size = 0x4, scoped, tag = 'scoped memory for tpu_custom_call.1']
    #allocation6 [shape = 's32[1]{0}', space=sflag, size = 0x4, scoped, tag = 'scoped memory for tpu_custom_call.1']
    #allocation7 [shape = 'u8[4096]{0}', space=vmem, size = 0x1000, scoped, tag = 'input window, operand 5, single buffered']
    #allocation8 [shape = 's32[1]{0}', space=sflag, size = 0x4, scoped, tag = 'scoped memory for tpu_custom_call.1']
    #allocation9 [shape = 'u8[16384]{0}', space=vmem, size = 0x4000, scoped, tag = 'input window, operand 6, single buffered']
    #allocation10 [shape = 'u8[1024]{0}', space=vmem, size = 0x400, scoped, tag = 'input window, operand 7, single buffered']
    #allocation11 [shape = 's32[1]{0}', space=sflag, size = 0x4, scoped, tag = 'scoped memory for tpu_custom_call.1']
    #allocation12 [shape = 'u8[16384]{0}', space=vmem, size = 0x4000, scoped, tag = 'input window, operand 9, single buffered']
    #allocation13 [shape = 'u8[1024]{0}', space=vmem, size = 0x400, scoped, tag = 'input window, operand 10, single buffered']
    #allocation14 [shape = 's32[1]{0}', space=sflag, size = 0x4, scoped, tag = 'scoped memory for tpu_custom_call.1']
    #allocation15 [shape = 'u8[32768]{0}', space=vmem, size = 0x8000, scoped, tag = 'input window, operand 11, single buffered']
    #allocation16 [shape = 'u8[16384]{0}', space=vmem, size = 0x4000, scoped, tag = 'input window, operand 12, single buffered']
    #allocation17 [shape = 's32[1]{0}', space=sflag, size = 0x4, scoped, tag = 'scoped memory for tpu_custom_call.1']
    #allocation18 [shape = 'u8[1024]{0}', space=vmem, size = 0x400, scoped, tag = 'input window, operand 13, single buffered']
    #allocation19 [shape = 'u8[512]{0}', space=vmem, size = 0x400, scoped, tag = 'input window, operand 15, single buffered']
    #allocation20 [shape = 's32[1]{0}', space=sflag, size = 0x4, scoped, tag = 'scoped memory for tpu_custom_call.1']
    #allocation21 [shape = 'u8[16384]{0}', space=vmem, size = 0x4000, scoped, tag = 'input window, operand 16, single buffered']
    #allocation22 [shape = 'u8[512]{0}', space=vmem, size = 0x400, scoped, tag = 'output window, operand 0, single buffered']
    %25 = vsyncpa [#allocation5], 0
    %26 = vsyncpa [#allocation8], 0
    %27 = vsyncpa [#allocation11], 0
    %28 = vsyncpa [#allocation14], 0
    %29 = vsyncpa [#allocation17], 0
    %30 = vsyncpa [#allocation20], 0
    %31 = vsyncpa [#allocation6], 0
    // Predicated region
    $region2: #{tpu_custom_call.1} parent=1 // pred_check
      _
    $region3: #{tpu_custom_call.1} parent=1 // pred_check_branch
      %33 = sbr.rel (0) target = $region5
    $region4: #{tpu_custom_call.1} parent=1 // pred_region
      _
    $region5: #{tpu_custom_call.1} parent=1 // pred_fallthru
      _
    // Predicated region
    $region6: #{tpu_custom_call.1} parent=1 // pred_check
      _
    $region7: #{tpu_custom_call.1} parent=1 // pred_check_branch
      %35 = sbr.rel (0) target = $region9
    $region8: #{tpu_custom_call.1} parent=1 // pred_region
      _
    $region9: #{tpu_custom_call.1} parent=1 // pred_fallthru
      _
    // Predicated region
    $region10: #{tpu_custom_call.1} parent=1 // pred_check
      _
    $region11: #{tpu_custom_call.1} parent=1 // pred_check_branch
      %37 = sbr.rel (0) target = $region13
    $region12: #{tpu_custom_call.1} parent=1 // pred_region
      %39 = vsyncadd [#allocation5], 0
      %s41 = sshll.u32 %s2, 4
      %s42 = int_to_ptr.hbm [resolvable:$true] %s41
      %s43 = sshll.u32 [#allocation4], 4
      %s44 = int_to_ptr.vmem [resolvable:$true] %s43
      %46 = dma.hbm_to_vmem [thread:$0]  %s42, 128, %s44, [#allocation5]
    $region13: #{tpu_custom_call.1} parent=1 // pred_fallthru
      _
    // Predicated region
    $region14: #{tpu_custom_call.1} parent=1 // pred_check
      _
    $region15: #{tpu_custom_call.1} parent=1 // pred_check_branch
      %48 = sbr.rel (0) target = $region17
    $region16: #{tpu_custom_call.1} parent=1 // pred_region
      _
    $region17: #{tpu_custom_call.1} parent=1 // pred_fallthru
      _
    // Predicated region
    $region18: #{tpu_custom_call.1} parent=1 // pred_check
      _
    $region19: #{tpu_custom_call.1} parent=1 // pred_check_branch
      %50 = sbr.rel (0) target = $region21
    $region20: #{tpu_custom_call.1} parent=1 // pred_region
      _
    $region21: #{tpu_custom_call.1} parent=1 // pred_fallthru
      _
    // Predicated region
    $region22: #{tpu_custom_call.1} parent=1 // pred_check
      _
    $region23: #{tpu_custom_call.1} parent=1 // pred_check_branch
      %52 = sbr.rel (0) target = $region25
    $region24: #{tpu_custom_call.1} parent=1 // pred_region
      %54 = vsyncadd [#allocation8], 0
      %s56 = sshll.u32 %s5, 4
      %s57 = int_to_ptr.hbm [resolvable:$true] %s56
      %s58 = sshll.u32 [#allocation7], 4
      %s59 = int_to_ptr.vmem [resolvable:$true] %s58
      %61 = dma.hbm_to_vmem [thread:$0]  %s57, 128, %s59, [#allocation8]
    $region25: #{tpu_custom_call.1} parent=1 // pred_fallthru
      _
    // Predicated region
    $region26: #{tpu_custom_call.1} parent=1 // pred_check
      _
    $region27: #{tpu_custom_call.1} parent=1 // pred_check_branch
      %63 = sbr.rel (0) target = $region29
    $region28: #{tpu_custom_call.1} parent=1 // pred_region
      %65 = vsyncadd [#allocation8], 0
      %s66 = sshll.u32 %s6, 4
      %s67 = int_to_ptr.hbm [resolvable:$true] %s66
      %s68 = sshll.u32 [#allocation9], 4
      %s69 = int_to_ptr.vmem [resolvable:$true] %s68
      %74 = dma.hbm_to_vmem [thread:$0]  %s67, 512, %s69, [#allocation8], 128, 128, 8
    $region29: #{tpu_custom_call.1} parent=1 // pred_fallthru
      _
    // Predicated region
    $region30: #{tpu_custom_call.1} parent=1 // pred_check
      _
    $region31: #{tpu_custom_call.1} parent=1 // pred_check_branch
      %76 = sbr.rel (0) target = $region33
    $region32: #{tpu_custom_call.1} parent=1 // pred_region
      %78 = vsyncadd [#allocation11], 0
      %s80 = sshll.u32 %s7, 4
      %s81 = int_to_ptr.hbm [resolvable:$true] %s80
      %s82 = sshll.u32 [#allocation10], 4
      %s83 = int_to_ptr.vmem [resolvable:$true] %s82
      %85 = dma.hbm_to_vmem [thread:$0]  %s81, 32, %s83, [#allocation11]
    $region33: #{tpu_custom_call.1} parent=1 // pred_fallthru
      _
    // Predicated region
    $region34: #{tpu_custom_call.1} parent=1 // pred_check
      _
    $region35: #{tpu_custom_call.1} parent=1 // pred_check_branch
      %87 = sbr.rel (0) target = $region37
    $region36: #{tpu_custom_call.1} parent=1 // pred_region
      _
    $region37: #{tpu_custom_call.1} parent=1 // pred_fallthru
      _
    // Predicated region
    $region38: #{tpu_custom_call.1} parent=1 // pred_check
      _
    $region39: #{tpu_custom_call.1} parent=1 // pred_check_branch
      %89 = sbr.rel (0) target = $region41
    $region40: #{tpu_custom_call.1} parent=1 // pred_region
      %91 = vsyncadd [#allocation11], 0
      %s92 = sshll.u32 %s9, 4
      %s93 = int_to_ptr.hbm [resolvable:$true] %s92
      %s94 = sshll.u32 [#allocation12], 4
      %s95 = int_to_ptr.vmem [resolvable:$true] %s94
      %100 = dma.hbm_to_vmem [thread:$0]  %s93, 512, %s95, [#allocation11], 128, 128, 8
    $region41: #{tpu_custom_call.1} parent=1 // pred_fallthru
      _
    // Predicated region
    $region42: #{tpu_custom_call.1} parent=1 // pred_check
      _
    $region43: #{tpu_custom_call.1} parent=1 // pred_check_branch
      %102 = sbr.rel (0) target = $region45
    $region44: #{tpu_custom_call.1} parent=1 // pred_region
      %104 = vsyncadd [#allocation14], 0
      %s106 = sshll.u32 %s10, 4
      %s107 = int_to_ptr.hbm [resolvable:$true] %s106
      %s108 = sshll.u32 [#allocation13], 4
      %s109 = int_to_ptr.vmem [resolvable:$true] %s108
      %111 = dma.hbm_to_vmem [thread:$0]  %s107, 32, %s109, [#allocation14]
    $region45: #{tpu_custom_call.1} parent=1 // pred_fallthru
      _
    // Predicated region
    $region46: #{tpu_custom_call.1} parent=1 // pred_check
      _
    $region47: #{tpu_custom_call.1} parent=1 // pred_check_branch
      %113 = sbr.rel (0) target = $region49
    $region48: #{tpu_custom_call.1} parent=1 // pred_region
      %115 = vsyncadd [#allocation14], 0
      %s116 = sshll.u32 %s11, 4
      %s117 = int_to_ptr.hbm [resolvable:$true] %s116
      %s118 = sshll.u32 [#allocation15], 4
      %s119 = int_to_ptr.vmem [resolvable:$true] %s118
      %124 = dma.hbm_to_vmem [thread:$0]  %s117, 1024, %s119, [#allocation14], 128, 128, 8
    $region49: #{tpu_custom_call.1} parent=1 // pred_fallthru
      _
    // Predicated region
    $region50: #{tpu_custom_call.1} parent=1 // pred_check
      _
    $region51: #{tpu_custom_call.1} parent=1 // pred_check_branch
      %126 = sbr.rel (0) target = $region53
    $region52: #{tpu_custom_call.1} parent=1 // pred_region
      %128 = vsyncadd [#allocation17], 0
      %s129 = sshll.u32 %s12, 4
      %s130 = int_to_ptr.hbm [resolvable:$true] %s129
      %s131 = sshll.u32 [#allocation16], 4
      %s132 = int_to_ptr.vmem [resolvable:$true] %s131
      %137 = dma.hbm_to_vmem [thread:$0]  %s130, 512, %s132, [#allocation17], 128, 128, 8
    $region53: #{tpu_custom_call.1} parent=1 // pred_fallthru
      _
    // Predicated region
    $region54: #{tpu_custom_call.1} parent=1 // pred_check
      _
    $region55: #{tpu_custom_call.1} parent=1 // pred_check_branch
      %139 = sbr.rel (0) target = $region57
    $region56: #{tpu_custom_call.1} parent=1 // pred_region
      %141 = vsyncadd [#allocation17], 0
      %s143 = sshll.u32 %s13, 4
      %s144 = int_to_ptr.hbm [resolvable:$true] %s143
      %s145 = sshll.u32 [#allocation18], 4
      %s146 = int_to_ptr.vmem [resolvable:$true] %s145
      %148 = dma.hbm_to_vmem [thread:$0]  %s144, 32, %s146, [#allocation17]
    $region57: #{tpu_custom_call.1} parent=1 // pred_fallthru
      _
    // Predicated region
    $region58: #{tpu_custom_call.1} parent=1 // pred_check
      _
    $region59: #{tpu_custom_call.1} parent=1 // pred_check_branch
      %150 = sbr.rel (0) target = $region61
    $region60: #{tpu_custom_call.1} parent=1 // pred_region
      _
    $region61: #{tpu_custom_call.1} parent=1 // pred_fallthru
      _
    // Predicated region
    $region62: #{tpu_custom_call.1} parent=1 // pred_check
      _
    $region63: #{tpu_custom_call.1} parent=1 // pred_check_branch
      %152 = sbr.rel (0) target = $region65
    $region64: #{tpu_custom_call.1} parent=1 // pred_region
      %154 = vsyncadd [#allocation20], 0
      %s156 = sshll.u32 %s15, 4
      %s157 = int_to_ptr.hbm [resolvable:$true] %s156
      %s158 = sshll.u32 [#allocation19], 4
      %s159 = int_to_ptr.vmem [resolvable:$true] %s158
      %161 = dma.hbm_to_vmem [thread:$0]  %s157, 16, %s159, [#allocation20]
    $region65: #{tpu_custom_call.1} parent=1 // pred_fallthru
      _
    // Predicated region
    $region66: #{tpu_custom_call.1} parent=1 // pred_check
      _
    $region67: #{tpu_custom_call.1} parent=1 // pred_check_branch
      %163 = sbr.rel (0) target = $region69
    $region68: #{tpu_custom_call.1} parent=1 // pred_region
      %165 = vsyncadd [#allocation20], 0
      %s166 = sshll.u32 %s16, 4
      %s167 = int_to_ptr.hbm [resolvable:$true] %s166
      %s168 = sshll.u32 [#allocation21], 4
      %s169 = int_to_ptr.vmem [resolvable:$true] %s168
      %174 = dma.hbm_to_vmem [thread:$0]  %s167, 512, %s169, [#allocation20], 128, 128, 8
    $region69: #{tpu_custom_call.1} parent=1 // pred_fallthru
      _
    // Predicated region
    $region70: #{tpu_custom_call.1} parent=1 // pred_check
      _
    $region71: #{tpu_custom_call.1} parent=1 // pred_check_branch
      %176 = sbr.rel (0) target = $region73
    $region72: #{tpu_custom_call.1} parent=1 // pred_region
      _
    $region73: #{tpu_custom_call.1} parent=1 // pred_fallthru
      _
    // Predicated region
    $region74: #{tpu_custom_call.1} parent=1 // pred_check
      _
    $region75: #{tpu_custom_call.1} parent=1 // pred_check_branch
      %178 = sbr.rel (0) target = $region77
    $region76: #{tpu_custom_call.1} parent=1 // pred_region
      _
    $region77: #{tpu_custom_call.1} parent=1 // pred_fallthru
      _
    // Predicated region
    $region78: #{tpu_custom_call.1} parent=1 // pred_check
      _
    $region79: #{tpu_custom_call.1} parent=1 // pred_check_branch
      %180 = sbr.rel (0) target = $region81
    $region80: #{tpu_custom_call.1} parent=1 // pred_region
      _
    $region81: #{tpu_custom_call.1} parent=1 // pred_fallthru
      _
    // Predicated region
    $region82: #{tpu_custom_call.1} parent=1 // pred_check
      _
    $region83: #{tpu_custom_call.1} parent=1 // pred_check_branch
      %182 = sbr.rel (0) target = $region85
    $region84: #{tpu_custom_call.1} parent=1 // pred_region
      %184 = dma.done [#allocation5], 128
    $region85: #{tpu_custom_call.1} parent=1 // pred_fallthru
      _
    // Predicated region
    $region86: #{tpu_custom_call.1} parent=1 // pred_check
      _
    $region87: #{tpu_custom_call.1} parent=1 // pred_check_branch
      %186 = sbr.rel (0) target = $region89
    $region88: #{tpu_custom_call.1} parent=1 // pred_region
      %188 = dma.done [#allocation8], 128
    $region89: #{tpu_custom_call.1} parent=1 // pred_fallthru
      _
    // Predicated region
    $region90: #{tpu_custom_call.1} parent=1 // pred_check
      _
    $region91: #{tpu_custom_call.1} parent=1 // pred_check_branch
      %190 = sbr.rel (0) target = $region93
    $region92: #{tpu_custom_call.1} parent=1 // pred_region
      %192 = dma.done [#allocation8], 512
    $region93: #{tpu_custom_call.1} parent=1 // pred_fallthru
      _
    // Predicated region
    $region94: #{tpu_custom_call.1} parent=1 // pred_check
      _
    $region95: #{tpu_custom_call.1} parent=1 // pred_check_branch
      %194 = sbr.rel (0) target = $region97
    $region96: #{tpu_custom_call.1} parent=1 // pred_region
      %196 = dma.done [#allocation11], 32
    $region97: #{tpu_custom_call.1} parent=1 // pred_fallthru
      _
    // Predicated region
    $region98: #{tpu_custom_call.1} parent=1 // pred_check
      _
    $region99: #{tpu_custom_call.1} parent=1 // pred_check_branch
      %198 = sbr.rel (0) target = $region101
    $region100: #{tpu_custom_call.1} parent=1 // pred_region
      %200 = dma.done [#allocation11], 512
    $region101: #{tpu_custom_call.1} parent=1 // pred_fallthru
      _
    // Predicated region
    $region102: #{tpu_custom_call.1} parent=1 // pred_check
      _
    $region103: #{tpu_custom_call.1} parent=1 // pred_check_branch
      %202 = sbr.rel (0) target = $region105
    $region104: #{tpu_custom_call.1} parent=1 // pred_region
      %204 = dma.done [#allocation14], 32
    $region105: #{tpu_custom_call.1} parent=1 // pred_fallthru
      _
    // Predicated region
    $region106: #{tpu_custom_call.1} parent=1 // pred_check
      _
    $region107: #{tpu_custom_call.1} parent=1 // pred_check_branch
      %206 = sbr.rel (0) target = $region109
    $region108: #{tpu_custom_call.1} parent=1 // pred_region
      %208 = dma.done [#allocation14], 1024
    $region109: #{tpu_custom_call.1} parent=1 // pred_fallthru
      _
    // Predicated region
    $region110: #{tpu_custom_call.1} parent=1 // pred_check
      _
    $region111: #{tpu_custom_call.1} parent=1 // pred_check_branch
      %210 = sbr.rel (0) target = $region113
    $region112: #{tpu_custom_call.1} parent=1 // pred_region
      %212 = dma.done [#allocation17], 512
    $region113: #{tpu_custom_call.1} parent=1 // pred_fallthru
      _
    // Predicated region
    $region114: #{tpu_custom_call.1} parent=1 // pred_check
      _
    $region115: #{tpu_custom_call.1} parent=1 // pred_check_branch
      %214 = sbr.rel (0) target = $region117
    $region116: #{tpu_custom_call.1} parent=1 // pred_region
      %216 = dma.done [#allocation17], 32
    $region117: #{tpu_custom_call.1} parent=1 // pred_fallthru
      _
    // Predicated region
    $region118: #{tpu_custom_call.1} parent=1 // pred_check
      _
    $region119: #{tpu_custom_call.1} parent=1 // pred_check_branch
      %218 = sbr.rel (0) target = $region121
    $region120: #{tpu_custom_call.1} parent=1 // pred_region
      %220 = dma.done [#allocation20], 16
    $region121: #{tpu_custom_call.1} parent=1 // pred_fallthru
      _
    // Predicated region
    $region122: #{tpu_custom_call.1} parent=1 // pred_check
      _
    $region123: #{tpu_custom_call.1} parent=1 // pred_check_branch
      %222 = sbr.rel (0) target = $region125
    $region124: #{tpu_custom_call.1} parent=1 // pred_region
      %224 = dma.done [#allocation20], 512
    $region125: #{tpu_custom_call.1} parent=1 // pred_fallthru
      _
    %v225 = vld [vmem:[%s0] sm:$0xff]
    %v226 = vld [vmem:[#allocation4] sm:$0xff]
    %v227 = vld [vmem:[%s4] sm:$0x1]
    %v228 = vperm.slane %v227, 0
    %vm229 = vcmask 64512
    %v231 = vsel %vm229, %v225, 0
    %233 = vmatpush.msra.mxu0 0.0
    %234 = vmatpush.msra.mxu0 0.0
    %235 = vmatpush.msra.mxu0 0.0
    %236 = vmatpush.msra.mxu0 0.0
    %237 = vmatpush.msra.mxu0 0.0
    %238 = vmatpush.msra.mxu0 0.0
    %239 = vmatpush.msra.mxu0 0.0
    %240 = vmatpush.msra.mxu0 0.0
    %241 = vmatpush.msra.mxu0 0.0
    %242 = vmatpush.msra.mxu0 0.0
    %243 = vmatpush.msra.mxu0 0.0
    %244 = vmatpush.msra.mxu0 0.0
    %245 = vmatpush.msra.mxu0 0.0
    %246 = vmatpush.msra.mxu0 0.0
    %247 = vmatpush.msra.mxu0 0.0
    %248 = vmatpush.msra.mxu0 %v226
    %249 = vmatmul.f32.gmra.mxu0 %v231
    %v250 = vpop.f32.mrf.mxu0
    %v251 = vadd.f32 %v228, %v250
    %252 = vdwg.mxu0
    %v253 = vld [vmem:[#allocation7] sm:$0xff]
    %v254 = vld [vmem:[#allocation10] sm:$0x1]
    %v255 = vperm.slane %v254, 0
    %256 = vmatpush.msra.mxu0 0.0
    %257 = vmatpush.msra.mxu0 0.0
    %258 = vmatpush.msra.mxu0 0.0
    %259 = vmatpush.msra.mxu0 0.0
    %260 = vmatpush.msra.mxu0 0.0
    %261 = vmatpush.msra.mxu0 0.0
    %262 = vmatpush.msra.mxu0 0.0
    %263 = vmatpush.msra.mxu0 0.0
    %264 = vmatpush.msra.mxu0 0.0
    %265 = vmatpush.msra.mxu0 0.0
    %266 = vmatpush.msra.mxu0 0.0
    %267 = vmatpush.msra.mxu0 0.0
    %268 = vmatpush.msra.mxu0 0.0
    %269 = vmatpush.msra.mxu0 0.0
    %270 = vmatpush.msra.mxu0 0.0
    %271 = vmatpush.msra.mxu0 %v253
    %272 = vmatmul.f32.gmra.mxu0 %v231
    %v273 = vpop.f32.mrf.mxu0
    %v274 = vadd.f32 %v255, %v273
    %275 = vdwg.mxu0
    %v276 = vld [vmem:[%s4 + $0x1] sm:$0x1]
    %v277 = vld [vmem:[#allocation10 + $0x1] sm:$0x1]
    %v278 = vld [vmem:[%s1] sm:$0x1]
    %v279 = vld [vmem:[%s1 + $0x1] sm:$0x1]
    %v280 = vld [vmem:[%s3] sm:$0xff]
    %v281 = vld [vmem:[%s3 + $0x8] sm:$0xff]
    %v282 = vld [vmem:[%s3 + $0x10] sm:$0xff]
    %v283 = vld [vmem:[%s3 + $0x18] sm:$0xff]
    %vm284 = vcmask 261120
    %v286 = vsel %vm284, %v278, 0
    %288 = vmatpush.msra.mxu0 0.0
    %289 = vmatpush.msra.mxu0 0.0
    %290 = vmatpush.msra.mxu0 0.0
    %291 = vmatpush.msra.mxu0 0.0
    %292 = vmatpush.msra.mxu0 0.0
    %293 = vmatpush.msra.mxu0 0.0
    %294 = vmatpush.msra.mxu0 0.0
    %295 = vmatpush.msra.mxu0 0.0
    %296 = vmatpush.msra.mxu0 0.0
    %297 = vmatpush.msra.mxu0 0.0
    %298 = vmatpush.msra.mxu0 0.0
    %299 = vmatpush.msra.mxu0 0.0
    %300 = vmatpush.msra.mxu0 %v283
    %301 = vmatpush.msra.mxu0 %v282
    %302 = vmatpush.msra.mxu0 %v281
    %303 = vmatpush.msra.mxu0 %v280
    %304 = vmatmul.f32.gmra.mxu0 %v286
    %v305 = vpop.f32.mrf.mxu0
    %v306 = vadd.f32 %v276, %v305
    %307 = vdwg.mxu0
    %v308 = vld [vmem:[#allocation9] sm:$0xff]
    %v309 = vld [vmem:[#allocation9 + $0x8] sm:$0xff]
    %v310 = vld [vmem:[#allocation9 + $0x10] sm:$0xff]
    %v311 = vld [vmem:[#allocation9 + $0x18] sm:$0xff]
    %v313 = vsel %vm284, %v279, 0
    %315 = vmatpush.msra.mxu0 0.0
    %316 = vmatpush.msra.mxu0 0.0
    %317 = vmatpush.msra.mxu0 0.0
    %318 = vmatpush.msra.mxu0 0.0
    %319 = vmatpush.msra.mxu0 0.0
    %320 = vmatpush.msra.mxu0 0.0
    %321 = vmatpush.msra.mxu0 0.0
    %322 = vmatpush.msra.mxu0 0.0
    %323 = vmatpush.msra.mxu0 0.0
    %324 = vmatpush.msra.mxu0 0.0
    %325 = vmatpush.msra.mxu0 0.0
    %326 = vmatpush.msra.mxu0 0.0
    %327 = vmatpush.msra.mxu0 %v311
    %328 = vmatpush.msra.mxu0 %v310
    %329 = vmatpush.msra.mxu0 %v309
    %330 = vmatpush.msra.mxu0 %v308
    %331 = vmatmul.f32.gmra.mxu0 %v313
    %v332 = vpop.f32.mrf.mxu0
    %v333 = vadd.f32 %v277, %v332
    %334 = vdwg.mxu0
    %v335 = vadd.f32 %v251, %v306
    %v336 = vmul.f32 %v335, 0.5
    %v337 = vtanh.pop %v336
    %v338 = vadd.f32 %v337, 1.0
    %v339 = vmul.f32 %v338, 0.5
    %v341 = vrot.slane %v333, 1
    %v343 = vadd.f32 %v274, %v341
    %v344 = vmul.f32 %v343, 0.5
    %v345 = vtanh.pop %v344
    %v346 = vadd.f32 %v345, 1.0
    %v347 = vmul.f32 %v346, 0.5
    %349 = vrot.lane.b32.xlu0 %v306, 64
    %v350 = vpop.permute.xlu0 %349
    %v352 = vmul.f32 %v339, %v350
    %354 = vrot.lane.b32.xlu0 %v352, 64
    %v355 = vpop.permute.xlu0 %354
    %v357 = vadd.f32 %v251, %v355
    %v358 = vtanh.pop %v357
    %359 = vrot.lane.b32.xlu0 %v341, 64
    %v360 = vpop.permute.xlu0 %359
    %v362 = vmul.f32 %v347, %v360
    %364 = vrot.lane.b32.xlu0 %v362, 64
    %v365 = vpop.permute.xlu0 %364
    %v367 = vadd.f32 %v274, %v365
    %v368 = vtanh.pop %v367
    %v369 = vsub.f32 1.0, %v339
    %371 = vrot.lane.b32.xlu0 %v358, 96
    %v372 = vpop.permute.xlu0 %371
    %v374 = vmul.f32 %v369, %v372
    %375 = vrot.lane.b32.xlu0 %v278, 32
    %v376 = vpop.permute.xlu0 %375
    %v378 = vmul.f32 %v339, %v376
    %v379 = vadd.f32 %v374, %v378
    %v380 = vsub.f32 1.0, %v347
    %382 = vrot.lane.b32.xlu0 %v368, 96
    %v383 = vpop.permute.xlu0 %382
    %v385 = vmul.f32 %v380, %v383
    %v386 = vrot.slane %v279, 1
    %387 = vrot.lane.b32.xlu0 %v386, 32
    %v388 = vpop.permute.xlu0 %387
    %v390 = vmul.f32 %v347, %v388
    %v391 = vadd.f32 %v385, %v390
    %393 = vrot.lane.b32.xlu0 %v379, 96
    %v394 = vpop.permute.xlu0 %393
    %vm396 = vcmask 253952
    %397 = vst.msk [vmem:[#allocation2] sm:$0x1] %vm396, %v394
    %399 = vrot.lane.b32.xlu0 %v391, 96
    %v400 = vpop.permute.xlu0 %399
    %vm402 = vcmask 261127
    %403 = vst.msk [vmem:[#allocation3] sm:$0x80] %vm402, %v400
    %v404 = vld [vmem:[%s3] sm:$0xff]
    %v405 = vld [vmem:[%s3 + $0x8] sm:$0xff]
    %v406 = vld [vmem:[%s3 + $0x10] sm:$0xff]
    %v407 = vld [vmem:[%s3 + $0x18] sm:$0xff]
    %v408 = vsel %vm284, %v394, 0
    %410 = vmatpush.msra.mxu0 0.0
    %411 = vmatpush.msra.mxu0 0.0
    %412 = vmatpush.msra.mxu0 0.0
    %413 = vmatpush.msra.mxu0 0.0
    %414 = vmatpush.msra.mxu0 0.0
    %415 = vmatpush.msra.mxu0 0.0
    %416 = vmatpush.msra.mxu0 0.0
    %417 = vmatpush.msra.mxu0 0.0
    %418 = vmatpush.msra.mxu0 0.0
    %419 = vmatpush.msra.mxu0 0.0
    %420 = vmatpush.msra.mxu0 0.0
    %421 = vmatpush.msra.mxu0 0.0
    %422 = vmatpush.msra.mxu0 %v407
    %423 = vmatpush.msra.mxu0 %v406
    %424 = vmatpush.msra.mxu0 %v405
    %425 = vmatpush.msra.mxu0 %v404
    %426 = vmatmul.f32.gmra.mxu0 %v408
    %v427 = vpop.f32.mrf.mxu0
    %v428 = vadd.f32 %v276, %v427
    %429 = vdwg.mxu0
    %v430 = vld [vmem:[#allocation9] sm:$0xff]
    %v431 = vld [vmem:[#allocation9 + $0x8] sm:$0xff]
    %v432 = vld [vmem:[#allocation9 + $0x10] sm:$0xff]
    %v433 = vld [vmem:[#allocation9 + $0x18] sm:$0xff]
    %v434 = vrot.slane %v391, 7
    %435 = vrot.lane.b32.xlu0 %v434, 96
    %v436 = vpop.permute.xlu0 %435
    %v437 = vsel %vm284, %v436, 0
    %439 = vmatpush.msra.mxu0 0.0
    %440 = vmatpush.msra.mxu0 0.0
    %441 = vmatpush.msra.mxu0 0.0
    %442 = vmatpush.msra.mxu0 0.0
    %443 = vmatpush.msra.mxu0 0.0
    %444 = vmatpush.msra.mxu0 0.0
    %445 = vmatpush.msra.mxu0 0.0
    %446 = vmatpush.msra.mxu0 0.0
    %447 = vmatpush.msra.mxu0 0.0
    %448 = vmatpush.msra.mxu0 0.0
    %449 = vmatpush.msra.mxu0 0.0
    %450 = vmatpush.msra.mxu0 0.0
    %451 = vmatpush.msra.mxu0 %v433
    %452 = vmatpush.msra.mxu0 %v432
    %453 = vmatpush.msra.mxu0 %v431
    %454 = vmatpush.msra.mxu0 %v430
    %455 = vmatmul.f32.gmra.mxu0 %v437
    %v456 = vpop.f32.mrf.mxu0
    %v457 = vadd.f32 %v277, %v456
    %458 = vdwg.mxu0
    %v460 = vrot.slane %v428, 7
    %v462 = vadd.f32 %v251, %v460
    %v463 = vmul.f32 %v462, 0.5
    %v464 = vtanh.pop %v463
    %v465 = vadd.f32 %v464, 1.0
    %v466 = vmul.f32 %v465, 0.5
    %v468 = vrot.slane %v457, 2
    %v470 = vadd.f32 %v274, %v468
    %v471 = vmul.f32 %v470, 0.5
    %v472 = vtanh.pop %v471
    %v473 = vadd.f32 %v472, 1.0
    %v474 = vmul.f32 %v473, 0.5
    %475 = vrot.lane.b32.xlu0 %v460, 64
    %v476 = vpop.permute.xlu0 %475
    %v478 = vmul.f32 %v466, %v476
    %480 = vrot.lane.b32.xlu0 %v478, 64
    %v481 = vpop.permute.xlu0 %480
    %v483 = vadd.f32 %v251, %v481
    %v484 = vtanh.pop %v483
    %485 = vrot.lane.b32.xlu0 %v468, 64
    %v486 = vpop.permute.xlu0 %485
    %v488 = vmul.f32 %v474, %v486
    %490 = vrot.lane.b32.xlu0 %v488, 64
    %v491 = vpop.permute.xlu0 %490
    %v493 = vadd.f32 %v274, %v491
    %v494 = vtanh.pop %v493
    %v495 = vsub.f32 1.0, %v466
    %497 = vrot.lane.b32.xlu0 %v484, 96
    %v498 = vpop.permute.xlu0 %497
    %v500 = vmul.f32 %v495, %v498
    %v501 = vrot.slane %v379, 7
    %v503 = vmul.f32 %v466, %v501
    %v504 = vadd.f32 %v500, %v503
    %v505 = vsub.f32 1.0, %v474
    %507 = vrot.lane.b32.xlu0 %v494, 96
    %v508 = vpop.permute.xlu0 %507
    %v510 = vmul.f32 %v505, %v508
    %v511 = vrot.slane %v391, 1
    %v513 = vmul.f32 %v474, %v511
    %v514 = vadd.f32 %v510, %v513
    %516 = vrot.lane.b32.xlu0 %v504, 96
    %v517 = vpop.permute.xlu0 %516
    %vm519 = vcmask 254977
    %520 = vst.msk [vmem:[#allocation2] sm:$0x2] %vm519, %v517
    %522 = vrot.lane.b32.xlu0 %v514, 96
    %v523 = vpop.permute.xlu0 %522
    %vm525 = vcmask 260102
    %526 = vst.msk [vmem:[#allocation3] sm:$0x40] %vm525, %v523
    %v527 = vld [vmem:[%s3] sm:$0xff]
    %v528 = vld [vmem:[%s3 + $0x8] sm:$0xff]
    %v529 = vld [vmem:[%s3 + $0x10] sm:$0xff]
    %v530 = vld [vmem:[%s3 + $0x18] sm:$0xff]
    %v531 = vrot.slane %v504, 1
    %532 = vrot.lane.b32.xlu0 %v531, 96
    %v533 = vpop.permute.xlu0 %532
    %v534 = vsel %vm284, %v533, 0
    %536 = vmatpush.msra.mxu0 0.0
    %537 = vmatpush.msra.mxu0 0.0
    %538 = vmatpush.msra.mxu0 0.0
    %539 = vmatpush.msra.mxu0 0.0
    %540 = vmatpush.msra.mxu0 0.0
    %541 = vmatpush.msra.mxu0 0.0
    %542 = vmatpush.msra.mxu0 0.0
    %543 = vmatpush.msra.mxu0 0.0
    %544 = vmatpush.msra.mxu0 0.0
    %545 = vmatpush.msra.mxu0 0.0
    %546 = vmatpush.msra.mxu0 0.0
    %547 = vmatpush.msra.mxu0 0.0
    %548 = vmatpush.msra.mxu0 %v530
    %549 = vmatpush.msra.mxu0 %v529
    %550 = vmatpush.msra.mxu0 %v528
    %551 = vmatpush.msra.mxu0 %v527
    %552 = vmatmul.f32.gmra.mxu0 %v534
    %v553 = vpop.f32.mrf.mxu0
    %v554 = vadd.f32 %v276, %v553
    %555 = vdwg.mxu0
    %v556 = vld [vmem:[#allocation9] sm:$0xff]
    %v557 = vld [vmem:[#allocation9 + $0x8] sm:$0xff]
    %v558 = vld [vmem:[#allocation9 + $0x10] sm:$0xff]
    %v559 = vld [vmem:[#allocation9 + $0x18] sm:$0xff]
    %v560 = vrot.slane %v514, 6
    %561 = vrot.lane.b32.xlu0 %v560, 96
    %v562 = vpop.permute.xlu0 %561
    %v563 = vsel %vm284, %v562, 0
    %565 = vmatpush.msra.mxu0 0.0
    %566 = vmatpush.msra.mxu0 0.0
    %567 = vmatpush.msra.mxu0 0.0
    %568 = vmatpush.msra.mxu0 0.0
    %569 = vmatpush.msra.mxu0 0.0
    %570 = vmatpush.msra.mxu0 0.0
    %571 = vmatpush.msra.mxu0 0.0
    %572 = vmatpush.msra.mxu0 0.0
    %573 = vmatpush.msra.mxu0 0.0
    %574 = vmatpush.msra.mxu0 0.0
    %575 = vmatpush.msra.mxu0 0.0
    %576 = vmatpush.msra.mxu0 0.0
    %577 = vmatpush.msra.mxu0 %v559
    %578 = vmatpush.msra.mxu0 %v558
    %579 = vmatpush.msra.mxu0 %v557
    %580 = vmatpush.msra.mxu0 %v556
    %581 = vmatmul.f32.gmra.mxu0 %v563
    %v582 = vpop.f32.mrf.mxu0
    %v583 = vadd.f32 %v277, %v582
    %584 = vdwg.mxu0
    %v586 = vrot.slane %v554, 6
    %v588 = vadd.f32 %v251, %v586
    %v589 = vmul.f32 %v588, 0.5
    %v590 = vtanh.pop %v589
    %v591 = vadd.f32 %v590, 1.0
    %v592 = vmul.f32 %v591, 0.5
    %v594 = vrot.slane %v583, 3
    %v596 = vadd.f32 %v274, %v594
    %v597 = vmul.f32 %v596, 0.5
    %v598 = vtanh.pop %v597
    %v599 = vadd.f32 %v598, 1.0
    %v600 = vmul.f32 %v599, 0.5
    %601 = vrot.lane.b32.xlu0 %v586, 64
    %v602 = vpop.permute.xlu0 %601
    %v604 = vmul.f32 %v592, %v602
    %606 = vrot.lane.b32.xlu0 %v604, 64
    %v607 = vpop.permute.xlu0 %606
    %v609 = vadd.f32 %v251, %v607
    %v610 = vtanh.pop %v609
    %611 = vrot.lane.b32.xlu0 %v594, 64
    %v612 = vpop.permute.xlu0 %611
    %v614 = vmul.f32 %v600, %v612
    %616 = vrot.lane.b32.xlu0 %v614, 64
    %v617 = vpop.permute.xlu0 %616
    %v619 = vadd.f32 %v274, %v617
    %v620 = vtanh.pop %v619
    %v621 = vsub.f32 1.0, %v592
    %623 = vrot.lane.b32.xlu0 %v610, 96
    %v624 = vpop.permute.xlu0 %623
    %v626 = vmul.f32 %v621, %v624
    %v627 = vrot.slane %v504, 7
    %v629 = vmul.f32 %v592, %v627
    %v630 = vadd.f32 %v626, %v629
    %v631 = vsub.f32 1.0, %v600
    %633 = vrot.lane.b32.xlu0 %v620, 96
    %v634 = vpop.permute.xlu0 %633
    %v636 = vmul.f32 %v631, %v634
    %v637 = vrot.slane %v514, 1
    %v639 = vmul.f32 %v600, %v637
    %v640 = vadd.f32 %v636, %v639
    %642 = vrot.lane.b32.xlu0 %v630, 96
    %v643 = vpop.permute.xlu0 %642
    %vm645 = vcmask 256002
    %646 = vst.msk [vmem:[#allocation2] sm:$0x4] %vm645, %v643
    %648 = vrot.lane.b32.xlu0 %v640, 96
    %v649 = vpop.permute.xlu0 %648
    %vm651 = vcmask 259077
    %652 = vst.msk [vmem:[#allocation3] sm:$0x20] %vm651, %v649
    %v653 = vld [vmem:[%s3] sm:$0xff]
    %v654 = vld [vmem:[%s3 + $0x8] sm:$0xff]
    %v655 = vld [vmem:[%s3 + $0x10] sm:$0xff]
    %v656 = vld [vmem:[%s3 + $0x18] sm:$0xff]
    %v657 = vrot.slane %v630, 2
    %658 = vrot.lane.b32.xlu0 %v657, 96
    %v659 = vpop.permute.xlu0 %658
    %v660 = vsel %vm284, %v659, 0
    %662 = vmatpush.msra.mxu0 0.0
    %663 = vmatpush.msra.mxu0 0.0
    %664 = vmatpush.msra.mxu0 0.0
    %665 = vmatpush.msra.mxu0 0.0
    %666 = vmatpush.msra.mxu0 0.0
    %667 = vmatpush.msra.mxu0 0.0
    %668 = vmatpush.msra.mxu0 0.0
    %669 = vmatpush.msra.mxu0 0.0
    %670 = vmatpush.msra.mxu0 0.0
    %671 = vmatpush.msra.mxu0 0.0
    %672 = vmatpush.msra.mxu0 0.0
    %673 = vmatpush.msra.mxu0 0.0
    %674 = vmatpush.msra.mxu0 %v656
    %675 = vmatpush.msra.mxu0 %v655
    %676 = vmatpush.msra.mxu0 %v654
    %677 = vmatpush.msra.mxu0 %v653
    %678 = vmatmul.f32.gmra.mxu0 %v660
    %v679 = vpop.f32.mrf.mxu0
    %v680 = vadd.f32 %v276, %v679
    %681 = vdwg.mxu0
    %v682 = vld [vmem:[#allocation9] sm:$0xff]
    %v683 = vld [vmem:[#allocation9 + $0x8] sm:$0xff]
    %v684 = vld [vmem:[#allocation9 + $0x10] sm:$0xff]
    %v685 = vld [vmem:[#allocation9 + $0x18] sm:$0xff]
    %v686 = vrot.slane %v640, 5
    %687 = vrot.lane.b32.xlu0 %v686, 96
    %v688 = vpop.permute.xlu0 %687
    %v689 = vsel %vm284, %v688, 0
    %691 = vmatpush.msra.mxu0 0.0
    %692 = vmatpush.msra.mxu0 0.0
    %693 = vmatpush.msra.mxu0 0.0
    %694 = vmatpush.msra.mxu0 0.0
    %695 = vmatpush.msra.mxu0 0.0
    %696 = vmatpush.msra.mxu0 0.0
    %697 = vmatpush.msra.mxu0 0.0
    %698 = vmatpush.msra.mxu0 0.0
    %699 = vmatpush.msra.mxu0 0.0
    %700 = vmatpush.msra.mxu0 0.0
    %701 = vmatpush.msra.mxu0 0.0
    %702 = vmatpush.msra.mxu0 0.0
    %703 = vmatpush.msra.mxu0 %v685
    %704 = vmatpush.msra.mxu0 %v684
    %705 = vmatpush.msra.mxu0 %v683
    %706 = vmatpush.msra.mxu0 %v682
    %707 = vmatmul.f32.gmra.mxu0 %v689
    %v708 = vpop.f32.mrf.mxu0
    %v709 = vadd.f32 %v277, %v708
    %710 = vdwg.mxu0
    %v712 = vrot.slane %v680, 5
    %v714 = vadd.f32 %v251, %v712
    %v715 = vmul.f32 %v714, 0.5
    %v716 = vtanh.pop %v715
    %v717 = vadd.f32 %v716, 1.0
    %v718 = vmul.f32 %v717, 0.5
    %v720 = vrot.slane %v709, 4
    %v722 = vadd.f32 %v274, %v720
    %v723 = vmul.f32 %v722, 0.5
    %v724 = vtanh.pop %v723
    %v725 = vadd.f32 %v724, 1.0
    %v726 = vmul.f32 %v725, 0.5
    %727 = vrot.lane.b32.xlu0 %v712, 64
    %v728 = vpop.permute.xlu0 %727
    %v730 = vmul.f32 %v718, %v728
    %732 = vrot.lane.b32.xlu0 %v730, 64
    %v733 = vpop.permute.xlu0 %732
    %v735 = vadd.f32 %v251, %v733
    %v736 = vtanh.pop %v735
    %737 = vrot.lane.b32.xlu0 %v720, 64
    %v738 = vpop.permute.xlu0 %737
    %v740 = vmul.f32 %v726, %v738
    %742 = vrot.lane.b32.xlu0 %v740, 64
    %v743 = vpop.permute.xlu0 %742
    %v745 = vadd.f32 %v274, %v743
    %v746 = vtanh.pop %v745
    %v747 = vsub.f32 1.0, %v718
    %749 = vrot.lane.b32.xlu0 %v736, 96
    %v750 = vpop.permute.xlu0 %749
    %v752 = vmul.f32 %v747, %v750
    %v753 = vrot.slane %v630, 7
    %v755 = vmul.f32 %v718, %v753
    %v756 = vadd.f32 %v752, %v755
    %v757 = vsub.f32 1.0, %v726
    %759 = vrot.lane.b32.xlu0 %v746, 96
    %v760 = vpop.permute.xlu0 %759
    %v762 = vmul.f32 %v757, %v760
    %v763 = vrot.slane %v640, 1
    %v765 = vmul.f32 %v726, %v763
    %v766 = vadd.f32 %v762, %v765
    %768 = vrot.lane.b32.xlu0 %v756, 96
    %v769 = vpop.permute.xlu0 %768
    %vm771 = vcmask 257027
    %772 = vst.msk [vmem:[#allocation2] sm:$0x8] %vm771, %v769
    %774 = vrot.lane.b32.xlu0 %v766, 96
    %v775 = vpop.permute.xlu0 %774
    %vm777 = vcmask 258052
    %778 = vst.msk [vmem:[#allocation3] sm:$0x10] %vm777, %v775
    %v779 = vld [vmem:[%s3] sm:$0xff]
    %v780 = vld [vmem:[%s3 + $0x8] sm:$0xff]
    %v781 = vld [vmem:[%s3 + $0x10] sm:$0xff]
    %v782 = vld [vmem:[%s3 + $0x18] sm:$0xff]
    %v783 = vrot.slane %v756, 3
    %784 = vrot.lane.b32.xlu0 %v783, 96
    %v785 = vpop.permute.xlu0 %784
    %v786 = vsel %vm284, %v785, 0
    %788 = vmatpush.msra.mxu0 0.0
    %789 = vmatpush.msra.mxu0 0.0
    %790 = vmatpush.msra.mxu0 0.0
    %791 = vmatpush.msra.mxu0 0.0
    %792 = vmatpush.msra.mxu0 0.0
    %793 = vmatpush.msra.mxu0 0.0
    %794 = vmatpush.msra.mxu0 0.0
    %795 = vmatpush.msra.mxu0 0.0
    %796 = vmatpush.msra.mxu0 0.0
    %797 = vmatpush.msra.mxu0 0.0
    %798 = vmatpush.msra.mxu0 0.0
    %799 = vmatpush.msra.mxu0 0.0
    %800 = vmatpush.msra.mxu0 %v782
    %801 = vmatpush.msra.mxu0 %v781
    %802 = vmatpush.msra.mxu0 %v780
    %803 = vmatpush.msra.mxu0 %v779
    %804 = vmatmul.f32.gmra.mxu0 %v786
    %v805 = vpop.f32.mrf.mxu0
    %v806 = vadd.f32 %v276, %v805
    %807 = vdwg.mxu0
    %v808 = vld [vmem:[#allocation9] sm:$0xff]
    %v809 = vld [vmem:[#allocation9 + $0x8] sm:$0xff]
    %v810 = vld [vmem:[#allocation9 + $0x10] sm:$0xff]
    %v811 = vld [vmem:[#allocation9 + $0x18] sm:$0xff]
    %v812 = vrot.slane %v766, 4
    %813 = vrot.lane.b32.xlu0 %v812, 96
    %v814 = vpop.permute.xlu0 %813
    %v815 = vsel %vm284, %v814, 0
    %817 = vmatpush.msra.mxu0 0.0
    %818 = vmatpush.msra.mxu0 0.0
    %819 = vmatpush.msra.mxu0 0.0
    %820 = vmatpush.msra.mxu0 0.0
    %821 = vmatpush.msra.mxu0 0.0
    %822 = vmatpush.msra.mxu0 0.0
    %823 = vmatpush.msra.mxu0 0.0
    %824 = vmatpush.msra.mxu0 0.0
    %825 = vmatpush.msra.mxu0 0.0
    %826 = vmatpush.msra.mxu0 0.0
    %827 = vmatpush.msra.mxu0 0.0
    %828 = vmatpush.msra.mxu0 0.0
    %829 = vmatpush.msra.mxu0 %v811
    %830 = vmatpush.msra.mxu0 %v810
    %831 = vmatpush.msra.mxu0 %v809
    %832 = vmatpush.msra.mxu0 %v808
    %833 = vmatmul.f32.gmra.mxu0 %v815
    %v834 = vpop.f32.mrf.mxu0
    %v835 = vadd.f32 %v277, %v834
    %836 = vdwg.mxu0
    %v838 = vrot.slane %v806, 4
    %v840 = vadd.f32 %v251, %v838
    %v841 = vmul.f32 %v840, 0.5
    %v842 = vtanh.pop %v841
    %v843 = vadd.f32 %v842, 1.0
    %v844 = vmul.f32 %v843, 0.5
    %v846 = vrot.slane %v835, 5
    %v848 = vadd.f32 %v274, %v846
    %v849 = vmul.f32 %v848, 0.5
    %v850 = vtanh.pop %v849
    %v851 = vadd.f32 %v850, 1.0
    %v852 = vmul.f32 %v851, 0.5
    %853 = vrot.lane.b32.xlu0 %v838, 64
    %v854 = vpop.permute.xlu0 %853
    %v856 = vmul.f32 %v844, %v854
    %858 = vrot.lane.b32.xlu0 %v856, 64
    %v859 = vpop.permute.xlu0 %858
    %v861 = vadd.f32 %v251, %v859
    %v862 = vtanh.pop %v861
    %863 = vrot.lane.b32.xlu0 %v846, 64
    %v864 = vpop.permute.xlu0 %863
    %v866 = vmul.f32 %v852, %v864
    %868 = vrot.lane.b32.xlu0 %v866, 64
    %v869 = vpop.permute.xlu0 %868
    %v871 = vadd.f32 %v274, %v869
    %v872 = vtanh.pop %v871
    %v873 = vsub.f32 1.0, %v844
    %875 = vrot.lane.b32.xlu0 %v862, 96
    %v876 = vpop.permute.xlu0 %875
    %v878 = vmul.f32 %v873, %v876
    %v879 = vrot.slane %v756, 7
    %v881 = vmul.f32 %v844, %v879
    %v882 = vadd.f32 %v878, %v881
    %v883 = vsub.f32 1.0, %v852
    %885 = vrot.lane.b32.xlu0 %v872, 96
    %v886 = vpop.permute.xlu0 %885
    %v888 = vmul.f32 %v883, %v886
    %v889 = vrot.slane %v766, 1
    %v891 = vmul.f32 %v852, %v889
    %v892 = vadd.f32 %v888, %v891
    %894 = vrot.lane.b32.xlu0 %v882, 96
    %v895 = vpop.permute.xlu0 %894
    %897 = vst.msk [vmem:[#allocation2] sm:$0x10] %vm777, %v895
    %899 = vrot.lane.b32.xlu0 %v892, 96
    %v900 = vpop.permute.xlu0 %899
    %902 = vst.msk [vmem:[#allocation3] sm:$0x8] %vm771, %v900
    %v903 = vld [vmem:[%s3] sm:$0xff]
    %v904 = vld [vmem:[%s3 + $0x8] sm:$0xff]
    %v905 = vld [vmem:[%s3 + $0x10] sm:$0xff]
    %v906 = vld [vmem:[%s3 + $0x18] sm:$0xff]
    %v907 = vrot.slane %v882, 4
    %908 = vrot.lane.b32.xlu0 %v907, 96
    %v909 = vpop.permute.xlu0 %908
    %v910 = vsel %vm284, %v909, 0
    %912 = vmatpush.msra.mxu0 0.0
    %913 = vmatpush.msra.mxu0 0.0
    %914 = vmatpush.msra.mxu0 0.0
    %915 = vmatpush.msra.mxu0 0.0
    %916 = vmatpush.msra.mxu0 0.0
    %917 = vmatpush.msra.mxu0 0.0
    %918 = vmatpush.msra.mxu0 0.0
    %919 = vmatpush.msra.mxu0 0.0
    %920 = vmatpush.msra.mxu0 0.0
    %921 = vmatpush.msra.mxu0 0.0
    %922 = vmatpush.msra.mxu0 0.0
    %923 = vmatpush.msra.mxu0 0.0
    %924 = vmatpush.msra.mxu0 %v906
    %925 = vmatpush.msra.mxu0 %v905
    %926 = vmatpush.msra.mxu0 %v904
    %927 = vmatpush.msra.mxu0 %v903
    %928 = vmatmul.f32.gmra.mxu0 %v910
    %v929 = vpop.f32.mrf.mxu0
    %v930 = vadd.f32 %v276, %v929
    %931 = vdwg.mxu0
    %v932 = vld [vmem:[#allocation9] sm:$0xff]
    %v933 = vld [vmem:[#allocation9 + $0x8] sm:$0xff]
    %v934 = vld [vmem:[#allocation9 + $0x10] sm:$0xff]
    %v935 = vld [vmem:[#allocation9 + $0x18] sm:$0xff]
    %v936 = vrot.slane %v892, 3
    %937 = vrot.lane.b32.xlu0 %v936, 96
    %v938 = vpop.permute.xlu0 %937
    %v939 = vsel %vm284, %v938, 0
    %941 = vmatpush.msra.mxu0 0.0
    %942 = vmatpush.msra.mxu0 0.0
    %943 = vmatpush.msra.mxu0 0.0
    %944 = vmatpush.msra.mxu0 0.0
    %945 = vmatpush.msra.mxu0 0.0
    %946 = vmatpush.msra.mxu0 0.0
    %947 = vmatpush.msra.mxu0 0.0
    %948 = vmatpush.msra.mxu0 0.0
    %949 = vmatpush.msra.mxu0 0.0
    %950 = vmatpush.msra.mxu0 0.0
    %951 = vmatpush.msra.mxu0 0.0
    %952 = vmatpush.msra.mxu0 0.0
    %953 = vmatpush.msra.mxu0 %v935
    %954 = vmatpush.msra.mxu0 %v934
    %955 = vmatpush.msra.mxu0 %v933
    %956 = vmatpush.msra.mxu0 %v932
    %957 = vmatmul.f32.gmra.mxu0 %v939
    %v958 = vpop.f32.mrf.mxu0
    %v959 = vadd.f32 %v277, %v958
    %960 = vdwg.mxu0
    %v962 = vrot.slane %v930, 3
    %v964 = vadd.f32 %v251, %v962
    %v965 = vmul.f32 %v964, 0.5
    %v966 = vtanh.pop %v965
    %v967 = vadd.f32 %v966, 1.0
    %v968 = vmul.f32 %v967, 0.5
    %v970 = vrot.slane %v959, 6
    %v972 = vadd.f32 %v274, %v970
    %v973 = vmul.f32 %v972, 0.5
    %v974 = vtanh.pop %v973
    %v975 = vadd.f32 %v974, 1.0
    %v976 = vmul.f32 %v975, 0.5
    %977 = vrot.lane.b32.xlu0 %v962, 64
    %v978 = vpop.permute.xlu0 %977
    %v980 = vmul.f32 %v968, %v978
    %982 = vrot.lane.b32.xlu0 %v980, 64
    %v983 = vpop.permute.xlu0 %982
    %v985 = vadd.f32 %v251, %v983
    %v986 = vtanh.pop %v985
    %987 = vrot.lane.b32.xlu0 %v970, 64
    %v988 = vpop.permute.xlu0 %987
    %v990 = vmul.f32 %v976, %v988
    %992 = vrot.lane.b32.xlu0 %v990, 64
    %v993 = vpop.permute.xlu0 %992
    %v995 = vadd.f32 %v274, %v993
    %v996 = vtanh.pop %v995
    %v997 = vsub.f32 1.0, %v968
    %999 = vrot.lane.b32.xlu0 %v986, 96
    %v1000 = vpop.permute.xlu0 %999
    %v1002 = vmul.f32 %v997, %v1000
    %v1003 = vrot.slane %v882, 7
    %v1005 = vmul.f32 %v968, %v1003
    %v1006 = vadd.f32 %v1002, %v1005
    %v1007 = vsub.f32 1.0, %v976
    %1009 = vrot.lane.b32.xlu0 %v996, 96
    %v1010 = vpop.permute.xlu0 %1009
    %v1012 = vmul.f32 %v1007, %v1010
    %v1013 = vrot.slane %v892, 1
    %v1015 = vmul.f32 %v976, %v1013
    %v1016 = vadd.f32 %v1012, %v1015
    %1018 = vrot.lane.b32.xlu0 %v1006, 96
    %v1019 = vpop.permute.xlu0 %1018
    %1021 = vst.msk [vmem:[#allocation2] sm:$0x20] %vm651, %v1019
    %1023 = vrot.lane.b32.xlu0 %v1016, 96
    %v1024 = vpop.permute.xlu0 %1023
    %1026 = vst.msk [vmem:[#allocation3] sm:$0x4] %vm645, %v1024
    %v1027 = vld [vmem:[%s3] sm:$0xff]
    %v1028 = vld [vmem:[%s3 + $0x8] sm:$0xff]
    %v1029 = vld [vmem:[%s3 + $0x10] sm:$0xff]
    %v1030 = vld [vmem:[%s3 + $0x18] sm:$0xff]
    %v1031 = vrot.slane %v1006, 5
    %1032 = vrot.lane.b32.xlu0 %v1031, 96
    %v1033 = vpop.permute.xlu0 %1032
    %v1034 = vsel %vm284, %v1033, 0
    %1036 = vmatpush.msra.mxu0 0.0
    %1037 = vmatpush.msra.mxu0 0.0
    %1038 = vmatpush.msra.mxu0 0.0
    %1039 = vmatpush.msra.mxu0 0.0
    %1040 = vmatpush.msra.mxu0 0.0
    %1041 = vmatpush.msra.mxu0 0.0
    %1042 = vmatpush.msra.mxu0 0.0
    %1043 = vmatpush.msra.mxu0 0.0
    %1044 = vmatpush.msra.mxu0 0.0
    %1045 = vmatpush.msra.mxu0 0.0
    %1046 = vmatpush.msra.mxu0 0.0
    %1047 = vmatpush.msra.mxu0 0.0
    %1048 = vmatpush.msra.mxu0 %v1030
    %1049 = vmatpush.msra.mxu0 %v1029
    %1050 = vmatpush.msra.mxu0 %v1028
    %1051 = vmatpush.msra.mxu0 %v1027
    %1052 = vmatmul.f32.gmra.mxu0 %v1034
    %v1053 = vpop.f32.mrf.mxu0
    %v1054 = vadd.f32 %v276, %v1053
    %1055 = vdwg.mxu0
    %v1056 = vld [vmem:[#allocation9] sm:$0xff]
    %v1057 = vld [vmem:[#allocation9 + $0x8] sm:$0xff]
    %v1058 = vld [vmem:[#allocation9 + $0x10] sm:$0xff]
    %v1059 = vld [vmem:[#allocation9 + $0x18] sm:$0xff]
    %v1060 = vrot.slane %v1016, 2
    %1061 = vrot.lane.b32.xlu0 %v1060, 96
    %v1062 = vpop.permute.xlu0 %1061
    %v1063 = vsel %vm284, %v1062, 0
    %1065 = vmatpush.msra.mxu0 0.0
    %1066 = vmatpush.msra.mxu0 0.0
    %1067 = vmatpush.msra.mxu0 0.0
    %1068 = vmatpush.msra.mxu0 0.0
    %1069 = vmatpush.msra.mxu0 0.0
    %1070 = vmatpush.msra.mxu0 0.0
    %1071 = vmatpush.msra.mxu0 0.0
    %1072 = vmatpush.msra.mxu0 0.0
    %1073 = vmatpush.msra.mxu0 0.0
    %1074 = vmatpush.msra.mxu0 0.0
    %1075 = vmatpush.msra.mxu0 0.0
    %1076 = vmatpush.msra.mxu0 0.0
    %1077 = vmatpush.msra.mxu0 %v1059
    %1078 = vmatpush.msra.mxu0 %v1058
    %1079 = vmatpush.msra.mxu0 %v1057
    %1080 = vmatpush.msra.mxu0 %v1056
    %1081 = vmatmul.f32.gmra.mxu0 %v1063
    %v1082 = vpop.f32.mrf.mxu0
    %v1083 = vadd.f32 %v277, %v1082
    %1084 = vdwg.mxu0
    %v1086 = vrot.slane %v1054, 2
    %v1088 = vadd.f32 %v251, %v1086
    %v1089 = vmul.f32 %v1088, 0.5
    %v1090 = vtanh.pop %v1089
    %v1091 = vadd.f32 %v1090, 1.0
    %v1092 = vmul.f32 %v1091, 0.5
    %v1094 = vrot.slane %v1083, 7
    %v1096 = vadd.f32 %v274, %v1094
    %v1097 = vmul.f32 %v1096, 0.5
    %v1098 = vtanh.pop %v1097
    %v1099 = vadd.f32 %v1098, 1.0
    %v1100 = vmul.f32 %v1099, 0.5
    %1101 = vrot.lane.b32.xlu0 %v1086, 64
    %v1102 = vpop.permute.xlu0 %1101
    %v1104 = vmul.f32 %v1092, %v1102
    %1106 = vrot.lane.b32.xlu0 %v1104, 64
    %v1107 = vpop.permute.xlu0 %1106
    %v1109 = vadd.f32 %v251, %v1107
    %v1110 = vtanh.pop %v1109
    %1111 = vrot.lane.b32.xlu0 %v1094, 64
    %v1112 = vpop.permute.xlu0 %1111
    %v1114 = vmul.f32 %v1100, %v1112
    %1116 = vrot.lane.b32.xlu0 %v1114, 64
    %v1117 = vpop.permute.xlu0 %1116
    %v1119 = vadd.f32 %v274, %v1117
    %v1120 = vtanh.pop %v1119
    %v1121 = vsub.f32 1.0, %v1092
    %1123 = vrot.lane.b32.xlu0 %v1110, 96
    %v1124 = vpop.permute.xlu0 %1123
    %v1126 = vmul.f32 %v1121, %v1124
    %v1127 = vrot.slane %v1006, 7
    %v1129 = vmul.f32 %v1092, %v1127
    %v1130 = vadd.f32 %v1126, %v1129
    %v1131 = vsub.f32 1.0, %v1100
    %1133 = vrot.lane.b32.xlu0 %v1120, 96
    %v1134 = vpop.permute.xlu0 %1133
    %v1136 = vmul.f32 %v1131, %v1134
    %v1137 = vrot.slane %v1016, 1
    %v1139 = vmul.f32 %v1100, %v1137
    %v1140 = vadd.f32 %v1136, %v1139
    %1142 = vrot.lane.b32.xlu0 %v1130, 96
    %v1143 = vpop.permute.xlu0 %1142
    %1145 = vst.msk [vmem:[#allocation2] sm:$0x40] %vm525, %v1143
    %1147 = vrot.lane.b32.xlu0 %v1140, 96
    %v1148 = vpop.permute.xlu0 %1147
    %1150 = vst.msk [vmem:[#allocation3] sm:$0x2] %vm519, %v1148
    %v1151 = vld [vmem:[%s3] sm:$0xff]
    %v1152 = vld [vmem:[%s3 + $0x8] sm:$0xff]
    %v1153 = vld [vmem:[%s3 + $0x10] sm:$0xff]
    %v1154 = vld [vmem:[%s3 + $0x18] sm:$0xff]
    %v1155 = vrot.slane %v1130, 6
    %1156 = vrot.lane.b32.xlu0 %v1155, 96
    %v1157 = vpop.permute.xlu0 %1156
    %v1158 = vsel %vm284, %v1157, 0
    %1160 = vmatpush.msra.mxu0 0.0
    %1161 = vmatpush.msra.mxu0 0.0
    %1162 = vmatpush.msra.mxu0 0.0
    %1163 = vmatpush.msra.mxu0 0.0
    %1164 = vmatpush.msra.mxu0 0.0
    %1165 = vmatpush.msra.mxu0 0.0
    %1166 = vmatpush.msra.mxu0 0.0
    %1167 = vmatpush.msra.mxu0 0.0
    %1168 = vmatpush.msra.mxu0 0.0
    %1169 = vmatpush.msra.mxu0 0.0
    %1170 = vmatpush.msra.mxu0 0.0
    %1171 = vmatpush.msra.mxu0 0.0
    %1172 = vmatpush.msra.mxu0 %v1154
    %1173 = vmatpush.msra.mxu0 %v1153
    %1174 = vmatpush.msra.mxu0 %v1152
    %1175 = vmatpush.msra.mxu0 %v1151
    %1176 = vmatmul.f32.gmra.mxu0 %v1158
    %v1177 = vpop.f32.mrf.mxu0
    %v1178 = vadd.f32 %v276, %v1177
    %1179 = vdwg.mxu0
    %v1180 = vld [vmem:[#allocation9] sm:$0xff]
    %v1181 = vld [vmem:[#allocation9 + $0x8] sm:$0xff]
    %v1182 = vld [vmem:[#allocation9 + $0x10] sm:$0xff]
    %v1183 = vld [vmem:[#allocation9 + $0x18] sm:$0xff]
    %v1184 = vrot.slane %v1140, 1
    %1185 = vrot.lane.b32.xlu0 %v1184, 96
    %v1186 = vpop.permute.xlu0 %1185
    %v1187 = vsel %vm284, %v1186, 0
    %1189 = vmatpush.msra.mxu0 0.0
    %1190 = vmatpush.msra.mxu0 0.0
    %1191 = vmatpush.msra.mxu0 0.0
    %1192 = vmatpush.msra.mxu0 0.0
    %1193 = vmatpush.msra.mxu0 0.0
    %1194 = vmatpush.msra.mxu0 0.0
    %1195 = vmatpush.msra.mxu0 0.0
    %1196 = vmatpush.msra.mxu0 0.0
    %1197 = vmatpush.msra.mxu0 0.0
    %1198 = vmatpush.msra.mxu0 0.0
    %1199 = vmatpush.msra.mxu0 0.0
    %1200 = vmatpush.msra.mxu0 0.0
    %1201 = vmatpush.msra.mxu0 %v1183
    %1202 = vmatpush.msra.mxu0 %v1182
    %1203 = vmatpush.msra.mxu0 %v1181
    %1204 = vmatpush.msra.mxu0 %v1180
    %1205 = vmatmul.f32.gmra.mxu0 %v1187
    %v1206 = vpop.f32.mrf.mxu0
    %v1207 = vadd.f32 %v277, %v1206
    %1208 = vdwg.mxu0
    %v1210 = vrot.slane %v1178, 1
    %v1212 = vadd.f32 %v251, %v1210
    %v1213 = vmul.f32 %v1212, 0.5
    %v1214 = vtanh.pop %v1213
    %v1215 = vadd.f32 %v1214, 1.0
    %v1216 = vmul.f32 %v1215, 0.5
    %v1217 = vadd.f32 %v274, %v1207
    %v1218 = vmul.f32 %v1217, 0.5
    %v1219 = vtanh.pop %v1218
    %v1220 = vadd.f32 %v1219, 1.0
    %v1221 = vmul.f32 %v1220, 0.5
    %1222 = vrot.lane.b32.xlu0 %v1210, 64
    %v1223 = vpop.permute.xlu0 %1222
    %v1225 = vmul.f32 %v1216, %v1223
    %1227 = vrot.lane.b32.xlu0 %v1225, 64
    %v1228 = vpop.permute.xlu0 %1227
    %v1230 = vadd.f32 %v251, %v1228
    %v1231 = vtanh.pop %v1230
    %1233 = vrot.lane.b32.xlu0 %v1207, 64
    %v1234 = vpop.permute.xlu0 %1233
    %v1236 = vmul.f32 %v1221, %v1234
    %1238 = vrot.lane.b32.xlu0 %v1236, 64
    %v1239 = vpop.permute.xlu0 %1238
    %v1241 = vadd.f32 %v274, %v1239
    %v1242 = vtanh.pop %v1241
    %v1243 = vsub.f32 1.0, %v1216
    %1245 = vrot.lane.b32.xlu0 %v1231, 96
    %v1246 = vpop.permute.xlu0 %1245
    %v1248 = vmul.f32 %v1243, %v1246
    %v1249 = vrot.slane %v1130, 7
    %v1251 = vmul.f32 %v1216, %v1249
    %v1252 = vadd.f32 %v1248, %v1251
    %v1253 = vsub.f32 1.0, %v1221
    %1255 = vrot.lane.b32.xlu0 %v1242, 96
    %v1256 = vpop.permute.xlu0 %1255
    %v1258 = vmul.f32 %v1253, %v1256
    %v1260 = vmul.f32 %v1221, %v1184
    %v1261 = vadd.f32 %v1258, %v1260
    %1263 = vrot.lane.b32.xlu0 %v1252, 96
    %v1264 = vpop.permute.xlu0 %1263
    %1266 = vst.msk [vmem:[#allocation2] sm:$0x80] %vm402, %v1264
    %1268 = vrot.lane.b32.xlu0 %v1261, 96
    %v1269 = vpop.permute.xlu0 %1268
    %1271 = vst.msk [vmem:[#allocation3] sm:$0x1] %vm396, %v1269
    %v1272 = vld [vmem:[#allocation2] sm:$0xff]
    %v1273 = vld [vmem:[#allocation3] sm:$0xff]
    %1275 = vrot.lane.b32.xlu0 %v1273, 32
    %v1276 = vpop.permute.xlu0 %1275
    %v1278 = vsel %vm284, %v1272, %v1276
    %v1279 = vld [vmem:[%s8] sm:$0xff]
    %v1280 = vld [vmem:[%s8 + $0x8] sm:$0xff]
    %v1281 = vld [vmem:[%s8 + $0x10] sm:$0xff]
    %v1282 = vld [vmem:[%s8 + $0x18] sm:$0xff]
    %v1283 = vld [vmem:[%s8 + $0x20] sm:$0xff]
    %v1284 = vld [vmem:[%s8 + $0x28] sm:$0xff]
    %v1285 = vld [vmem:[%s8 + $0x30] sm:$0xff]
    %v1286 = vld [vmem:[%s8 + $0x38] sm:$0xff]
    %v1287 = vld [vmem:[#allocation13] sm:$0x1]
    %v1288 = vperm.slane %v1287, 0
    %vm1289 = vcmask 523264
    %v1291 = vsel %vm1289, %v1278, 0
    %1293 = vmatpush.msra.mxu0 0.0
    %1294 = vmatpush.msra.mxu0 0.0
    %1295 = vmatpush.msra.mxu0 0.0
    %1296 = vmatpush.msra.mxu0 0.0
    %1297 = vmatpush.msra.mxu0 0.0
    %1298 = vmatpush.msra.mxu0 0.0
    %1299 = vmatpush.msra.mxu0 0.0
    %1300 = vmatpush.msra.mxu0 0.0
    %1301 = vmatpush.msra.mxu0 %v1286
    %1302 = vmatpush.msra.mxu0 %v1285
    %1303 = vmatpush.msra.mxu0 %v1284
    %1304 = vmatpush.msra.mxu0 %v1283
    %1305 = vmatpush.msra.mxu0 %v1282
    %1306 = vmatpush.msra.mxu0 %v1281
    %1307 = vmatpush.msra.mxu0 %v1280
    %1308 = vmatpush.msra.mxu0 %v1279
    %1309 = vmatmul.f32.gmra.mxu0 %v1291
    %v1310 = vpop.f32.mrf.mxu0
    %v1311 = vadd.f32 %v1288, %v1310
    %1312 = vdwg.mxu0
    %v1313 = vld [vmem:[#allocation15] sm:$0xff]
    %v1314 = vld [vmem:[#allocation15 + $0x8] sm:$0xff]
    %v1315 = vld [vmem:[#allocation15 + $0x10] sm:$0xff]
    %v1316 = vld [vmem:[#allocation15 + $0x18] sm:$0xff]
    %v1317 = vld [vmem:[#allocation15 + $0x20] sm:$0xff]
    %v1318 = vld [vmem:[#allocation15 + $0x28] sm:$0xff]
    %v1319 = vld [vmem:[#allocation15 + $0x30] sm:$0xff]
    %v1320 = vld [vmem:[#allocation15 + $0x38] sm:$0xff]
    %v1321 = vld [vmem:[#allocation18] sm:$0x1]
    %v1322 = vperm.slane %v1321, 0
    %1323 = vmatpush.msra.mxu0 0.0
    %1324 = vmatpush.msra.mxu0 0.0
    %1325 = vmatpush.msra.mxu0 0.0
    %1326 = vmatpush.msra.mxu0 0.0
    %1327 = vmatpush.msra.mxu0 0.0
    %1328 = vmatpush.msra.mxu0 0.0
    %1329 = vmatpush.msra.mxu0 0.0
    %1330 = vmatpush.msra.mxu0 0.0
    %1331 = vmatpush.msra.mxu0 %v1320
    %1332 = vmatpush.msra.mxu0 %v1319
    %1333 = vmatpush.msra.mxu0 %v1318
    %1334 = vmatpush.msra.mxu0 %v1317
    %1335 = vmatpush.msra.mxu0 %v1316
    %1336 = vmatpush.msra.mxu0 %v1315
    %1337 = vmatpush.msra.mxu0 %v1314
    %1338 = vmatpush.msra.mxu0 %v1313
    %1339 = vmatmul.f32.gmra.mxu0 %v1291
    %v1340 = vpop.f32.mrf.mxu0
    %v1341 = vadd.f32 %v1322, %v1340
    %1342 = vdwg.mxu0
    %v1343 = vld [vmem:[#allocation13 + $0x1] sm:$0x1]
    %v1344 = vld [vmem:[#allocation18 + $0x1] sm:$0x1]
    %v1345 = vld [vmem:[%s1 + $0x2] sm:$0x1]
    %v1346 = vld [vmem:[%s1 + $0x3] sm:$0x1]
    %v1347 = vld [vmem:[#allocation12] sm:$0xff]
    %v1348 = vld [vmem:[#allocation12 + $0x8] sm:$0xff]
    %v1349 = vld [vmem:[#allocation12 + $0x10] sm:$0xff]
    %v1350 = vld [vmem:[#allocation12 + $0x18] sm:$0xff]
    %v1352 = vsel %vm284, %v1345, 0
    %1354 = vmatpush.msra.mxu0 0.0
    %1355 = vmatpush.msra.mxu0 0.0
    %1356 = vmatpush.msra.mxu0 0.0
    %1357 = vmatpush.msra.mxu0 0.0
    %1358 = vmatpush.msra.mxu0 0.0
    %1359 = vmatpush.msra.mxu0 0.0
    %1360 = vmatpush.msra.mxu0 0.0
    %1361 = vmatpush.msra.mxu0 0.0
    %1362 = vmatpush.msra.mxu0 0.0
    %1363 = vmatpush.msra.mxu0 0.0
    %1364 = vmatpush.msra.mxu0 0.0
    %1365 = vmatpush.msra.mxu0 0.0
    %1366 = vmatpush.msra.mxu0 %v1350
    %1367 = vmatpush.msra.mxu0 %v1349
    %1368 = vmatpush.msra.mxu0 %v1348
    %1369 = vmatpush.msra.mxu0 %v1347
    %1370 = vmatmul.f32.gmra.mxu0 %v1352
    %v1371 = vpop.f32.mrf.mxu0
    %v1372 = vadd.f32 %v1343, %v1371
    %1373 = vdwg.mxu0
    %v1374 = vld [vmem:[#allocation16] sm:$0xff]
    %v1375 = vld [vmem:[#allocation16 + $0x8] sm:$0xff]
    %v1376 = vld [vmem:[#allocation16 + $0x10] sm:$0xff]
    %v1377 = vld [vmem:[#allocation16 + $0x18] sm:$0xff]
    %v1379 = vsel %vm284, %v1346, 0
    %1381 = vmatpush.msra.mxu0 0.0
    %1382 = vmatpush.msra.mxu0 0.0
    %1383 = vmatpush.msra.mxu0 0.0
    %1384 = vmatpush.msra.mxu0 0.0
    %1385 = vmatpush.msra.mxu0 0.0
    %1386 = vmatpush.msra.mxu0 0.0
    %1387 = vmatpush.msra.mxu0 0.0
    %1388 = vmatpush.msra.mxu0 0.0
    %1389 = vmatpush.msra.mxu0 0.0
    %1390 = vmatpush.msra.mxu0 0.0
    %1391 = vmatpush.msra.mxu0 0.0
    %1392 = vmatpush.msra.mxu0 0.0
    %1393 = vmatpush.msra.mxu0 %v1377
    %1394 = vmatpush.msra.mxu0 %v1376
    %1395 = vmatpush.msra.mxu0 %v1375
    %1396 = vmatpush.msra.mxu0 %v1374
    %1397 = vmatmul.f32.gmra.mxu0 %v1379
    %v1398 = vpop.f32.mrf.mxu0
    %v1399 = vadd.f32 %v1344, %v1398
    %1400 = vdwg.mxu0
    %v1401 = vadd.f32 %v1311, %v1372
    %v1402 = vmul.f32 %v1401, 0.5
    %v1403 = vtanh.pop %v1402
    %v1404 = vadd.f32 %v1403, 1.0
    %v1405 = vmul.f32 %v1404, 0.5
    %v1407 = vrot.slane %v1399, 1
    %v1409 = vadd.f32 %v1341, %v1407
    %v1410 = vmul.f32 %v1409, 0.5
    %v1411 = vtanh.pop %v1410
    %v1412 = vadd.f32 %v1411, 1.0
    %v1413 = vmul.f32 %v1412, 0.5
    %1415 = vrot.lane.b32.xlu0 %v1372, 64
    %v1416 = vpop.permute.xlu0 %1415
    %v1418 = vmul.f32 %v1405, %v1416
    %1420 = vrot.lane.b32.xlu0 %v1418, 64
    %v1421 = vpop.permute.xlu0 %1420
    %v1423 = vadd.f32 %v1311, %v1421
    %v1424 = vtanh.pop %v1423
    %1425 = vrot.lane.b32.xlu0 %v1407, 64
    %v1426 = vpop.permute.xlu0 %1425
    %v1428 = vmul.f32 %v1413, %v1426
    %1430 = vrot.lane.b32.xlu0 %v1428, 64
    %v1431 = vpop.permute.xlu0 %1430
    %v1433 = vadd.f32 %v1341, %v1431
    %v1434 = vtanh.pop %v1433
    %v1435 = vsub.f32 1.0, %v1405
    %1437 = vrot.lane.b32.xlu0 %v1424, 96
    %v1438 = vpop.permute.xlu0 %1437
    %v1440 = vmul.f32 %v1435, %v1438
    %1441 = vrot.lane.b32.xlu0 %v1345, 32
    %v1442 = vpop.permute.xlu0 %1441
    %v1444 = vmul.f32 %v1405, %v1442
    %v1445 = vadd.f32 %v1440, %v1444
    %v1446 = vsub.f32 1.0, %v1413
    %1448 = vrot.lane.b32.xlu0 %v1434, 96
    %v1449 = vpop.permute.xlu0 %1448
    %v1451 = vmul.f32 %v1446, %v1449
    %v1452 = vrot.slane %v1346, 1
    %1453 = vrot.lane.b32.xlu0 %v1452, 32
    %v1454 = vpop.permute.xlu0 %1453
    %v1456 = vmul.f32 %v1413, %v1454
    %v1457 = vadd.f32 %v1451, %v1456
    %1459 = vrot.lane.b32.xlu0 %v1445, 96
    %v1460 = vpop.permute.xlu0 %1459
    %v1461 = vsel %vm284, %v1460, 0
    %1463 = vmatpush.msra.mxu0 0.0
    %1464 = vmatpush.msra.mxu0 0.0
    %1465 = vmatpush.msra.mxu0 0.0
    %1466 = vmatpush.msra.mxu0 0.0
    %1467 = vmatpush.msra.mxu0 0.0
    %1468 = vmatpush.msra.mxu0 0.0
    %1469 = vmatpush.msra.mxu0 0.0
    %1470 = vmatpush.msra.mxu0 0.0
    %1471 = vmatpush.msra.mxu0 0.0
    %1472 = vmatpush.msra.mxu0 0.0
    %1473 = vmatpush.msra.mxu0 0.0
    %1474 = vmatpush.msra.mxu0 0.0
    %1475 = vmatpush.msra.mxu0 %v1350
    %1476 = vmatpush.msra.mxu0 %v1349
    %1477 = vmatpush.msra.mxu0 %v1348
    %1478 = vmatpush.msra.mxu0 %v1347
    %1479 = vmatmul.f32.gmra.mxu0 %v1461
    %v1480 = vpop.f32.mrf.mxu0
    %v1481 = vadd.f32 %v1343, %v1480
    %1482 = vdwg.mxu0
    %v1484 = vrot.slane %v1457, 7
    %1485 = vrot.lane.b32.xlu0 %v1484, 96
    %v1486 = vpop.permute.xlu0 %1485
    %v1487 = vsel %vm284, %v1486, 0
    %1489 = vmatpush.msra.mxu0 0.0
    %1490 = vmatpush.msra.mxu0 0.0
    %1491 = vmatpush.msra.mxu0 0.0
    %1492 = vmatpush.msra.mxu0 0.0
    %1493 = vmatpush.msra.mxu0 0.0
    %1494 = vmatpush.msra.mxu0 0.0
    %1495 = vmatpush.msra.mxu0 0.0
    %1496 = vmatpush.msra.mxu0 0.0
    %1497 = vmatpush.msra.mxu0 0.0
    %1498 = vmatpush.msra.mxu0 0.0
    %1499 = vmatpush.msra.mxu0 0.0
    %1500 = vmatpush.msra.mxu0 0.0
    %1501 = vmatpush.msra.mxu0 %v1377
    %1502 = vmatpush.msra.mxu0 %v1376
    %1503 = vmatpush.msra.mxu0 %v1375
    %1504 = vmatpush.msra.mxu0 %v1374
    %1505 = vmatmul.f32.gmra.mxu0 %v1487
    %v1506 = vpop.f32.mrf.mxu0
    %v1507 = vadd.f32 %v1344, %v1506
    %1508 = vdwg.mxu0
    %v1510 = vrot.slane %v1481, 7
    %v1512 = vadd.f32 %v1311, %v1510
    %v1513 = vmul.f32 %v1512, 0.5
    %v1514 = vtanh.pop %v1513
    %v1515 = vadd.f32 %v1514, 1.0
    %v1516 = vmul.f32 %v1515, 0.5
    %v1518 = vrot.slane %v1507, 2
    %v1520 = vadd.f32 %v1341, %v1518
    %v1521 = vmul.f32 %v1520, 0.5
    %v1522 = vtanh.pop %v1521
    %v1523 = vadd.f32 %v1522, 1.0
    %v1524 = vmul.f32 %v1523, 0.5
    %1525 = vrot.lane.b32.xlu0 %v1510, 64
    %v1526 = vpop.permute.xlu0 %1525
    %v1528 = vmul.f32 %v1516, %v1526
    %1530 = vrot.lane.b32.xlu0 %v1528, 64
    %v1531 = vpop.permute.xlu0 %1530
    %v1533 = vadd.f32 %v1311, %v1531
    %v1534 = vtanh.pop %v1533
    %1535 = vrot.lane.b32.xlu0 %v1518, 64
    %v1536 = vpop.permute.xlu0 %1535
    %v1538 = vmul.f32 %v1524, %v1536
    %1540 = vrot.lane.b32.xlu0 %v1538, 64
    %v1541 = vpop.permute.xlu0 %1540
    %v1543 = vadd.f32 %v1341, %v1541
    %v1544 = vtanh.pop %v1543
    %v1545 = vsub.f32 1.0, %v1516
    %1547 = vrot.lane.b32.xlu0 %v1534, 96
    %v1548 = vpop.permute.xlu0 %1547
    %v1550 = vmul.f32 %v1545, %v1548
    %v1551 = vrot.slane %v1445, 7
    %v1553 = vmul.f32 %v1516, %v1551
    %v1554 = vadd.f32 %v1550, %v1553
    %v1555 = vsub.f32 1.0, %v1524
    %1557 = vrot.lane.b32.xlu0 %v1544, 96
    %v1558 = vpop.permute.xlu0 %1557
    %v1560 = vmul.f32 %v1555, %v1558
    %v1561 = vrot.slane %v1457, 1
    %v1563 = vmul.f32 %v1524, %v1561
    %v1564 = vadd.f32 %v1560, %v1563
    %v1566 = vrot.slane %v1554, 1
    %1567 = vrot.lane.b32.xlu0 %v1566, 96
    %v1568 = vpop.permute.xlu0 %1567
    %v1569 = vsel %vm284, %v1568, 0
    %1571 = vmatpush.msra.mxu0 0.0
    %1572 = vmatpush.msra.mxu0 0.0
    %1573 = vmatpush.msra.mxu0 0.0
    %1574 = vmatpush.msra.mxu0 0.0
    %1575 = vmatpush.msra.mxu0 0.0
    %1576 = vmatpush.msra.mxu0 0.0
    %1577 = vmatpush.msra.mxu0 0.0
    %1578 = vmatpush.msra.mxu0 0.0
    %1579 = vmatpush.msra.mxu0 0.0
    %1580 = vmatpush.msra.mxu0 0.0
    %1581 = vmatpush.msra.mxu0 0.0
    %1582 = vmatpush.msra.mxu0 0.0
    %1583 = vmatpush.msra.mxu0 %v1350
    %1584 = vmatpush.msra.mxu0 %v1349
    %1585 = vmatpush.msra.mxu0 %v1348
    %1586 = vmatpush.msra.mxu0 %v1347
    %1587 = vmatmul.f32.gmra.mxu0 %v1569
    %v1588 = vpop.f32.mrf.mxu0
    %v1589 = vadd.f32 %v1343, %v1588
    %1590 = vdwg.mxu0
    %v1592 = vrot.slane %v1564, 6
    %1593 = vrot.lane.b32.xlu0 %v1592, 96
    %v1594 = vpop.permute.xlu0 %1593
    %v1595 = vsel %vm284, %v1594, 0
    %1597 = vmatpush.msra.mxu0 0.0
    %1598 = vmatpush.msra.mxu0 0.0
    %1599 = vmatpush.msra.mxu0 0.0
    %1600 = vmatpush.msra.mxu0 0.0
    %1601 = vmatpush.msra.mxu0 0.0
    %1602 = vmatpush.msra.mxu0 0.0
    %1603 = vmatpush.msra.mxu0 0.0
    %1604 = vmatpush.msra.mxu0 0.0
    %1605 = vmatpush.msra.mxu0 0.0
    %1606 = vmatpush.msra.mxu0 0.0
    %1607 = vmatpush.msra.mxu0 0.0
    %1608 = vmatpush.msra.mxu0 0.0
    %1609 = vmatpush.msra.mxu0 %v1377
    %1610 = vmatpush.msra.mxu0 %v1376
    %1611 = vmatpush.msra.mxu0 %v1375
    %1612 = vmatpush.msra.mxu0 %v1374
    %1613 = vmatmul.f32.gmra.mxu0 %v1595
    %v1614 = vpop.f32.mrf.mxu0
    %v1615 = vadd.f32 %v1344, %v1614
    %1616 = vdwg.mxu0
    %v1618 = vrot.slane %v1589, 6
    %v1620 = vadd.f32 %v1311, %v1618
    %v1621 = vmul.f32 %v1620, 0.5
    %v1622 = vtanh.pop %v1621
    %v1623 = vadd.f32 %v1622, 1.0
    %v1624 = vmul.f32 %v1623, 0.5
    %v1626 = vrot.slane %v1615, 3
    %v1628 = vadd.f32 %v1341, %v1626
    %v1629 = vmul.f32 %v1628, 0.5
    %v1630 = vtanh.pop %v1629
    %v1631 = vadd.f32 %v1630, 1.0
    %v1632 = vmul.f32 %v1631, 0.5
    %1633 = vrot.lane.b32.xlu0 %v1618, 64
    %v1634 = vpop.permute.xlu0 %1633
    %v1636 = vmul.f32 %v1624, %v1634
    %1638 = vrot.lane.b32.xlu0 %v1636, 64
    %v1639 = vpop.permute.xlu0 %1638
    %v1641 = vadd.f32 %v1311, %v1639
    %v1642 = vtanh.pop %v1641
    %1643 = vrot.lane.b32.xlu0 %v1626, 64
    %v1644 = vpop.permute.xlu0 %1643
    %v1646 = vmul.f32 %v1632, %v1644
    %1648 = vrot.lane.b32.xlu0 %v1646, 64
    %v1649 = vpop.permute.xlu0 %1648
    %v1651 = vadd.f32 %v1341, %v1649
    %v1652 = vtanh.pop %v1651
    %v1653 = vsub.f32 1.0, %v1624
    %1655 = vrot.lane.b32.xlu0 %v1642, 96
    %v1656 = vpop.permute.xlu0 %1655
    %v1658 = vmul.f32 %v1653, %v1656
    %v1659 = vrot.slane %v1554, 7
    %v1661 = vmul.f32 %v1624, %v1659
    %v1662 = vadd.f32 %v1658, %v1661
    %v1663 = vsub.f32 1.0, %v1632
    %1665 = vrot.lane.b32.xlu0 %v1652, 96
    %v1666 = vpop.permute.xlu0 %1665
    %v1668 = vmul.f32 %v1663, %v1666
    %v1669 = vrot.slane %v1564, 1
    %v1671 = vmul.f32 %v1632, %v1669
    %v1672 = vadd.f32 %v1668, %v1671
    %v1674 = vrot.slane %v1662, 2
    %1675 = vrot.lane.b32.xlu0 %v1674, 96
    %v1676 = vpop.permute.xlu0 %1675
    %v1677 = vsel %vm284, %v1676, 0
    %1679 = vmatpush.msra.mxu0 0.0
    %1680 = vmatpush.msra.mxu0 0.0
    %1681 = vmatpush.msra.mxu0 0.0
    %1682 = vmatpush.msra.mxu0 0.0
    %1683 = vmatpush.msra.mxu0 0.0
    %1684 = vmatpush.msra.mxu0 0.0
    %1685 = vmatpush.msra.mxu0 0.0
    %1686 = vmatpush.msra.mxu0 0.0
    %1687 = vmatpush.msra.mxu0 0.0
    %1688 = vmatpush.msra.mxu0 0.0
    %1689 = vmatpush.msra.mxu0 0.0
    %1690 = vmatpush.msra.mxu0 0.0
    %1691 = vmatpush.msra.mxu0 %v1350
    %1692 = vmatpush.msra.mxu0 %v1349
    %1693 = vmatpush.msra.mxu0 %v1348
    %1694 = vmatpush.msra.mxu0 %v1347
    %1695 = vmatmul.f32.gmra.mxu0 %v1677
    %v1696 = vpop.f32.mrf.mxu0
    %v1697 = vadd.f32 %v1343, %v1696
    %1698 = vdwg.mxu0
    %v1700 = vrot.slane %v1672, 5
    %1701 = vrot.lane.b32.xlu0 %v1700, 96
    %v1702 = vpop.permute.xlu0 %1701
    %v1703 = vsel %vm284, %v1702, 0
    %1705 = vmatpush.msra.mxu0 0.0
    %1706 = vmatpush.msra.mxu0 0.0
    %1707 = vmatpush.msra.mxu0 0.0
    %1708 = vmatpush.msra.mxu0 0.0
    %1709 = vmatpush.msra.mxu0 0.0
    %1710 = vmatpush.msra.mxu0 0.0
    %1711 = vmatpush.msra.mxu0 0.0
    %1712 = vmatpush.msra.mxu0 0.0
    %1713 = vmatpush.msra.mxu0 0.0
    %1714 = vmatpush.msra.mxu0 0.0
    %1715 = vmatpush.msra.mxu0 0.0
    %1716 = vmatpush.msra.mxu0 0.0
    %1717 = vmatpush.msra.mxu0 %v1377
    %1718 = vmatpush.msra.mxu0 %v1376
    %1719 = vmatpush.msra.mxu0 %v1375
    %1720 = vmatpush.msra.mxu0 %v1374
    %1721 = vmatmul.f32.gmra.mxu0 %v1703
    %v1722 = vpop.f32.mrf.mxu0
    %v1723 = vadd.f32 %v1344, %v1722
    %1724 = vdwg.mxu0
    %v1726 = vrot.slane %v1697, 5
    %v1728 = vadd.f32 %v1311, %v1726
    %v1729 = vmul.f32 %v1728, 0.5
    %v1730 = vtanh.pop %v1729
    %v1731 = vadd.f32 %v1730, 1.0
    %v1732 = vmul.f32 %v1731, 0.5
    %v1734 = vrot.slane %v1723, 4
    %v1736 = vadd.f32 %v1341, %v1734
    %v1737 = vmul.f32 %v1736, 0.5
    %v1738 = vtanh.pop %v1737
    %v1739 = vadd.f32 %v1738, 1.0
    %v1740 = vmul.f32 %v1739, 0.5
    %1741 = vrot.lane.b32.xlu0 %v1726, 64
    %v1742 = vpop.permute.xlu0 %1741
    %v1744 = vmul.f32 %v1732, %v1742
    %1746 = vrot.lane.b32.xlu0 %v1744, 64
    %v1747 = vpop.permute.xlu0 %1746
    %v1749 = vadd.f32 %v1311, %v1747
    %v1750 = vtanh.pop %v1749
    %1751 = vrot.lane.b32.xlu0 %v1734, 64
    %v1752 = vpop.permute.xlu0 %1751
    %v1754 = vmul.f32 %v1740, %v1752
    %1756 = vrot.lane.b32.xlu0 %v1754, 64
    %v1757 = vpop.permute.xlu0 %1756
    %v1759 = vadd.f32 %v1341, %v1757
    %v1760 = vtanh.pop %v1759
    %v1761 = vsub.f32 1.0, %v1732
    %1763 = vrot.lane.b32.xlu0 %v1750, 96
    %v1764 = vpop.permute.xlu0 %1763
    %v1766 = vmul.f32 %v1761, %v1764
    %v1767 = vrot.slane %v1662, 7
    %v1769 = vmul.f32 %v1732, %v1767
    %v1770 = vadd.f32 %v1766, %v1769
    %v1771 = vsub.f32 1.0, %v1740
    %1773 = vrot.lane.b32.xlu0 %v1760, 96
    %v1774 = vpop.permute.xlu0 %1773
    %v1776 = vmul.f32 %v1771, %v1774
    %v1777 = vrot.slane %v1672, 1
    %v1779 = vmul.f32 %v1740, %v1777
    %v1780 = vadd.f32 %v1776, %v1779
    %v1782 = vrot.slane %v1770, 3
    %1783 = vrot.lane.b32.xlu0 %v1782, 96
    %v1784 = vpop.permute.xlu0 %1783
    %v1785 = vsel %vm284, %v1784, 0
    %1787 = vmatpush.msra.mxu0 0.0
    %1788 = vmatpush.msra.mxu0 0.0
    %1789 = vmatpush.msra.mxu0 0.0
    %1790 = vmatpush.msra.mxu0 0.0
    %1791 = vmatpush.msra.mxu0 0.0
    %1792 = vmatpush.msra.mxu0 0.0
    %1793 = vmatpush.msra.mxu0 0.0
    %1794 = vmatpush.msra.mxu0 0.0
    %1795 = vmatpush.msra.mxu0 0.0
    %1796 = vmatpush.msra.mxu0 0.0
    %1797 = vmatpush.msra.mxu0 0.0
    %1798 = vmatpush.msra.mxu0 0.0
    %1799 = vmatpush.msra.mxu0 %v1350
    %1800 = vmatpush.msra.mxu0 %v1349
    %1801 = vmatpush.msra.mxu0 %v1348
    %1802 = vmatpush.msra.mxu0 %v1347
    %1803 = vmatmul.f32.gmra.mxu0 %v1785
    %v1804 = vpop.f32.mrf.mxu0
    %v1805 = vadd.f32 %v1343, %v1804
    %1806 = vdwg.mxu0
    %v1808 = vrot.slane %v1780, 4
    %1809 = vrot.lane.b32.xlu0 %v1808, 96
    %v1810 = vpop.permute.xlu0 %1809
    %v1811 = vsel %vm284, %v1810, 0
    %1813 = vmatpush.msra.mxu0 0.0
    %1814 = vmatpush.msra.mxu0 0.0
    %1815 = vmatpush.msra.mxu0 0.0
    %1816 = vmatpush.msra.mxu0 0.0
    %1817 = vmatpush.msra.mxu0 0.0
    %1818 = vmatpush.msra.mxu0 0.0
    %1819 = vmatpush.msra.mxu0 0.0
    %1820 = vmatpush.msra.mxu0 0.0
    %1821 = vmatpush.msra.mxu0 0.0
    %1822 = vmatpush.msra.mxu0 0.0
    %1823 = vmatpush.msra.mxu0 0.0
    %1824 = vmatpush.msra.mxu0 0.0
    %1825 = vmatpush.msra.mxu0 %v1377
    %1826 = vmatpush.msra.mxu0 %v1376
    %1827 = vmatpush.msra.mxu0 %v1375
    %1828 = vmatpush.msra.mxu0 %v1374
    %1829 = vmatmul.f32.gmra.mxu0 %v1811
    %v1830 = vpop.f32.mrf.mxu0
    %v1831 = vadd.f32 %v1344, %v1830
    %1832 = vdwg.mxu0
    %v1834 = vrot.slane %v1805, 4
    %v1836 = vadd.f32 %v1311, %v1834
    %v1837 = vmul.f32 %v1836, 0.5
    %v1838 = vtanh.pop %v1837
    %v1839 = vadd.f32 %v1838, 1.0
    %v1840 = vmul.f32 %v1839, 0.5
    %v1842 = vrot.slane %v1831, 5
    %v1844 = vadd.f32 %v1341, %v1842
    %v1845 = vmul.f32 %v1844, 0.5
    %v1846 = vtanh.pop %v1845
    %v1847 = vadd.f32 %v1846, 1.0
    %v1848 = vmul.f32 %v1847, 0.5
    %1849 = vrot.lane.b32.xlu0 %v1834, 64
    %v1850 = vpop.permute.xlu0 %1849
    %v1852 = vmul.f32 %v1840, %v1850
    %1854 = vrot.lane.b32.xlu0 %v1852, 64
    %v1855 = vpop.permute.xlu0 %1854
    %v1857 = vadd.f32 %v1311, %v1855
    %v1858 = vtanh.pop %v1857
    %1859 = vrot.lane.b32.xlu0 %v1842, 64
    %v1860 = vpop.permute.xlu0 %1859
    %v1862 = vmul.f32 %v1848, %v1860
    %1864 = vrot.lane.b32.xlu0 %v1862, 64
    %v1865 = vpop.permute.xlu0 %1864
    %v1867 = vadd.f32 %v1341, %v1865
    %v1868 = vtanh.pop %v1867
    %v1869 = vsub.f32 1.0, %v1840
    %1871 = vrot.lane.b32.xlu0 %v1858, 96
    %v1872 = vpop.permute.xlu0 %1871
    %v1874 = vmul.f32 %v1869, %v1872
    %v1875 = vrot.slane %v1770, 7
    %v1877 = vmul.f32 %v1840, %v1875
    %v1878 = vadd.f32 %v1874, %v1877
    %v1879 = vsub.f32 1.0, %v1848
    %1881 = vrot.lane.b32.xlu0 %v1868, 96
    %v1882 = vpop.permute.xlu0 %1881
    %v1884 = vmul.f32 %v1879, %v1882
    %v1885 = vrot.slane %v1780, 1
    %v1887 = vmul.f32 %v1848, %v1885
    %v1888 = vadd.f32 %v1884, %v1887
    %v1890 = vrot.slane %v1878, 4
    %1891 = vrot.lane.b32.xlu0 %v1890, 96
    %v1892 = vpop.permute.xlu0 %1891
    %v1893 = vsel %vm284, %v1892, 0
    %1895 = vmatpush.msra.mxu0 0.0
    %1896 = vmatpush.msra.mxu0 0.0
    %1897 = vmatpush.msra.mxu0 0.0
    %1898 = vmatpush.msra.mxu0 0.0
    %1899 = vmatpush.msra.mxu0 0.0
    %1900 = vmatpush.msra.mxu0 0.0
    %1901 = vmatpush.msra.mxu0 0.0
    %1902 = vmatpush.msra.mxu0 0.0
    %1903 = vmatpush.msra.mxu0 0.0
    %1904 = vmatpush.msra.mxu0 0.0
    %1905 = vmatpush.msra.mxu0 0.0
    %1906 = vmatpush.msra.mxu0 0.0
    %1907 = vmatpush.msra.mxu0 %v1350
    %1908 = vmatpush.msra.mxu0 %v1349
    %1909 = vmatpush.msra.mxu0 %v1348
    %1910 = vmatpush.msra.mxu0 %v1347
    %1911 = vmatmul.f32.gmra.mxu0 %v1893
    %v1912 = vpop.f32.mrf.mxu0
    %v1913 = vadd.f32 %v1343, %v1912
    %1914 = vdwg.mxu0
    %v1916 = vrot.slane %v1888, 3
    %1917 = vrot.lane.b32.xlu0 %v1916, 96
    %v1918 = vpop.permute.xlu0 %1917
    %v1919 = vsel %vm284, %v1918, 0
    %1921 = vmatpush.msra.mxu0 0.0
    %1922 = vmatpush.msra.mxu0 0.0
    %1923 = vmatpush.msra.mxu0 0.0
    %1924 = vmatpush.msra.mxu0 0.0
    %1925 = vmatpush.msra.mxu0 0.0
    %1926 = vmatpush.msra.mxu0 0.0
    %1927 = vmatpush.msra.mxu0 0.0
    %1928 = vmatpush.msra.mxu0 0.0
    %1929 = vmatpush.msra.mxu0 0.0
    %1930 = vmatpush.msra.mxu0 0.0
    %1931 = vmatpush.msra.mxu0 0.0
    %1932 = vmatpush.msra.mxu0 0.0
    %1933 = vmatpush.msra.mxu0 %v1377
    %1934 = vmatpush.msra.mxu0 %v1376
    %1935 = vmatpush.msra.mxu0 %v1375
    %1936 = vmatpush.msra.mxu0 %v1374
    %1937 = vmatmul.f32.gmra.mxu0 %v1919
    %v1938 = vpop.f32.mrf.mxu0
    %v1939 = vadd.f32 %v1344, %v1938
    %1940 = vdwg.mxu0
    %v1942 = vrot.slane %v1913, 3
    %v1944 = vadd.f32 %v1311, %v1942
    %v1945 = vmul.f32 %v1944, 0.5
    %v1946 = vtanh.pop %v1945
    %v1947 = vadd.f32 %v1946, 1.0
    %v1948 = vmul.f32 %v1947, 0.5
    %v1950 = vrot.slane %v1939, 6
    %v1952 = vadd.f32 %v1341, %v1950
    %v1953 = vmul.f32 %v1952, 0.5
    %v1954 = vtanh.pop %v1953
    %v1955 = vadd.f32 %v1954, 1.0
    %v1956 = vmul.f32 %v1955, 0.5
    %1957 = vrot.lane.b32.xlu0 %v1942, 64
    %v1958 = vpop.permute.xlu0 %1957
    %v1960 = vmul.f32 %v1948, %v1958
    %1962 = vrot.lane.b32.xlu0 %v1960, 64
    %v1963 = vpop.permute.xlu0 %1962
    %v1965 = vadd.f32 %v1311, %v1963
    %v1966 = vtanh.pop %v1965
    %1967 = vrot.lane.b32.xlu0 %v1950, 64
    %v1968 = vpop.permute.xlu0 %1967
    %v1970 = vmul.f32 %v1956, %v1968
    %1972 = vrot.lane.b32.xlu0 %v1970, 64
    %v1973 = vpop.permute.xlu0 %1972
    %v1975 = vadd.f32 %v1341, %v1973
    %v1976 = vtanh.pop %v1975
    %v1977 = vsub.f32 1.0, %v1948
    %1979 = vrot.lane.b32.xlu0 %v1966, 96
    %v1980 = vpop.permute.xlu0 %1979
    %v1982 = vmul.f32 %v1977, %v1980
    %v1983 = vrot.slane %v1878, 7
    %v1985 = vmul.f32 %v1948, %v1983
    %v1986 = vadd.f32 %v1982, %v1985
    %v1987 = vsub.f32 1.0, %v1956
    %1989 = vrot.lane.b32.xlu0 %v1976, 96
    %v1990 = vpop.permute.xlu0 %1989
    %v1992 = vmul.f32 %v1987, %v1990
    %v1993 = vrot.slane %v1888, 1
    %v1995 = vmul.f32 %v1956, %v1993
    %v1996 = vadd.f32 %v1992, %v1995
    %v1998 = vrot.slane %v1986, 5
    %1999 = vrot.lane.b32.xlu0 %v1998, 96
    %v2000 = vpop.permute.xlu0 %1999
    %v2001 = vsel %vm284, %v2000, 0
    %2003 = vmatpush.msra.mxu0 0.0
    %2004 = vmatpush.msra.mxu0 0.0
    %2005 = vmatpush.msra.mxu0 0.0
    %2006 = vmatpush.msra.mxu0 0.0
    %2007 = vmatpush.msra.mxu0 0.0
    %2008 = vmatpush.msra.mxu0 0.0
    %2009 = vmatpush.msra.mxu0 0.0
    %2010 = vmatpush.msra.mxu0 0.0
    %2011 = vmatpush.msra.mxu0 0.0
    %2012 = vmatpush.msra.mxu0 0.0
    %2013 = vmatpush.msra.mxu0 0.0
    %2014 = vmatpush.msra.mxu0 0.0
    %2015 = vmatpush.msra.mxu0 %v1350
    %2016 = vmatpush.msra.mxu0 %v1349
    %2017 = vmatpush.msra.mxu0 %v1348
    %2018 = vmatpush.msra.mxu0 %v1347
    %2019 = vmatmul.f32.gmra.mxu0 %v2001
    %v2020 = vpop.f32.mrf.mxu0
    %v2021 = vadd.f32 %v1343, %v2020
    %2022 = vdwg.mxu0
    %v2024 = vrot.slane %v1996, 2
    %2025 = vrot.lane.b32.xlu0 %v2024, 96
    %v2026 = vpop.permute.xlu0 %2025
    %v2027 = vsel %vm284, %v2026, 0
    %2029 = vmatpush.msra.mxu0 0.0
    %2030 = vmatpush.msra.mxu0 0.0
    %2031 = vmatpush.msra.mxu0 0.0
    %2032 = vmatpush.msra.mxu0 0.0
    %2033 = vmatpush.msra.mxu0 0.0
    %2034 = vmatpush.msra.mxu0 0.0
    %2035 = vmatpush.msra.mxu0 0.0
    %2036 = vmatpush.msra.mxu0 0.0
    %2037 = vmatpush.msra.mxu0 0.0
    %2038 = vmatpush.msra.mxu0 0.0
    %2039 = vmatpush.msra.mxu0 0.0
    %2040 = vmatpush.msra.mxu0 0.0
    %2041 = vmatpush.msra.mxu0 %v1377
    %2042 = vmatpush.msra.mxu0 %v1376
    %2043 = vmatpush.msra.mxu0 %v1375
    %2044 = vmatpush.msra.mxu0 %v1374
    %2045 = vmatmul.f32.gmra.mxu0 %v2027
    %v2046 = vpop.f32.mrf.mxu0
    %v2047 = vadd.f32 %v1344, %v2046
    %2048 = vdwg.mxu0
    %v2050 = vrot.slane %v2021, 2
    %v2052 = vadd.f32 %v1311, %v2050
    %v2053 = vmul.f32 %v2052, 0.5
    %v2054 = vtanh.pop %v2053
    %v2055 = vadd.f32 %v2054, 1.0
    %v2056 = vmul.f32 %v2055, 0.5
    %v2058 = vrot.slane %v2047, 7
    %v2060 = vadd.f32 %v1341, %v2058
    %v2061 = vmul.f32 %v2060, 0.5
    %v2062 = vtanh.pop %v2061
    %v2063 = vadd.f32 %v2062, 1.0
    %v2064 = vmul.f32 %v2063, 0.5
    %2065 = vrot.lane.b32.xlu0 %v2050, 64
    %v2066 = vpop.permute.xlu0 %2065
    %v2068 = vmul.f32 %v2056, %v2066
    %2070 = vrot.lane.b32.xlu0 %v2068, 64
    %v2071 = vpop.permute.xlu0 %2070
    %v2073 = vadd.f32 %v1311, %v2071
    %v2074 = vtanh.pop %v2073
    %2075 = vrot.lane.b32.xlu0 %v2058, 64
    %v2076 = vpop.permute.xlu0 %2075
    %v2078 = vmul.f32 %v2064, %v2076
    %2080 = vrot.lane.b32.xlu0 %v2078, 64
    %v2081 = vpop.permute.xlu0 %2080
    %v2083 = vadd.f32 %v1341, %v2081
    %v2084 = vtanh.pop %v2083
    %v2085 = vsub.f32 1.0, %v2056
    %2087 = vrot.lane.b32.xlu0 %v2074, 96
    %v2088 = vpop.permute.xlu0 %2087
    %v2090 = vmul.f32 %v2085, %v2088
    %v2091 = vrot.slane %v1986, 7
    %v2093 = vmul.f32 %v2056, %v2091
    %v2094 = vadd.f32 %v2090, %v2093
    %v2095 = vsub.f32 1.0, %v2064
    %2097 = vrot.lane.b32.xlu0 %v2084, 96
    %v2098 = vpop.permute.xlu0 %2097
    %v2100 = vmul.f32 %v2095, %v2098
    %v2101 = vrot.slane %v1996, 1
    %v2103 = vmul.f32 %v2064, %v2101
    %v2104 = vadd.f32 %v2100, %v2103
    %v2106 = vrot.slane %v2094, 6
    %2107 = vrot.lane.b32.xlu0 %v2106, 96
    %v2108 = vpop.permute.xlu0 %2107
    %v2109 = vsel %vm284, %v2108, 0
    %2111 = vmatpush.msra.mxu0 0.0
    %2112 = vmatpush.msra.mxu0 0.0
    %2113 = vmatpush.msra.mxu0 0.0
    %2114 = vmatpush.msra.mxu0 0.0
    %2115 = vmatpush.msra.mxu0 0.0
    %2116 = vmatpush.msra.mxu0 0.0
    %2117 = vmatpush.msra.mxu0 0.0
    %2118 = vmatpush.msra.mxu0 0.0
    %2119 = vmatpush.msra.mxu0 0.0
    %2120 = vmatpush.msra.mxu0 0.0
    %2121 = vmatpush.msra.mxu0 0.0
    %2122 = vmatpush.msra.mxu0 0.0
    %2123 = vmatpush.msra.mxu0 %v1350
    %2124 = vmatpush.msra.mxu0 %v1349
    %2125 = vmatpush.msra.mxu0 %v1348
    %2126 = vmatpush.msra.mxu0 %v1347
    %2127 = vmatmul.f32.gmra.mxu0 %v2109
    %v2128 = vpop.f32.mrf.mxu0
    %v2129 = vadd.f32 %v1343, %v2128
    %2130 = vdwg.mxu0
    %v2132 = vrot.slane %v2104, 1
    %2133 = vrot.lane.b32.xlu0 %v2132, 96
    %v2134 = vpop.permute.xlu0 %2133
    %v2135 = vsel %vm284, %v2134, 0
    %2137 = vmatpush.msra.mxu0 0.0
    %2138 = vmatpush.msra.mxu0 0.0
    %2139 = vmatpush.msra.mxu0 0.0
    %2140 = vmatpush.msra.mxu0 0.0
    %2141 = vmatpush.msra.mxu0 0.0
    %2142 = vmatpush.msra.mxu0 0.0
    %2143 = vmatpush.msra.mxu0 0.0
    %2144 = vmatpush.msra.mxu0 0.0
    %2145 = vmatpush.msra.mxu0 0.0
    %2146 = vmatpush.msra.mxu0 0.0
    %2147 = vmatpush.msra.mxu0 0.0
    %2148 = vmatpush.msra.mxu0 0.0
    %2149 = vmatpush.msra.mxu0 %v1377
    %2150 = vmatpush.msra.mxu0 %v1376
    %2151 = vmatpush.msra.mxu0 %v1375
    %2152 = vmatpush.msra.mxu0 %v1374
    %2153 = vmatmul.f32.gmra.mxu0 %v2135
    %v2154 = vpop.f32.mrf.mxu0
    %v2155 = vadd.f32 %v1344, %v2154
    %2156 = vdwg.mxu0
    %v2158 = vrot.slane %v2129, 1
    %v2160 = vadd.f32 %v1311, %v2158
    %v2161 = vmul.f32 %v2160, 0.5
    %v2162 = vtanh.pop %v2161
    %v2163 = vadd.f32 %v2162, 1.0
    %v2164 = vmul.f32 %v2163, 0.5
    %v2165 = vadd.f32 %v1341, %v2155
    %v2166 = vmul.f32 %v2165, 0.5
    %v2167 = vtanh.pop %v2166
    %v2168 = vadd.f32 %v2167, 1.0
    %v2169 = vmul.f32 %v2168, 0.5
    %2170 = vrot.lane.b32.xlu0 %v2158, 64
    %v2171 = vpop.permute.xlu0 %2170
    %v2173 = vmul.f32 %v2164, %v2171
    %2175 = vrot.lane.b32.xlu0 %v2173, 64
    %v2176 = vpop.permute.xlu0 %2175
    %v2178 = vadd.f32 %v1311, %v2176
    %v2179 = vtanh.pop %v2178
    %2181 = vrot.lane.b32.xlu0 %v2155, 64
    %v2182 = vpop.permute.xlu0 %2181
    %v2184 = vmul.f32 %v2169, %v2182
    %2186 = vrot.lane.b32.xlu0 %v2184, 64
    %v2187 = vpop.permute.xlu0 %2186
    %v2189 = vadd.f32 %v1341, %v2187
    %v2190 = vtanh.pop %v2189
    %v2191 = vsub.f32 1.0, %v2164
    %2193 = vrot.lane.b32.xlu0 %v2179, 96
    %v2194 = vpop.permute.xlu0 %2193
    %v2196 = vmul.f32 %v2191, %v2194
    %v2197 = vrot.slane %v2094, 7
    %v2199 = vmul.f32 %v2164, %v2197
    %v2200 = vadd.f32 %v2196, %v2199
    %v2201 = vsub.f32 1.0, %v2169
    %2203 = vrot.lane.b32.xlu0 %v2190, 96
    %v2204 = vpop.permute.xlu0 %2203
    %v2206 = vmul.f32 %v2201, %v2204
    %v2208 = vmul.f32 %v2169, %v2132
    %v2209 = vadd.f32 %v2206, %v2208
    %2211 = vrot.lane.b32.xlu0 %v2200, 96
    %v2212 = vpop.permute.xlu0 %2211
    %v2215 = vrot.slane %v2209, 1
    %v2217 = vsel %vm284, %v2212, %v2215
    %v2218 = vld [vmem:[%s14] sm:$0xff]
    %v2219 = vld [vmem:[%s14 + $0x8] sm:$0xff]
    %v2220 = vld [vmem:[%s14 + $0x10] sm:$0xff]
    %v2221 = vld [vmem:[%s14 + $0x18] sm:$0xff]
    %v2222 = vld [vmem:[%s14 + $0x20] sm:$0xff]
    %v2223 = vld [vmem:[%s14 + $0x28] sm:$0xff]
    %v2224 = vld [vmem:[%s14 + $0x30] sm:$0xff]
    %v2225 = vld [vmem:[%s14 + $0x38] sm:$0xff]
    %v2226 = vld [vmem:[#allocation19] sm:$0x1]
    %v2228 = vrot.slane %v2217, 7
    %v2229 = vsel %vm1289, %v2228, 0
    %2231 = vmatpush.msra.mxu0 0.0
    %2232 = vmatpush.msra.mxu0 0.0
    %2233 = vmatpush.msra.mxu0 0.0
    %2234 = vmatpush.msra.mxu0 0.0
    %2235 = vmatpush.msra.mxu0 0.0
    %2236 = vmatpush.msra.mxu0 0.0
    %2237 = vmatpush.msra.mxu0 0.0
    %2238 = vmatpush.msra.mxu0 0.0
    %2239 = vmatpush.msra.mxu0 %v2225
    %2240 = vmatpush.msra.mxu0 %v2224
    %2241 = vmatpush.msra.mxu0 %v2223
    %2242 = vmatpush.msra.mxu0 %v2222
    %2243 = vmatpush.msra.mxu0 %v2221
    %2244 = vmatpush.msra.mxu0 %v2220
    %2245 = vmatpush.msra.mxu0 %v2219
    %2246 = vmatpush.msra.mxu0 %v2218
    %2247 = vmatmul.f32.gmra.mxu0 %v2229
    %v2248 = vpop.f32.mrf.mxu0
    %v2249 = vadd.f32 %v2226, %v2248
    %2250 = vdwg.mxu0
    %v2251 = vld [vmem:[#allocation21] sm:$0xff]
    %v2252 = vld [vmem:[#allocation21 + $0x8] sm:$0xff]
    %v2253 = vld [vmem:[#allocation21 + $0x10] sm:$0xff]
    %v2254 = vld [vmem:[#allocation21 + $0x18] sm:$0xff]
    %v2255 = vld [vmem:[%s17] sm:$0x1]
    %v2257 = vsel %vm284, %v2249, 0
    %2259 = vmatpush.msra.mxu0 0.0
    %2260 = vmatpush.msra.mxu0 0.0
    %2261 = vmatpush.msra.mxu0 0.0
    %2262 = vmatpush.msra.mxu0 0.0
    %2263 = vmatpush.msra.mxu0 0.0
    %2264 = vmatpush.msra.mxu0 0.0
    %2265 = vmatpush.msra.mxu0 0.0
    %2266 = vmatpush.msra.mxu0 0.0
    %2267 = vmatpush.msra.mxu0 0.0
    %2268 = vmatpush.msra.mxu0 0.0
    %2269 = vmatpush.msra.mxu0 0.0
    %2270 = vmatpush.msra.mxu0 0.0
    %2271 = vmatpush.msra.mxu0 %v2254
    %2272 = vmatpush.msra.mxu0 %v2253
    %2273 = vmatpush.msra.mxu0 %v2252
    %2274 = vmatpush.msra.mxu0 %v2251
    %2275 = vmatmul.f32.gmra.mxu0 %v2257
    %v2276 = vpop.f32.mrf.mxu0
    %v2277 = vadd.f32 %v2255, %v2276
    %2278 = vdwg.mxu0
    %v2279 = vld [vmem:[%s18] sm:$0xff]
    %v2280 = vld [vmem:[%s18 + $0x8] sm:$0xff]
    %v2281 = vld [vmem:[%s18 + $0x10] sm:$0xff]
    %v2282 = vld [vmem:[%s18 + $0x18] sm:$0xff]
    %v2283 = vld [vmem:[%s19] sm:$0x1]
    %v2285 = vsel %vm284, %v2277, 0
    %2287 = vmatpush.msra.mxu0 0.0
    %2288 = vmatpush.msra.mxu0 0.0
    %2289 = vmatpush.msra.mxu0 0.0
    %2290 = vmatpush.msra.mxu0 0.0
    %2291 = vmatpush.msra.mxu0 0.0
    %2292 = vmatpush.msra.mxu0 0.0
    %2293 = vmatpush.msra.mxu0 0.0
    %2294 = vmatpush.msra.mxu0 0.0
    %2295 = vmatpush.msra.mxu0 0.0
    %2296 = vmatpush.msra.mxu0 0.0
    %2297 = vmatpush.msra.mxu0 0.0
    %2298 = vmatpush.msra.mxu0 0.0
    %2299 = vmatpush.msra.mxu0 %v2282
    %2300 = vmatpush.msra.mxu0 %v2281
    %2301 = vmatpush.msra.mxu0 %v2280
    %2302 = vmatpush.msra.mxu0 %v2279
    %2303 = vmatmul.f32.gmra.mxu0 %v2285
    %v2304 = vpop.f32.mrf.mxu0
    %v2305 = vadd.f32 %v2283, %v2304
    %2306 = vdwg.mxu0
    %vm2307 = vcmask 24576
    %2308 = vst.msk [vmem:[#allocation22] sm:$0x1] %vm2307, %v2305
    // Predicated region
    $region126: #{tpu_custom_call.1} parent=1 // pred_check
      _
    $region127: #{tpu_custom_call.1} parent=1 // pred_check_branch
      %2310 = sbr.rel (0) target = $region129
    $region128: #{tpu_custom_call.1} parent=1 // pred_region
      %2312 = vsyncadd [#allocation6], 0
      %s2314 = sshll.u32 [#allocation22], 4
      %s2315 = int_to_ptr.vmem [resolvable:$true] %s2314
      %s2316 = sshll.u32 %s20, 4
      %s2317 = int_to_ptr.hbm [resolvable:$true] %s2316
      %2319 = dma.vmem_to_hbm [thread:$0]  %s2315, 16, %s2317, [#allocation6]
    $region129: #{tpu_custom_call.1} parent=1 // pred_fallthru
      _
    // Predicated region
    $region130: #{tpu_custom_call.1} parent=1 // pred_check
      _
    $region131: #{tpu_custom_call.1} parent=1 // pred_check_branch
      %2321 = sbr.rel (0) target = $region133
    $region132: #{tpu_custom_call.1} parent=1 // pred_region
      %2323 = dma.done [#allocation6], 16
    $region133: #{tpu_custom_call.1} parent=1 // pred_fallthru
      _
    %2324 = vsyncpa [#allocation5], 1
    %2325 = vsyncpa [#allocation8], 1
    %2326 = vsyncpa [#allocation11], 1
    %2327 = vsyncpa [#allocation14], 1
    %2328 = vsyncpa [#allocation17], 1
    %2329 = vsyncpa [#allocation20], 1
    %2330 = vsyncpa [#allocation6], 1

</llo_original>
